<compile_context>
chip_gen: v7x
topology: tpu7x:2x2x1
jax: 0.10.0
libtpu: 0.0.40
codegen_flags: <defaults>
</compile_context>

<pallas_src>
import functools

import jax
import jax.numpy as jnp
from jax.experimental import pallas as pl
from jax.experimental.pallas import tpu as pltpu

NEG_SLOPE = 0.01   # nn.LeakyReLU default
BN_EPS = 1e-5      # nn.BatchNorm2d default


def _leaky(x):
    return jnp.where(x > 0, x, NEG_SLOPE * x)


def downblock_kernel(x_ref, w1_ref, s1_ref, t1_ref, w2_ref, s2_ref, t2_ref,
                     wfc1_ref, bfc1_ref, wfc2_ref, bfc2_ref,
                     out_ref, pad1_ref, pad2_ref, *, flat_out):
    NB, H, W, Cin = x_ref.shape
    H2, W2 = H // 2, W // 2
    Cp = 2 * Cin
    Cout = s1_ref.shape[1]
    M = NB * H2 * W2
    cdt = w1_ref.dtype          # MXU operand dtype (bf16 by default), accumulation is f32

    # Zero the padded scratch buffers (incl. the 1-wide halo) only on the first grid
    # step; subsequent steps overwrite only the interior, so the halo stays zero.
    @pl.when(pl.program_id(0) == 0)
    def _init():
        pad1_ref[...] = jnp.zeros(pad1_ref.shape, jnp.float32)
        pad2_ref[...] = jnp.zeros(pad2_ref.shape, jnp.float32)

    # ------------- MaxAvgPool 2x2 stride 2, channels = [max || avg] -------------
    # Column pairs: strided reads straight from the input ref (no scratch round-trip).
    ce = x_ref[:, :, pl.ds(0, W2, stride=2), :].astype(jnp.float32)   # (NB, H, W2, Cin)
    co = x_ref[:, :, pl.ds(1, W2, stride=2), :].astype(jnp.float32)
    # Row pairs: split the leading H axis (pure vreg relabel) and reduce in registers.
    cm = jnp.maximum(ce, co).reshape(NB, H2, 2, W2, Cin)
    cs = (ce + co).reshape(NB, H2, 2, W2, Cin)
    mx = jnp.maximum(cm[:, :, 0], cm[:, :, 1])                        # (NB, H2, W2, Cin)
    av = (cs[:, :, 0] + cs[:, :, 1]) * 0.25
    # The [max||avg] pooled tensor is needed anyway for the DownBlock residual, so it is
    # built once here and reused for both the residual and the conv1 interior store.
    pool = jnp.concatenate([mx, av], axis=-1)                         # (NB, H2, W2, Cp)
    pad1_ref[:, 1:H2 + 1, 1:W2 + 1, :] = pool

    # ------------- fused im2col 3x3 conv: one (M, 9C) x (9C, Cout) matmul -------------
    def conv3x3(pad_ref, w_ref, c):
        patches = [pad_ref[:, dy:dy + H2, dx:dx + W2, :]
                   for dy in range(3) for dx in range(3)]
        im = jnp.concatenate(patches, axis=-1).reshape(M, 9 * c).astype(cdt)
        return jnp.dot(im, w_ref[...], preferred_element_type=jnp.float32)

    # Conv1 -> BN -> LeakyReLU   (conv bias folded into the BN shift in the wrapper)
    h1 = _leaky(conv3x3(pad1_ref, w1_ref, Cp) * s1_ref[...] + t1_ref[...])    # (M, Cout)
    # Dropout: identity in inference mode.
    pad2_ref[:, 1:H2 + 1, 1:W2 + 1, :] = h1.reshape(NB, H2, W2, Cout)
    # Conv2 -> BN -> LeakyReLU
    h2 = _leaky(conv3x3(pad2_ref, w2_ref, Cout) * s2_ref[...] + t2_ref[...])  # (M, Cout)

    # ------------- Residual SE (r=2): h2 * (1 + relu(fc2(leaky(fc1(gap(h2)))))) -------
    h2r = h2.reshape(NB, H2 * W2, Cout)
    gap = jnp.mean(h2r, axis=1)                                       # per-image GAP (NB, Cout)
    y1 = _leaky(jnp.dot(gap, wfc1_ref[...],
                        preferred_element_type=jnp.float32) + bfc1_ref[...])
    y2 = jnp.maximum(jnp.dot(y1, wfc2_ref[...],
                             preferred_element_type=jnp.float32) + bfc2_ref[...], 0.0)
    se = h2r * (1.0 + y2[:, None, :])                                 # (NB, H2*W2, Cout)

    # ------------- DownBlock residual with the pooled input -------------
    out = se.reshape(NB, H2, W2, Cout) + pool                         # Cout == Cp
    if flat_out:
        # lane-dense store: last dim H2*W2*Cout (512 here) is a multiple of 128
        out_ref[...] = out.reshape(NB, H2 * W2 * Cout).astype(out_ref.dtype)
    else:
        out_ref[...] = out.astype(out_ref.dtype)


def _images_per_step(n, cap):
    nb = 1
    for d in range(1, min(n, cap) + 1):
        if n % d == 0:
            nb = d
    return nb


def downblock_pallas(x_nchw, p, *, matmul_dtype=jnp.bfloat16,
                     max_images_per_step=8, flat_out=None):
    N, Cin, H, W = x_nchw.shape
    Cp = 2 * Cin
    Cout = p["w1"].shape[-1]
    Chid = p["wfc1"].shape[-1]
    H2, W2 = H // 2, W // 2
    assert Cout == Cp, "DownBlock residual requires out_channels == 2*in_channels"
    assert H % 2 == 0 and W % 2 == 0

    # Pack several images per grid step -> matmul M = nb*H2*W2.
    # (On v7x, cap this so N // nb >= 2 to keep both TensorCores busy.)
    nb = _images_per_step(N, max_images_per_step)
    steps = N // nb

    # Fold conv bias + BatchNorm (inference) into one scale/shift; flatten conv weights
    # to (9*C_in, C_out), matching the im2col column order (dy, dx, c_in).
    s1 = p["g1"] / jnp.sqrt(p["v1"] + BN_EPS)
    t1 = p["be1"] + s1 * (p["b1"] - p["m1"])
    s2 = p["g2"] / jnp.sqrt(p["v2"] + BN_EPS)
    t2 = p["be2"] + s2 * (p["b2"] - p["m2"])
    w1f = p["w1"].reshape(9 * Cp, Cout).astype(matmul_dtype)
    w2f = p["w2"].reshape(9 * Cout, Cout).astype(matmul_dtype)

    x = jnp.transpose(x_nchw, (0, 2, 3, 1))   # NCHW -> NHWC

    full2d = lambda shape: pl.BlockSpec(shape, lambda n: (0, 0))

    def run(flat):
        if flat:
            out_shape = jax.ShapeDtypeStruct((N, H2 * W2 * Cout), x.dtype)
            out_spec = pl.BlockSpec((nb, H2 * W2 * Cout), lambda n: (n, 0))
        else:
            out_shape = jax.ShapeDtypeStruct((N, H2, W2, Cout), x.dtype)
            out_spec = pl.BlockSpec((nb, H2, W2, Cout), lambda n: (n, 0, 0, 0))
        fn = pl.pallas_call(
            functools.partial(downblock_kernel, flat_out=flat),
            out_shape=out_shape,
            grid=(steps,),
            in_specs=[
                pl.BlockSpec((nb, H, W, Cin), lambda n: (n, 0, 0, 0)),   # x (nb images)
                full2d((9 * Cp, Cout)),     # conv1 weight (im2col-flattened)
                full2d((1, Cout)),          # BN1 scale
                full2d((1, Cout)),          # BN1 shift (conv bias folded in)
                full2d((9 * Cout, Cout)),   # conv2 weight
                full2d((1, Cout)),          # BN2 scale
                full2d((1, Cout)),          # BN2 shift
                full2d((Cout, Chid)),       # SE fc1 weight
                full2d((1, Chid)),          # SE fc1 bias
                full2d((Chid, Cout)),       # SE fc2 weight
                full2d((1, Cout)),          # SE fc2 bias
            ],
            out_specs=out_spec,
            scratch_shapes=[
                pltpu.VMEM((nb, H2 + 2, W2 + 2, Cp), jnp.float32),    # conv1 padded input
                pltpu.VMEM((nb, H2 + 2, W2 + 2, Cout), jnp.float32),  # conv2 padded input
            ],
            compiler_params=pltpu.CompilerParams(
                dimension_semantics=("parallel",)),
        )
        return fn(x, w1f, s1.reshape(1, -1), t1.reshape(1, -1),
                  w2f, s2.reshape(1, -1), t2.reshape(1, -1),
                  p["wfc1"], p["bfc1"].reshape(1, -1),
                  p["wfc2"], p["bfc2"].reshape(1, -1))

    if flat_out is None:
        try:
            out = jax.block_until_ready(run(True))
            flat = True
        except Exception:
            # Lane-merging reshape for the flattened store not supported by this
            # backend/version -> fall back to the plain NHWC output block.
            out = run(False)
            flat = False
    else:
        flat = bool(flat_out)
        out = run(flat)

    out_nhwc = out.reshape(N, H2, W2, Cout) if flat else out
    return jnp.transpose(out_nhwc, (0, 3, 1, 2))   # NHWC -> NCHW


# ------------------------- pure-JAX reference (for verification) -------------------------
def downblock_ref(x, p):
    N, C, H, W = x.shape
    xr = x.reshape(N, C, H // 2, 2, W // 2, 2)
    mx = xr.max(axis=(3, 5))
    av = xr.mean(axis=(3, 5))
    pool = jnp.concatenate([mx, av], axis=1)                       # NCHW, 2C channels

    def conv_bn_act(z, w, b, g, be, m, v):
        y = jax.lax.conv_general_dilated(
            z, w, (1, 1), "SAME",
            dimension_numbers=("NCHW", "HWIO", "NCHW"),
            precision=jax.lax.Precision.HIGHEST) + b[None, :, None, None]
        y = g[None, :, None, None] * (y - m[None, :, None, None]) / jnp.sqrt(
            v[None, :, None, None] + BN_EPS) + be[None, :, None, None]
        return jnp.where(y > 0, y, NEG_SLOPE * y)

    h1 = conv_bn_act(pool, p["w1"], p["b1"], p["g1"], p["be1"], p["m1"], p["v1"])
    h2 = conv_bn_act(h1, p["w2"], p["b2"], p["g2"], p["be2"], p["m2"], p["v2"])
    sq = h2.mean(axis=(2, 3))                                      # (N, Cout)
    y1 = sq @ p["wfc1"] + p["bfc1"]
    y1 = jnp.where(y1 > 0, y1, NEG_SLOPE * y1)
    y2 = jax.nn.relu(y1 @ p["wfc2"] + p["bfc2"])
    se = h2 + h2 * y2[:, :, None, None]
    return se + pool


def init_params(key, in_ch, out_ch):
    cp = 2 * in_ch
    hid = out_ch // 2
    ks = jax.random.split(key, 16)
    f32 = jnp.float32
    return {
        "w1": 0.10 * jax.random.normal(ks[0], (3, 3, cp, out_ch), f32),
        "b1": 0.05 * jax.random.normal(ks[1], (out_ch,), f32),
        "g1": 1.0 + 0.1 * jax.random.normal(ks[2], (out_ch,), f32),
        "be1": 0.1 * jax.random.normal(ks[3], (out_ch,), f32),
        "m1": 0.1 * jax.random.normal(ks[4], (out_ch,), f32),
        "v1": jax.random.uniform(ks[5], (out_ch,), f32, 0.5, 1.5),
        "w2": 0.10 * jax.random.normal(ks[6], (3, 3, out_ch, out_ch), f32),
        "b2": 0.05 * jax.random.normal(ks[7], (out_ch,), f32),
        "g2": 1.0 + 0.1 * jax.random.normal(ks[8], (out_ch,), f32),
        "be2": 0.1 * jax.random.normal(ks[9], (out_ch,), f32),
        "m2": 0.1 * jax.random.normal(ks[10], (out_ch,), f32),
        "v2": jax.random.uniform(ks[11], (out_ch,), f32, 0.5, 1.5),
        "wfc1": 0.2 * jax.random.normal(ks[12], (out_ch, hid), f32),
        "bfc1": 0.1 * jax.random.normal(ks[13], (hid,), f32),
        "wfc2": 0.2 * jax.random.normal(ks[14], (hid, out_ch), f32),
        "bfc2": 0.1 * jax.random.normal(ks[15], (out_ch,), f32),
    }


if __name__ == "__main__":
    key = jax.random.PRNGKey(0)
    k_x, k_p = jax.random.split(key)

    N, Cin, H, W = 2, 4, 16, 16
    Cout = 2 * Cin  # DownBlock's `conv(x_pool) + x_pool` requires this
    x = jax.random.normal(k_x, (N, Cin, H, W), jnp.float32)
    params = init_params(k_p, Cin, Cout)

    out = downblock_pallas(x, params)
    out = jax.block_until_ready(out)

    ref = downblock_ref(x, params)
    assert out.shape == ref.shape == (N, Cout, H // 2, W // 2)
    max_err = float(jnp.max(jnp.abs(out - ref)))
    assert bool(jnp.allclose(out, ref, atol=5e-2, rtol=5e-2)), (
        f"Pallas output mismatch vs reference (max abs err {max_err:.3e})")

    print("KERNEL_OK")
</pallas_src>

<mosaic_0001>
module attributes {stable_mosaic.version = 11 : i64} {
  func.func @downblock_kernel(%arg0: i32, %arg1: memref<2x16x16x4xf32, #tpu.memory_space<vmem>>, %arg2: memref<72x8xbf16, #tpu.memory_space<vmem>>, %arg3: memref<1x8xf32, #tpu.memory_space<vmem>>, %arg4: memref<1x8xf32, #tpu.memory_space<vmem>>, %arg5: memref<72x8xbf16, #tpu.memory_space<vmem>>, %arg6: memref<1x8xf32, #tpu.memory_space<vmem>>, %arg7: memref<1x8xf32, #tpu.memory_space<vmem>>, %arg8: memref<8x4xf32, #tpu.memory_space<vmem>>, %arg9: memref<1x4xf32, #tpu.memory_space<vmem>>, %arg10: memref<4x8xf32, #tpu.memory_space<vmem>>, %arg11: memref<1x8xf32, #tpu.memory_space<vmem>>, %arg12: memref<2x512xf32, #tpu.memory_space<vmem>>, %arg13: memref<2x10x10x8xf32, #tpu.memory_space<vmem>>, %arg14: memref<2x10x10x8xf32, #tpu.memory_space<vmem>>) attributes {dimension_semantics = [#tpu.dimension_semantics<parallel>], iteration_bounds = array<i64: 1>, scalar_prefetch = 0 : i64, scratch_operands = 2 : i64, tpu.core_type = #tpu.core_type<tc>, window_params = [{transform_indices = @transform_0, window_bounds = array<i64: 2, 16, 16, 4>}, {pipeline_mode = #tpu.pipeline_mode<synchronous>, transform_indices = @transform_1, window_bounds = array<i64: 72, 8>}, {pipeline_mode = #tpu.pipeline_mode<synchronous>, transform_indices = @transform_2, window_bounds = array<i64: 1, 8>}, {pipeline_mode = #tpu.pipeline_mode<synchronous>, transform_indices = @transform_3, window_bounds = array<i64: 1, 8>}, {pipeline_mode = #tpu.pipeline_mode<synchronous>, transform_indices = @transform_4, window_bounds = array<i64: 72, 8>}, {pipeline_mode = #tpu.pipeline_mode<synchronous>, transform_indices = @transform_5, window_bounds = array<i64: 1, 8>}, {pipeline_mode = #tpu.pipeline_mode<synchronous>, transform_indices = @transform_6, window_bounds = array<i64: 1, 8>}, {pipeline_mode = #tpu.pipeline_mode<synchronous>, transform_indices = @transform_7, window_bounds = array<i64: 8, 4>}, {pipeline_mode = #tpu.pipeline_mode<synchronous>, transform_indices = @transform_8, window_bounds = array<i64: 1, 4>}, {pipeline_mode = #tpu.pipeline_mode<synchronous>, transform_indices = @transform_9, window_bounds = array<i64: 4, 8>}, {pipeline_mode = #tpu.pipeline_mode<synchronous>, transform_indices = @transform_10, window_bounds = array<i64: 1, 8>}, {transform_indices = @transform_11, window_bounds = array<i64: 2, 512>}]} {
    %c0_i32 = arith.constant 0 : i32
    %0 = arith.cmpi eq, %arg0, %c0_i32 : i32
    %1 = arith.extui %0 : i1 to i32
    %c0_i32_0 = arith.constant 0 : i32
    %2 = arith.cmpi ne, %1, %c0_i32_0 : i32
    scf.if %2 {
      %cst_122 = arith.constant 0.000000e+00 : f32
      %105 = vector.broadcast %cst_122 : f32 to vector<2x10x10x8xf32>
      %c0_123 = arith.constant 0 : index
      %c0_124 = arith.constant 0 : index
      %c0_125 = arith.constant 0 : index
      %c0_126 = arith.constant 0 : index
      %106 = vector.load %arg13[%c0_123, %c0_124, %c0_125, %c0_126] : memref<2x10x10x8xf32, #tpu.memory_space<vmem>>, vector<2x10x10x8xf32>
      tpu.vector_store %arg13[%c0_123, %c0_124, %c0_125, %c0_126], %105 {strides = array<i32>} : memref<2x10x10x8xf32, #tpu.memory_space<vmem>>, vector<2x10x10x8xf32>,
      %cst_127 = arith.constant 0.000000e+00 : f32
      %107 = vector.broadcast %cst_127 : f32 to vector<2x10x10x8xf32>
      %c0_128 = arith.constant 0 : index
      %c0_129 = arith.constant 0 : index
      %c0_130 = arith.constant 0 : index
      %c0_131 = arith.constant 0 : index
      %108 = vector.load %arg14[%c0_128, %c0_129, %c0_130, %c0_131] : memref<2x10x10x8xf32, #tpu.memory_space<vmem>>, vector<2x10x10x8xf32>
      tpu.vector_store %arg14[%c0_128, %c0_129, %c0_130, %c0_131], %107 {strides = array<i32>} : memref<2x10x10x8xf32, #tpu.memory_space<vmem>>, vector<2x10x10x8xf32>,
    } else {
    }
    %c0 = arith.constant 0 : index
    %c0_1 = arith.constant 0 : index
    %c0_2 = arith.constant 0 : index
    %c0_3 = arith.constant 0 : index
    %3 = tpu.strided_load %arg1[%c0, %c0_1, %c0_2, %c0_3] {strides = array<i32: 1, 1, 2, 1>} : memref<2x16x16x4xf32, #tpu.memory_space<vmem>>, vector<2x16x8x4xf32>
    %c0_4 = arith.constant 0 : index
    %c0_5 = arith.constant 0 : index
    %c1 = arith.constant 1 : index
    %c0_6 = arith.constant 0 : index
    %4 = tpu.strided_load %arg1[%c0_4, %c0_5, %c1, %c0_6] {strides = array<i32: 1, 1, 2, 1>} : memref<2x16x16x4xf32, #tpu.memory_space<vmem>>, vector<2x16x8x4xf32>
    %5 = arith.maximumf %3, %4 : vector<2x16x8x4xf32>
    %6 = vector.shape_cast %5 : vector<2x16x8x4xf32> to vector<2x8x2x8x4xf32>
    %7 = arith.addf %3, %4 : vector<2x16x8x4xf32>
    %8 = vector.shape_cast %7 : vector<2x16x8x4xf32> to vector<2x8x2x8x4xf32>
    %9 = vector.extract_strided_slice %6 {offsets = [0, 0, 0, 0, 0], sizes = [2, 8, 1, 8, 4], strides = [1, 1, 1, 1, 1]} : vector<2x8x2x8x4xf32> to vector<2x8x1x8x4xf32>
    %10 = vector.shape_cast %9 : vector<2x8x1x8x4xf32> to vector<2x8x8x4xf32>
    %11 = vector.extract_strided_slice %6 {offsets = [0, 0, 1, 0, 0], sizes = [2, 8, 1, 8, 4], strides = [1, 1, 1, 1, 1]} : vector<2x8x2x8x4xf32> to vector<2x8x1x8x4xf32>
    %12 = vector.shape_cast %11 : vector<2x8x1x8x4xf32> to vector<2x8x8x4xf32>
    %13 = arith.maximumf %10, %12 : vector<2x8x8x4xf32>
    %14 = vector.extract_strided_slice %8 {offsets = [0, 0, 0, 0, 0], sizes = [2, 8, 1, 8, 4], strides = [1, 1, 1, 1, 1]} : vector<2x8x2x8x4xf32> to vector<2x8x1x8x4xf32>
    %15 = vector.shape_cast %14 : vector<2x8x1x8x4xf32> to vector<2x8x8x4xf32>
    %16 = vector.extract_strided_slice %8 {offsets = [0, 0, 1, 0, 0], sizes = [2, 8, 1, 8, 4], strides = [1, 1, 1, 1, 1]} : vector<2x8x2x8x4xf32> to vector<2x8x1x8x4xf32>
    %17 = vector.shape_cast %16 : vector<2x8x1x8x4xf32> to vector<2x8x8x4xf32>
    %18 = arith.addf %15, %17 : vector<2x8x8x4xf32>
    %cst = arith.constant 2.500000e-01 : f32
    %19 = vector.broadcast %cst : f32 to vector<2x8x8x4xf32>
    %20 = arith.mulf %18, %19 : vector<2x8x8x4xf32>
    %21 = tpu.concatenate %13, %20 in 3 : vector<2x8x8x4xf32>, vector<2x8x8x4xf32> -> vector<2x8x8x8xf32>
    %c0_7 = arith.constant 0 : index
    %c1_8 = arith.constant 1 : index
    %c1_9 = arith.constant 1 : index
    %c0_10 = arith.constant 0 : index
    %22 = vector.load %arg13[%c0_7, %c1_8, %c1_9, %c0_10] : memref<2x10x10x8xf32, #tpu.memory_space<vmem>>, vector<2x8x8x8xf32>
    tpu.vector_store %arg13[%c0_7, %c1_8, %c1_9, %c0_10], %21 {strides = array<i32>} : memref<2x10x10x8xf32, #tpu.memory_space<vmem>>, vector<2x8x8x8xf32>,
    %c0_11 = arith.constant 0 : index
    %c0_12 = arith.constant 0 : index
    %c0_13 = arith.constant 0 : index
    %c0_14 = arith.constant 0 : index
    %23 = vector.load %arg13[%c0_11, %c0_12, %c0_13, %c0_14] : memref<2x10x10x8xf32, #tpu.memory_space<vmem>>, vector<2x8x8x8xf32>
    %c0_15 = arith.constant 0 : index
    %c0_16 = arith.constant 0 : index
    %c1_17 = arith.constant 1 : index
    %c0_18 = arith.constant 0 : index
    %24 = vector.load %arg13[%c0_15, %c0_16, %c1_17, %c0_18] : memref<2x10x10x8xf32, #tpu.memory_space<vmem>>, vector<2x8x8x8xf32>
    %c0_19 = arith.constant 0 : index
    %c0_20 = arith.constant 0 : index
    %c2 = arith.constant 2 : index
    %c0_21 = arith.constant 0 : index
    %25 = vector.load %arg13[%c0_19, %c0_20, %c2, %c0_21] : memref<2x10x10x8xf32, #tpu.memory_space<vmem>>, vector<2x8x8x8xf32>
    %c0_22 = arith.constant 0 : index
    %c1_23 = arith.constant 1 : index
    %c0_24 = arith.constant 0 : index
    %c0_25 = arith.constant 0 : index
    %26 = vector.load %arg13[%c0_22, %c1_23, %c0_24, %c0_25] : memref<2x10x10x8xf32, #tpu.memory_space<vmem>>, vector<2x8x8x8xf32>
    %c0_26 = arith.constant 0 : index
    %c1_27 = arith.constant 1 : index
    %c1_28 = arith.constant 1 : index
    %c0_29 = arith.constant 0 : index
    %27 = vector.load %arg13[%c0_26, %c1_27, %c1_28, %c0_29] : memref<2x10x10x8xf32, #tpu.memory_space<vmem>>, vector<2x8x8x8xf32>
    %c0_30 = arith.constant 0 : index
    %c1_31 = arith.constant 1 : index
    %c2_32 = arith.constant 2 : index
    %c0_33 = arith.constant 0 : index
    %28 = vector.load %arg13[%c0_30, %c1_31, %c2_32, %c0_33] : memref<2x10x10x8xf32, #tpu.memory_space<vmem>>, vector<2x8x8x8xf32>
    %c0_34 = arith.constant 0 : index
    %c2_35 = arith.constant 2 : index
    %c0_36 = arith.constant 0 : index
    %c0_37 = arith.constant 0 : index
    %29 = vector.load %arg13[%c0_34, %c2_35, %c0_36, %c0_37] : memref<2x10x10x8xf32, #tpu.memory_space<vmem>>, vector<2x8x8x8xf32>
    %c0_38 = arith.constant 0 : index
    %c2_39 = arith.constant 2 : index
    %c1_40 = arith.constant 1 : index
    %c0_41 = arith.constant 0 : index
    %30 = vector.load %arg13[%c0_38, %c2_39, %c1_40, %c0_41] : memref<2x10x10x8xf32, #tpu.memory_space<vmem>>, vector<2x8x8x8xf32>
    %c0_42 = arith.constant 0 : index
    %c2_43 = arith.constant 2 : index
    %c2_44 = arith.constant 2 : index
    %c0_45 = arith.constant 0 : index
    %31 = vector.load %arg13[%c0_42, %c2_43, %c2_44, %c0_45] : memref<2x10x10x8xf32, #tpu.memory_space<vmem>>, vector<2x8x8x8xf32>
    %32 = tpu.concatenate %23, %24, %25, %26, %27, %28, %29, %30, %31 in 3 : vector<2x8x8x8xf32>, vector<2x8x8x8xf32>, vector<2x8x8x8xf32>, vector<2x8x8x8xf32>, vector<2x8x8x8xf32>, vector<2x8x8x8xf32>, vector<2x8x8x8xf32>, vector<2x8x8x8xf32>, vector<2x8x8x8xf32> -> vector<2x8x8x72xf32>
    %33 = vector.shape_cast %32 : vector<2x8x8x72xf32> to vector<128x72xf32>
    %34 = arith.truncf %33 : vector<128x72xf32> to vector<128x72xbf16>
    %c0_46 = arith.constant 0 : index
    %c0_47 = arith.constant 0 : index
    %35 = vector.load %arg2[%c0_46, %c0_47] : memref<72x8xbf16, #tpu.memory_space<vmem>>, vector<72x8xbf16>
    %cst_48 = arith.constant dense<0.000000e+00> : vector<128x8xf32>
    %36 = tpu.matmul %34, %35, %cst_48 {dimension_numbers = #tpu.dot_dimension_numbers<[1], [0], [0], [1], [0, 0, 1, 1], [], []>} : vector<128x72xbf16>, vector<72x8xbf16>, vector<128x8xf32> -> vector<128x8xf32>
    %c0_49 = arith.constant 0 : index
    %c0_50 = arith.constant 0 : index
    %37 = vector.load %arg3[%c0_49, %c0_50] : memref<1x8xf32, #tpu.memory_space<vmem>>, vector<1x8xf32>
    %38 = vector.broadcast %37 : vector<1x8xf32> to vector<128x8xf32>
    %39 = arith.mulf %36, %38 : vector<128x8xf32>
    %c0_51 = arith.constant 0 : index
    %c0_52 = arith.constant 0 : index
    %40 = vector.load %arg4[%c0_51, %c0_52] : memref<1x8xf32, #tpu.memory_space<vmem>>, vector<1x8xf32>
    %41 = vector.broadcast %40 : vector<1x8xf32> to vector<128x8xf32>
    %42 = arith.addf %39, %41 : vector<128x8xf32>
    %cst_53 = arith.constant 0.000000e+00 : f32
    %43 = vector.broadcast %cst_53 : f32 to vector<128x8xf32>
    %44 = arith.cmpf ogt, %42, %43 : vector<128x8xf32>
    %cst_54 = arith.constant 0.00999999977 : f32
    %45 = vector.broadcast %cst_54 : f32 to vector<128x8xf32>
    %46 = arith.mulf %45, %42 : vector<128x8xf32>
    %47 = arith.select %44, %42, %46 : vector<128x8xi1>, vector<128x8xf32>
    %48 = vector.shape_cast %47 : vector<128x8xf32> to vector<2x8x8x8xf32>
    %c0_55 = arith.constant 0 : index
    %c1_56 = arith.constant 1 : index
    %c1_57 = arith.constant 1 : index
    %c0_58 = arith.constant 0 : index
    %49 = vector.load %arg14[%c0_55, %c1_56, %c1_57, %c0_58] : memref<2x10x10x8xf32, #tpu.memory_space<vmem>>, vector<2x8x8x8xf32>
    tpu.vector_store %arg14[%c0_55, %c1_56, %c1_57, %c0_58], %48 {strides = array<i32>} : memref<2x10x10x8xf32, #tpu.memory_space<vmem>>, vector<2x8x8x8xf32>,
    %c0_59 = arith.constant 0 : index
    %c0_60 = arith.constant 0 : index
    %c0_61 = arith.constant 0 : index
    %c0_62 = arith.constant 0 : index
    %50 = vector.load %arg14[%c0_59, %c0_60, %c0_61, %c0_62] : memref<2x10x10x8xf32, #tpu.memory_space<vmem>>, vector<2x8x8x8xf32>
    %c0_63 = arith.constant 0 : index
    %c0_64 = arith.constant 0 : index
    %c1_65 = arith.constant 1 : index
    %c0_66 = arith.constant 0 : index
    %51 = vector.load %arg14[%c0_63, %c0_64, %c1_65, %c0_66] : memref<2x10x10x8xf32, #tpu.memory_space<vmem>>, vector<2x8x8x8xf32>
    %c0_67 = arith.constant 0 : index
    %c0_68 = arith.constant 0 : index
    %c2_69 = arith.constant 2 : index
    %c0_70 = arith.constant 0 : index
    %52 = vector.load %arg14[%c0_67, %c0_68, %c2_69, %c0_70] : memref<2x10x10x8xf32, #tpu.memory_space<vmem>>, vector<2x8x8x8xf32>
    %c0_71 = arith.constant 0 : index
    %c1_72 = arith.constant 1 : index
    %c0_73 = arith.constant 0 : index
    %c0_74 = arith.constant 0 : index
    %53 = vector.load %arg14[%c0_71, %c1_72, %c0_73, %c0_74] : memref<2x10x10x8xf32, #tpu.memory_space<vmem>>, vector<2x8x8x8xf32>
    %c0_75 = arith.constant 0 : index
    %c1_76 = arith.constant 1 : index
    %c1_77 = arith.constant 1 : index
    %c0_78 = arith.constant 0 : index
    %54 = vector.load %arg14[%c0_75, %c1_76, %c1_77, %c0_78] : memref<2x10x10x8xf32, #tpu.memory_space<vmem>>, vector<2x8x8x8xf32>
    %c0_79 = arith.constant 0 : index
    %c1_80 = arith.constant 1 : index
    %c2_81 = arith.constant 2 : index
    %c0_82 = arith.constant 0 : index
    %55 = vector.load %arg14[%c0_79, %c1_80, %c2_81, %c0_82] : memref<2x10x10x8xf32, #tpu.memory_space<vmem>>, vector<2x8x8x8xf32>
    %c0_83 = arith.constant 0 : index
    %c2_84 = arith.constant 2 : index
    %c0_85 = arith.constant 0 : index
    %c0_86 = arith.constant 0 : index
    %56 = vector.load %arg14[%c0_83, %c2_84, %c0_85, %c0_86] : memref<2x10x10x8xf32, #tpu.memory_space<vmem>>, vector<2x8x8x8xf32>
    %c0_87 = arith.constant 0 : index
    %c2_88 = arith.constant 2 : index
    %c1_89 = arith.constant 1 : index
    %c0_90 = arith.constant 0 : index
    %57 = vector.load %arg14[%c0_87, %c2_88, %c1_89, %c0_90] : memref<2x10x10x8xf32, #tpu.memory_space<vmem>>, vector<2x8x8x8xf32>
    %c0_91 = arith.constant 0 : index
    %c2_92 = arith.constant 2 : index
    %c2_93 = arith.constant 2 : index
    %c0_94 = arith.constant 0 : index
    %58 = vector.load %arg14[%c0_91, %c2_92, %c2_93, %c0_94] : memref<2x10x10x8xf32, #tpu.memory_space<vmem>>, vector<2x8x8x8xf32>
    %59 = tpu.concatenate %50, %51, %52, %53, %54, %55, %56, %57, %58 in 3 : vector<2x8x8x8xf32>, vector<2x8x8x8xf32>, vector<2x8x8x8xf32>, vector<2x8x8x8xf32>, vector<2x8x8x8xf32>, vector<2x8x8x8xf32>, vector<2x8x8x8xf32>, vector<2x8x8x8xf32>, vector<2x8x8x8xf32> -> vector<2x8x8x72xf32>
    %60 = vector.shape_cast %59 : vector<2x8x8x72xf32> to vector<128x72xf32>
    %61 = arith.truncf %60 : vector<128x72xf32> to vector<128x72xbf16>
    %c0_95 = arith.constant 0 : index
    %c0_96 = arith.constant 0 : index
    %62 = vector.load %arg5[%c0_95, %c0_96] : memref<72x8xbf16, #tpu.memory_space<vmem>>, vector<72x8xbf16>
    %cst_97 = arith.constant dense<0.000000e+00> : vector<128x8xf32>
    %63 = tpu.matmul %61, %62, %cst_97 {dimension_numbers = #tpu.dot_dimension_numbers<[1], [0], [0], [1], [0, 0, 1, 1], [], []>} : vector<128x72xbf16>, vector<72x8xbf16>, vector<128x8xf32> -> vector<128x8xf32>
    %c0_98 = arith.constant 0 : index
    %c0_99 = arith.constant 0 : index
    %64 = vector.load %arg6[%c0_98, %c0_99] : memref<1x8xf32, #tpu.memory_space<vmem>>, vector<1x8xf32>
    %65 = vector.broadcast %64 : vector<1x8xf32> to vector<128x8xf32>
    %66 = arith.mulf %63, %65 : vector<128x8xf32>
    %c0_100 = arith.constant 0 : index
    %c0_101 = arith.constant 0 : index
    %67 = vector.load %arg7[%c0_100, %c0_101] : memref<1x8xf32, #tpu.memory_space<vmem>>, vector<1x8xf32>
    %68 = vector.broadcast %67 : vector<1x8xf32> to vector<128x8xf32>
    %69 = arith.addf %66, %68 : vector<128x8xf32>
    %cst_102 = arith.constant 0.000000e+00 : f32
    %70 = vector.broadcast %cst_102 : f32 to vector<128x8xf32>
    %71 = arith.cmpf ogt, %69, %70 : vector<128x8xf32>
    %cst_103 = arith.constant 0.00999999977 : f32
    %72 = vector.broadcast %cst_103 : f32 to vector<128x8xf32>
    %73 = arith.mulf %72, %69 : vector<128x8xf32>
    %74 = arith.select %71, %69, %73 : vector<128x8xi1>, vector<128x8xf32>
    %75 = vector.shape_cast %74 : vector<128x8xf32> to vector<2x64x8xf32>
    %cst_104 = arith.constant dense<0.000000e+00> : vector<2x8xf32>
    %76 = vector.multi_reduction <add>, %75, %cst_104 [1] : vector<2x64x8xf32> to vector<2x8xf32>
    %cst_105 = arith.constant 6.400000e+01 : f32
    %77 = vector.broadcast %cst_105 : f32 to vector<2x8xf32>
    %78 = arith.divf %76, %77 : vector<2x8xf32>
    %c0_106 = arith.constant 0 : index
    %c0_107 = arith.constant 0 : index
    %79 = vector.load %arg8[%c0_106, %c0_107] : memref<8x4xf32, #tpu.memory_space<vmem>>, vector<8x4xf32>
    %cst_108 = arith.constant dense<0.000000e+00> : vector<2x4xf32>
    %80 = tpu.matmul %78, %79, %cst_108 {dimension_numbers = #tpu.dot_dimension_numbers<[1], [0], [0], [1], [0, 0, 1, 1], [], []>} : vector<2x8xf32>, vector<8x4xf32>, vector<2x4xf32> -> vector<2x4xf32>
    %c0_109 = arith.constant 0 : index
    %c0_110 = arith.constant 0 : index
    %81 = vector.load %arg9[%c0_109, %c0_110] : memref<1x4xf32, #tpu.memory_space<vmem>>, vector<1x4xf32>
    %82 = vector.broadcast %81 : vector<1x4xf32> to vector<2x4xf32>
    %83 = arith.addf %80, %82 : vector<2x4xf32>
    %cst_111 = arith.constant 0.000000e+00 : f32
    %84 = vector.broadcast %cst_111 : f32 to vector<2x4xf32>
    %85 = arith.cmpf ogt, %83, %84 : vector<2x4xf32>
    %cst_112 = arith.constant 0.00999999977 : f32
    %86 = vector.broadcast %cst_112 : f32 to vector<2x4xf32>
    %87 = arith.mulf %86, %83 : vector<2x4xf32>
    %88 = arith.select %85, %83, %87 : vector<2x4xi1>, vector<2x4xf32>
    %c0_113 = arith.constant 0 : index
    %c0_114 = arith.constant 0 : index
    %89 = vector.load %arg10[%c0_113, %c0_114] : memref<4x8xf32, #tpu.memory_space<vmem>>, vector<4x8xf32>
    %cst_115 = arith.constant dense<0.000000e+00> : vector<2x8xf32>
    %90 = tpu.matmul %88, %89, %cst_115 {dimension_numbers = #tpu.dot_dimension_numbers<[1], [0], [0], [1], [0, 0, 1, 1], [], []>} : vector<2x4xf32>, vector<4x8xf32>, vector<2x8xf32> -> vector<2x8xf32>
    %c0_116 = arith.constant 0 : index
    %c0_117 = arith.constant 0 : index
    %91 = vector.load %arg11[%c0_116, %c0_117] : memref<1x8xf32, #tpu.memory_space<vmem>>, vector<1x8xf32>
    %92 = vector.broadcast %91 : vector<1x8xf32> to vector<2x8xf32>
    %93 = arith.addf %90, %92 : vector<2x8xf32>
    %cst_118 = arith.constant 0.000000e+00 : f32
    %94 = vector.broadcast %cst_118 : f32 to vector<2x8xf32>
    %95 = arith.maximumf %93, %94 : vector<2x8xf32>
    %96 = vector.shape_cast %95 : vector<2x8xf32> to vector<2x1x8xf32>
    %cst_119 = arith.constant 1.000000e+00 : f32
    %97 = vector.broadcast %cst_119 : f32 to vector<2x1x8xf32>
    %98 = arith.addf %97, %96 : vector<2x1x8xf32>
    %99 = vector.broadcast %98 : vector<2x1x8xf32> to vector<2x64x8xf32>
    %100 = arith.mulf %75, %99 : vector<2x64x8xf32>
    %101 = vector.shape_cast %100 : vector<2x64x8xf32> to vector<2x8x8x8xf32>
    %102 = arith.addf %101, %21 : vector<2x8x8x8xf32>
    %103 = vector.shape_cast %102 : vector<2x8x8x8xf32> to vector<2x512xf32>
    %c0_120 = arith.constant 0 : index
    %c0_121 = arith.constant 0 : index
    %104 = vector.load %arg12[%c0_120, %c0_121] : memref<2x512xf32, #tpu.memory_space<vmem>>, vector<2x512xf32>
    tpu.vector_store %arg12[%c0_120, %c0_121], %103 {strides = array<i32>} : memref<2x512xf32, #tpu.memory_space<vmem>>, vector<2x512xf32>,
    return
  }
  func.func @transform_0(%arg0: i32) -> (i32, i32, i32, i32) {
    %c0_i32 = arith.constant 0 : i32
    %c0_i32_0 = arith.constant 0 : i32
    %c0_i32_1 = arith.constant 0 : i32
    %c0_i32_2 = arith.constant 0 : i32
    return %arg0, %c0_i32, %c0_i32_0, %c0_i32_1 : i32, i32, i32, i32
  }
  func.func @transform_1(%arg0: i32) -> (i32, i32) {
    %c0_i32 = arith.constant 0 : i32
    %c0_i32_0 = arith.constant 0 : i32
    %c0_i32_1 = arith.constant 0 : i32
    return %c0_i32, %c0_i32_0 : i32, i32
  }
  func.func @transform_2(%arg0: i32) -> (i32, i32) {
    %c0_i32 = arith.constant 0 : i32
    %c0_i32_0 = arith.constant 0 : i32
    %c0_i32_1 = arith.constant 0 : i32
    return %c0_i32, %c0_i32_0 : i32, i32
  }
  func.func @transform_3(%arg0: i32) -> (i32, i32) {
    %c0_i32 = arith.constant 0 : i32
    %c0_i32_0 = arith.constant 0 : i32
    %c0_i32_1 = arith.constant 0 : i32
    return %c0_i32, %c0_i32_0 : i32, i32
  }
  func.func @transform_4(%arg0: i32) -> (i32, i32) {
    %c0_i32 = arith.constant 0 : i32
    %c0_i32_0 = arith.constant 0 : i32
    %c0_i32_1 = arith.constant 0 : i32
    return %c0_i32, %c0_i32_0 : i32, i32
  }
  func.func @transform_5(%arg0: i32) -> (i32, i32) {
    %c0_i32 = arith.constant 0 : i32
    %c0_i32_0 = arith.constant 0 : i32
    %c0_i32_1 = arith.constant 0 : i32
    return %c0_i32, %c0_i32_0 : i32, i32
  }
  func.func @transform_6(%arg0: i32) -> (i32, i32) {
    %c0_i32 = arith.constant 0 : i32
    %c0_i32_0 = arith.constant 0 : i32
    %c0_i32_1 = arith.constant 0 : i32
    return %c0_i32, %c0_i32_0 : i32, i32
  }
  func.func @transform_7(%arg0: i32) -> (i32, i32) {
    %c0_i32 = arith.constant 0 : i32
    %c0_i32_0 = arith.constant 0 : i32
    %c0_i32_1 = arith.constant 0 : i32
    return %c0_i32, %c0_i32_0 : i32, i32
  }
  func.func @transform_8(%arg0: i32) -> (i32, i32) {
    %c0_i32 = arith.constant 0 : i32
    %c0_i32_0 = arith.constant 0 : i32
    %c0_i32_1 = arith.constant 0 : i32
    return %c0_i32, %c0_i32_0 : i32, i32
  }
  func.func @transform_9(%arg0: i32) -> (i32, i32) {
    %c0_i32 = arith.constant 0 : i32
    %c0_i32_0 = arith.constant 0 : i32
    %c0_i32_1 = arith.constant 0 : i32
    return %c0_i32, %c0_i32_0 : i32, i32
  }
  func.func @transform_10(%arg0: i32) -> (i32, i32) {
    %c0_i32 = arith.constant 0 : i32
    %c0_i32_0 = arith.constant 0 : i32
    %c0_i32_1 = arith.constant 0 : i32
    return %c0_i32, %c0_i32_0 : i32, i32
  }
  func.func @transform_11(%arg0: i32) -> (i32, i32) {
    %c0_i32 = arith.constant 0 : i32
    %c0_i32_0 = arith.constant 0 : i32
    return %arg0, %c0_i32 : i32, i32
  }
}

module attributes {stable_mosaic.version = 11 : i64} {
  func.func @downblock_kernel(%arg0: i32, %arg1: memref<2x16x16x4xf32, #tpu.memory_space<vmem>>, %arg2: memref<72x8xbf16, #tpu.memory_space<vmem>>, %arg3: memref<1x8xf32, #tpu.memory_space<vmem>>, %arg4: memref<1x8xf32, #tpu.memory_space<vmem>>, %arg5: memref<72x8xbf16, #tpu.memory_space<vmem>>, %arg6: memref<1x8xf32, #tpu.memory_space<vmem>>, %arg7: memref<1x8xf32, #tpu.memory_space<vmem>>, %arg8: memref<8x4xf32, #tpu.memory_space<vmem>>, %arg9: memref<1x4xf32, #tpu.memory_space<vmem>>, %arg10: memref<4x8xf32, #tpu.memory_space<vmem>>, %arg11: memref<1x8xf32, #tpu.memory_space<vmem>>, %arg12: memref<2x8x8x8xf32, #tpu.memory_space<vmem>>, %arg13: memref<2x10x10x8xf32, #tpu.memory_space<vmem>>, %arg14: memref<2x10x10x8xf32, #tpu.memory_space<vmem>>) attributes {dimension_semantics = [#tpu.dimension_semantics<parallel>], iteration_bounds = array<i64: 1>, scalar_prefetch = 0 : i64, scratch_operands = 2 : i64, tpu.core_type = #tpu.core_type<tc>, window_params = [{transform_indices = @transform_0, window_bounds = array<i64: 2, 16, 16, 4>}, {pipeline_mode = #tpu.pipeline_mode<synchronous>, transform_indices = @transform_1, window_bounds = array<i64: 72, 8>}, {pipeline_mode = #tpu.pipeline_mode<synchronous>, transform_indices = @transform_2, window_bounds = array<i64: 1, 8>}, {pipeline_mode = #tpu.pipeline_mode<synchronous>, transform_indices = @transform_3, window_bounds = array<i64: 1, 8>}, {pipeline_mode = #tpu.pipeline_mode<synchronous>, transform_indices = @transform_4, window_bounds = array<i64: 72, 8>}, {pipeline_mode = #tpu.pipeline_mode<synchronous>, transform_indices = @transform_5, window_bounds = array<i64: 1, 8>}, {pipeline_mode = #tpu.pipeline_mode<synchronous>, transform_indices = @transform_6, window_bounds = array<i64: 1, 8>}, {pipeline_mode = #tpu.pipeline_mode<synchronous>, transform_indices = @transform_7, window_bounds = array<i64: 8, 4>}, {pipeline_mode = #tpu.pipeline_mode<synchronous>, transform_indices = @transform_8, window_bounds = array<i64: 1, 4>}, {pipeline_mode = #tpu.pipeline_mode<synchronous>, transform_indices = @transform_9, window_bounds = array<i64: 4, 8>}, {pipeline_mode = #tpu.pipeline_mode<synchronous>, transform_indices = @transform_10, window_bounds = array<i64: 1, 8>}, {transform_indices = @transform_11, window_bounds = array<i64: 2, 8, 8, 8>}]} {
    %c0_i32 = arith.constant 0 : i32
    %0 = arith.cmpi eq, %arg0, %c0_i32 : i32
    %1 = arith.extui %0 : i1 to i32
    %c0_i32_0 = arith.constant 0 : i32
    %2 = arith.cmpi ne, %1, %c0_i32_0 : i32
    scf.if %2 {
      %cst_124 = arith.constant 0.000000e+00 : f32
      %104 = vector.broadcast %cst_124 : f32 to vector<2x10x10x8xf32>
      %c0_125 = arith.constant 0 : index
      %c0_126 = arith.constant 0 : index
      %c0_127 = arith.constant 0 : index
      %c0_128 = arith.constant 0 : index
      %105 = vector.load %arg13[%c0_125, %c0_126, %c0_127, %c0_128] : memref<2x10x10x8xf32, #tpu.memory_space<vmem>>, vector<2x10x10x8xf32>
      tpu.vector_store %arg13[%c0_125, %c0_126, %c0_127, %c0_128], %104 {strides = array<i32>} : memref<2x10x10x8xf32, #tpu.memory_space<vmem>>, vector<2x10x10x8xf32>,
      %cst_129 = arith.constant 0.000000e+00 : f32
      %106 = vector.broadcast %cst_129 : f32 to vector<2x10x10x8xf32>
      %c0_130 = arith.constant 0 : index
      %c0_131 = arith.constant 0 : index
      %c0_132 = arith.constant 0 : index
      %c0_133 = arith.constant 0 : index
      %107 = vector.load %arg14[%c0_130, %c0_131, %c0_132, %c0_133] : memref<2x10x10x8xf32, #tpu.memory_space<vmem>>, vector<2x10x10x8xf32>
      tpu.vector_store %arg14[%c0_130, %c0_131, %c0_132, %c0_133], %106 {strides = array<i32>} : memref<2x10x10x8xf32, #tpu.memory_space<vmem>>, vector<2x10x10x8xf32>,
    } else {
    }
    %c0 = arith.constant 0 : index
    %c0_1 = arith.constant 0 : index
    %c0_2 = arith.constant 0 : index
    %c0_3 = arith.constant 0 : index
    %3 = tpu.strided_load %arg1[%c0, %c0_1, %c0_2, %c0_3] {strides = array<i32: 1, 1, 2, 1>} : memref<2x16x16x4xf32, #tpu.memory_space<vmem>>, vector<2x16x8x4xf32>
    %c0_4 = arith.constant 0 : index
    %c0_5 = arith.constant 0 : index
    %c1 = arith.constant 1 : index
    %c0_6 = arith.constant 0 : index
    %4 = tpu.strided_load %arg1[%c0_4, %c0_5, %c1, %c0_6] {strides = array<i32: 1, 1, 2, 1>} : memref<2x16x16x4xf32, #tpu.memory_space<vmem>>, vector<2x16x8x4xf32>
    %5 = arith.maximumf %3, %4 : vector<2x16x8x4xf32>
    %6 = vector.shape_cast %5 : vector<2x16x8x4xf32> to vector<2x8x2x8x4xf32>
    %7 = arith.addf %3, %4 : vector<2x16x8x4xf32>
    %8 = vector.shape_cast %7 : vector<2x16x8x4xf32> to vector<2x8x2x8x4xf32>
    %9 = vector.extract_strided_slice %6 {offsets = [0, 0, 0, 0, 0], sizes = [2, 8, 1, 8, 4], strides = [1, 1, 1, 1, 1]} : vector<2x8x2x8x4xf32> to vector<2x8x1x8x4xf32>
    %10 = vector.shape_cast %9 : vector<2x8x1x8x4xf32> to vector<2x8x8x4xf32>
    %11 = vector.extract_strided_slice %6 {offsets = [0, 0, 1, 0, 0], sizes = [2, 8, 1, 8, 4], strides = [1, 1, 1, 1, 1]} : vector<2x8x2x8x4xf32> to vector<2x8x1x8x4xf32>
    %12 = vector.shape_cast %11 : vector<2x8x1x8x4xf32> to vector<2x8x8x4xf32>
    %13 = arith.maximumf %10, %12 : vector<2x8x8x4xf32>
    %14 = vector.extract_strided_slice %8 {offsets = [0, 0, 0, 0, 0], sizes = [2, 8, 1, 8, 4], strides = [1, 1, 1, 1, 1]} : vector<2x8x2x8x4xf32> to vector<2x8x1x8x4xf32>
    %15 = vector.shape_cast %14 : vector<2x8x1x8x4xf32> to vector<2x8x8x4xf32>
    %16 = vector.extract_strided_slice %8 {offsets = [0, 0, 1, 0, 0], sizes = [2, 8, 1, 8, 4], strides = [1, 1, 1, 1, 1]} : vector<2x8x2x8x4xf32> to vector<2x8x1x8x4xf32>
    %17 = vector.shape_cast %16 : vector<2x8x1x8x4xf32> to vector<2x8x8x4xf32>
    %18 = arith.addf %15, %17 : vector<2x8x8x4xf32>
    %cst = arith.constant 2.500000e-01 : f32
    %19 = vector.broadcast %cst : f32 to vector<2x8x8x4xf32>
    %20 = arith.mulf %18, %19 : vector<2x8x8x4xf32>
    %21 = tpu.concatenate %13, %20 in 3 : vector<2x8x8x4xf32>, vector<2x8x8x4xf32> -> vector<2x8x8x8xf32>
    %c0_7 = arith.constant 0 : index
    %c1_8 = arith.constant 1 : index
    %c1_9 = arith.constant 1 : index
    %c0_10 = arith.constant 0 : index
    %22 = vector.load %arg13[%c0_7, %c1_8, %c1_9, %c0_10] : memref<2x10x10x8xf32, #tpu.memory_space<vmem>>, vector<2x8x8x8xf32>
    tpu.vector_store %arg13[%c0_7, %c1_8, %c1_9, %c0_10], %21 {strides = array<i32>} : memref<2x10x10x8xf32, #tpu.memory_space<vmem>>, vector<2x8x8x8xf32>,
    %c0_11 = arith.constant 0 : index
    %c0_12 = arith.constant 0 : index
    %c0_13 = arith.constant 0 : index
    %c0_14 = arith.constant 0 : index
    %23 = vector.load %arg13[%c0_11, %c0_12, %c0_13, %c0_14] : memref<2x10x10x8xf32, #tpu.memory_space<vmem>>, vector<2x8x8x8xf32>
    %c0_15 = arith.constant 0 : index
    %c0_16 = arith.constant 0 : index
    %c1_17 = arith.constant 1 : index
    %c0_18 = arith.constant 0 : index
    %24 = vector.load %arg13[%c0_15, %c0_16, %c1_17, %c0_18] : memref<2x10x10x8xf32, #tpu.memory_space<vmem>>, vector<2x8x8x8xf32>
    %c0_19 = arith.constant 0 : index
    %c0_20 = arith.constant 0 : index
    %c2 = arith.constant 2 : index
    %c0_21 = arith.constant 0 : index
    %25 = vector.load %arg13[%c0_19, %c0_20, %c2, %c0_21] : memref<2x10x10x8xf32, #tpu.memory_space<vmem>>, vector<2x8x8x8xf32>
    %c0_22 = arith.constant 0 : index
    %c1_23 = arith.constant 1 : index
    %c0_24 = arith.constant 0 : index
    %c0_25 = arith.constant 0 : index
    %26 = vector.load %arg13[%c0_22, %c1_23, %c0_24, %c0_25] : memref<2x10x10x8xf32, #tpu.memory_space<vmem>>, vector<2x8x8x8xf32>
    %c0_26 = arith.constant 0 : index
    %c1_27 = arith.constant 1 : index
    %c1_28 = arith.constant 1 : index
    %c0_29 = arith.constant 0 : index
    %27 = vector.load %arg13[%c0_26, %c1_27, %c1_28, %c0_29] : memref<2x10x10x8xf32, #tpu.memory_space<vmem>>, vector<2x8x8x8xf32>
    %c0_30 = arith.constant 0 : index
    %c1_31 = arith.constant 1 : index
    %c2_32 = arith.constant 2 : index
    %c0_33 = arith.constant 0 : index
    %28 = vector.load %arg13[%c0_30, %c1_31, %c2_32, %c0_33] : memref<2x10x10x8xf32, #tpu.memory_space<vmem>>, vector<2x8x8x8xf32>
    %c0_34 = arith.constant 0 : index
    %c2_35 = arith.constant 2 : index
    %c0_36 = arith.constant 0 : index
    %c0_37 = arith.constant 0 : index
    %29 = vector.load %arg13[%c0_34, %c2_35, %c0_36, %c0_37] : memref<2x10x10x8xf32, #tpu.memory_space<vmem>>, vector<2x8x8x8xf32>
    %c0_38 = arith.constant 0 : index
    %c2_39 = arith.constant 2 : index
    %c1_40 = arith.constant 1 : index
    %c0_41 = arith.constant 0 : index
    %30 = vector.load %arg13[%c0_38, %c2_39, %c1_40, %c0_41] : memref<2x10x10x8xf32, #tpu.memory_space<vmem>>, vector<2x8x8x8xf32>
    %c0_42 = arith.constant 0 : index
    %c2_43 = arith.constant 2 : index
    %c2_44 = arith.constant 2 : index
    %c0_45 = arith.constant 0 : index
    %31 = vector.load %arg13[%c0_42, %c2_43, %c2_44, %c0_45] : memref<2x10x10x8xf32, #tpu.memory_space<vmem>>, vector<2x8x8x8xf32>
    %32 = tpu.concatenate %23, %24, %25, %26, %27, %28, %29, %30, %31 in 3 : vector<2x8x8x8xf32>, vector<2x8x8x8xf32>, vector<2x8x8x8xf32>, vector<2x8x8x8xf32>, vector<2x8x8x8xf32>, vector<2x8x8x8xf32>, vector<2x8x8x8xf32>, vector<2x8x8x8xf32>, vector<2x8x8x8xf32> -> vector<2x8x8x72xf32>
    %33 = vector.shape_cast %32 : vector<2x8x8x72xf32> to vector<128x72xf32>
    %34 = arith.truncf %33 : vector<128x72xf32> to vector<128x72xbf16>
    %c0_46 = arith.constant 0 : index
    %c0_47 = arith.constant 0 : index
    %35 = vector.load %arg2[%c0_46, %c0_47] : memref<72x8xbf16, #tpu.memory_space<vmem>>, vector<72x8xbf16>
    %cst_48 = arith.constant dense<0.000000e+00> : vector<128x8xf32>
    %36 = tpu.matmul %34, %35, %cst_48 {dimension_numbers = #tpu.dot_dimension_numbers<[1], [0], [0], [1], [0, 0, 1, 1], [], []>} : vector<128x72xbf16>, vector<72x8xbf16>, vector<128x8xf32> -> vector<128x8xf32>
    %c0_49 = arith.constant 0 : index
    %c0_50 = arith.constant 0 : index
    %37 = vector.load %arg3[%c0_49, %c0_50] : memref<1x8xf32, #tpu.memory_space<vmem>>, vector<1x8xf32>
    %38 = vector.broadcast %37 : vector<1x8xf32> to vector<128x8xf32>
    %39 = arith.mulf %36, %38 : vector<128x8xf32>
    %c0_51 = arith.constant 0 : index
    %c0_52 = arith.constant 0 : index
    %40 = vector.load %arg4[%c0_51, %c0_52] : memref<1x8xf32, #tpu.memory_space<vmem>>, vector<1x8xf32>
    %41 = vector.broadcast %40 : vector<1x8xf32> to vector<128x8xf32>
    %42 = arith.addf %39, %41 : vector<128x8xf32>
    %cst_53 = arith.constant 0.000000e+00 : f32
    %43 = vector.broadcast %cst_53 : f32 to vector<128x8xf32>
    %44 = arith.cmpf ogt, %42, %43 : vector<128x8xf32>
    %cst_54 = arith.constant 0.00999999977 : f32
    %45 = vector.broadcast %cst_54 : f32 to vector<128x8xf32>
    %46 = arith.mulf %45, %42 : vector<128x8xf32>
    %47 = arith.select %44, %42, %46 : vector<128x8xi1>, vector<128x8xf32>
    %48 = vector.shape_cast %47 : vector<128x8xf32> to vector<2x8x8x8xf32>
    %c0_55 = arith.constant 0 : index
    %c1_56 = arith.constant 1 : index
    %c1_57 = arith.constant 1 : index
    %c0_58 = arith.constant 0 : index
    %49 = vector.load %arg14[%c0_55, %c1_56, %c1_57, %c0_58] : memref<2x10x10x8xf32, #tpu.memory_space<vmem>>, vector<2x8x8x8xf32>
    tpu.vector_store %arg14[%c0_55, %c1_56, %c1_57, %c0_58], %48 {strides = array<i32>} : memref<2x10x10x8xf32, #tpu.memory_space<vmem>>, vector<2x8x8x8xf32>,
    %c0_59 = arith.constant 0 : index
    %c0_60 = arith.constant 0 : index
    %c0_61 = arith.constant 0 : index
    %c0_62 = arith.constant 0 : index
    %50 = vector.load %arg14[%c0_59, %c0_60, %c0_61, %c0_62] : memref<2x10x10x8xf32, #tpu.memory_space<vmem>>, vector<2x8x8x8xf32>
    %c0_63 = arith.constant 0 : index
    %c0_64 = arith.constant 0 : index
    %c1_65 = arith.constant 1 : index
    %c0_66 = arith.constant 0 : index
    %51 = vector.load %arg14[%c0_63, %c0_64, %c1_65, %c0_66] : memref<2x10x10x8xf32, #tpu.memory_space<vmem>>, vector<2x8x8x8xf32>
    %c0_67 = arith.constant 0 : index
    %c0_68 = arith.constant 0 : index
    %c2_69 = arith.constant 2 : index
    %c0_70 = arith.constant 0 : index
    %52 = vector.load %arg14[%c0_67, %c0_68, %c2_69, %c0_70] : memref<2x10x10x8xf32, #tpu.memory_space<vmem>>, vector<2x8x8x8xf32>
    %c0_71 = arith.constant 0 : index
    %c1_72 = arith.constant 1 : index
    %c0_73 = arith.constant 0 : index
    %c0_74 = arith.constant 0 : index
    %53 = vector.load %arg14[%c0_71, %c1_72, %c0_73, %c0_74] : memref<2x10x10x8xf32, #tpu.memory_space<vmem>>, vector<2x8x8x8xf32>
    %c0_75 = arith.constant 0 : index
    %c1_76 = arith.constant 1 : index
    %c1_77 = arith.constant 1 : index
    %c0_78 = arith.constant 0 : index
    %54 = vector.load %arg14[%c0_75, %c1_76, %c1_77, %c0_78] : memref<2x10x10x8xf32, #tpu.memory_space<vmem>>, vector<2x8x8x8xf32>
    %c0_79 = arith.constant 0 : index
    %c1_80 = arith.constant 1 : index
    %c2_81 = arith.constant 2 : index
    %c0_82 = arith.constant 0 : index
    %55 = vector.load %arg14[%c0_79, %c1_80, %c2_81, %c0_82] : memref<2x10x10x8xf32, #tpu.memory_space<vmem>>, vector<2x8x8x8xf32>
    %c0_83 = arith.constant 0 : index
    %c2_84 = arith.constant 2 : index
    %c0_85 = arith.constant 0 : index
    %c0_86 = arith.constant 0 : index
    %56 = vector.load %arg14[%c0_83, %c2_84, %c0_85, %c0_86] : memref<2x10x10x8xf32, #tpu.memory_space<vmem>>, vector<2x8x8x8xf32>
    %c0_87 = arith.constant 0 : index
    %c2_88 = arith.constant 2 : index
    %c1_89 = arith.constant 1 : index
    %c0_90 = arith.constant 0 : index
    %57 = vector.load %arg14[%c0_87, %c2_88, %c1_89, %c0_90] : memref<2x10x10x8xf32, #tpu.memory_space<vmem>>, vector<2x8x8x8xf32>
    %c0_91 = arith.constant 0 : index
    %c2_92 = arith.constant 2 : index
    %c2_93 = arith.constant 2 : index
    %c0_94 = arith.constant 0 : index
    %58 = vector.load %arg14[%c0_91, %c2_92, %c2_93, %c0_94] : memref<2x10x10x8xf32, #tpu.memory_space<vmem>>, vector<2x8x8x8xf32>
    %59 = tpu.concatenate %50, %51, %52, %53, %54, %55, %56, %57, %58 in 3 : vector<2x8x8x8xf32>, vector<2x8x8x8xf32>, vector<2x8x8x8xf32>, vector<2x8x8x8xf32>, vector<2x8x8x8xf32>, vector<2x8x8x8xf32>, vector<2x8x8x8xf32>, vector<2x8x8x8xf32>, vector<2x8x8x8xf32> -> vector<2x8x8x72xf32>
    %60 = vector.shape_cast %59 : vector<2x8x8x72xf32> to vector<128x72xf32>
    %61 = arith.truncf %60 : vector<128x72xf32> to vector<128x72xbf16>
    %c0_95 = arith.constant 0 : index
    %c0_96 = arith.constant 0 : index
    %62 = vector.load %arg5[%c0_95, %c0_96] : memref<72x8xbf16, #tpu.memory_space<vmem>>, vector<72x8xbf16>
    %cst_97 = arith.constant dense<0.000000e+00> : vector<128x8xf32>
    %63 = tpu.matmul %61, %62, %cst_97 {dimension_numbers = #tpu.dot_dimension_numbers<[1], [0], [0], [1], [0, 0, 1, 1], [], []>} : vector<128x72xbf16>, vector<72x8xbf16>, vector<128x8xf32> -> vector<128x8xf32>
    %c0_98 = arith.constant 0 : index
    %c0_99 = arith.constant 0 : index
    %64 = vector.load %arg6[%c0_98, %c0_99] : memref<1x8xf32, #tpu.memory_space<vmem>>, vector<1x8xf32>
    %65 = vector.broadcast %64 : vector<1x8xf32> to vector<128x8xf32>
    %66 = arith.mulf %63, %65 : vector<128x8xf32>
    %c0_100 = arith.constant 0 : index
    %c0_101 = arith.constant 0 : index
    %67 = vector.load %arg7[%c0_100, %c0_101] : memref<1x8xf32, #tpu.memory_space<vmem>>, vector<1x8xf32>
    %68 = vector.broadcast %67 : vector<1x8xf32> to vector<128x8xf32>
    %69 = arith.addf %66, %68 : vector<128x8xf32>
    %cst_102 = arith.constant 0.000000e+00 : f32
    %70 = vector.broadcast %cst_102 : f32 to vector<128x8xf32>
    %71 = arith.cmpf ogt, %69, %70 : vector<128x8xf32>
    %cst_103 = arith.constant 0.00999999977 : f32
    %72 = vector.broadcast %cst_103 : f32 to vector<128x8xf32>
    %73 = arith.mulf %72, %69 : vector<128x8xf32>
    %74 = arith.select %71, %69, %73 : vector<128x8xi1>, vector<128x8xf32>
    %75 = vector.shape_cast %74 : vector<128x8xf32> to vector<2x64x8xf32>
    %cst_104 = arith.constant dense<0.000000e+00> : vector<2x8xf32>
    %76 = vector.multi_reduction <add>, %75, %cst_104 [1] : vector<2x64x8xf32> to vector<2x8xf32>
    %cst_105 = arith.constant 6.400000e+01 : f32
    %77 = vector.broadcast %cst_105 : f32 to vector<2x8xf32>
    %78 = arith.divf %76, %77 : vector<2x8xf32>
    %c0_106 = arith.constant 0 : index
    %c0_107 = arith.constant 0 : index
    %79 = vector.load %arg8[%c0_106, %c0_107] : memref<8x4xf32, #tpu.memory_space<vmem>>, vector<8x4xf32>
    %cst_108 = arith.constant dense<0.000000e+00> : vector<2x4xf32>
    %80 = tpu.matmul %78, %79, %cst_108 {dimension_numbers = #tpu.dot_dimension_numbers<[1], [0], [0], [1], [0, 0, 1, 1], [], []>} : vector<2x8xf32>, vector<8x4xf32>, vector<2x4xf32> -> vector<2x4xf32>
    %c0_109 = arith.constant 0 : index
    %c0_110 = arith.constant 0 : index
    %81 = vector.load %arg9[%c0_109, %c0_110] : memref<1x4xf32, #tpu.memory_space<vmem>>, vector<1x4xf32>
    %82 = vector.broadcast %81 : vector<1x4xf32> to vector<2x4xf32>
    %83 = arith.addf %80, %82 : vector<2x4xf32>
    %cst_111 = arith.constant 0.000000e+00 : f32
    %84 = vector.broadcast %cst_111 : f32 to vector<2x4xf32>
    %85 = arith.cmpf ogt, %83, %84 : vector<2x4xf32>
    %cst_112 = arith.constant 0.00999999977 : f32
    %86 = vector.broadcast %cst_112 : f32 to vector<2x4xf32>
    %87 = arith.mulf %86, %83 : vector<2x4xf32>
    %88 = arith.select %85, %83, %87 : vector<2x4xi1>, vector<2x4xf32>
    %c0_113 = arith.constant 0 : index
    %c0_114 = arith.constant 0 : index
    %89 = vector.load %arg10[%c0_113, %c0_114] : memref<4x8xf32, #tpu.memory_space<vmem>>, vector<4x8xf32>
    %cst_115 = arith.constant dense<0.000000e+00> : vector<2x8xf32>
    %90 = tpu.matmul %88, %89, %cst_115 {dimension_numbers = #tpu.dot_dimension_numbers<[1], [0], [0], [1], [0, 0, 1, 1], [], []>} : vector<2x4xf32>, vector<4x8xf32>, vector<2x8xf32> -> vector<2x8xf32>
    %c0_116 = arith.constant 0 : index
    %c0_117 = arith.constant 0 : index
    %91 = vector.load %arg11[%c0_116, %c0_117] : memref<1x8xf32, #tpu.memory_space<vmem>>, vector<1x8xf32>
    %92 = vector.broadcast %91 : vector<1x8xf32> to vector<2x8xf32>
    %93 = arith.addf %90, %92 : vector<2x8xf32>
    %cst_118 = arith.constant 0.000000e+00 : f32
    %94 = vector.broadcast %cst_118 : f32 to vector<2x8xf32>
    %95 = arith.maximumf %93, %94 : vector<2x8xf32>
    %96 = vector.shape_cast %95 : vector<2x8xf32> to vector<2x1x8xf32>
    %cst_119 = arith.constant 1.000000e+00 : f32
    %97 = vector.broadcast %cst_119 : f32 to vector<2x1x8xf32>
    %98 = arith.addf %97, %96 : vector<2x1x8xf32>
    %99 = vector.broadcast %98 : vector<2x1x8xf32> to vector<2x64x8xf32>
    %100 = arith.mulf %75, %99 : vector<2x64x8xf32>
    %101 = vector.shape_cast %100 : vector<2x64x8xf32> to vector<2x8x8x8xf32>
    %102 = arith.addf %101, %21 : vector<2x8x8x8xf32>
    %c0_120 = arith.constant 0 : index
    %c0_121 = arith.constant 0 : index
    %c0_122 = arith.constant 0 : index
    %c0_123 = arith.constant 0 : index
    %103 = vector.load %arg12[%c0_120, %c0_121, %c0_122, %c0_123] : memref<2x8x8x8xf32, #tpu.memory_space<vmem>>, vector<2x8x8x8xf32>
    tpu.vector_store %arg12[%c0_120, %c0_121, %c0_122, %c0_123], %102 {strides = array<i32>} : memref<2x8x8x8xf32, #tpu.memory_space<vmem>>, vector<2x8x8x8xf32>,
    return
  }
  func.func @transform_0(%arg0: i32) -> (i32, i32, i32, i32) {
    %c0_i32 = arith.constant 0 : i32
    %c0_i32_0 = arith.constant 0 : i32
    %c0_i32_1 = arith.constant 0 : i32
    %c0_i32_2 = arith.constant 0 : i32
    return %arg0, %c0_i32, %c0_i32_0, %c0_i32_1 : i32, i32, i32, i32
  }
  func.func @transform_1(%arg0: i32) -> (i32, i32) {
    %c0_i32 = arith.constant 0 : i32
    %c0_i32_0 = arith.constant 0 : i32
    %c0_i32_1 = arith.constant 0 : i32
    return %c0_i32, %c0_i32_0 : i32, i32
  }
  func.func @transform_2(%arg0: i32) -> (i32, i32) {
    %c0_i32 = arith.constant 0 : i32
    %c0_i32_0 = arith.constant 0 : i32
    %c0_i32_1 = arith.constant 0 : i32
    return %c0_i32, %c0_i32_0 : i32, i32
  }
  func.func @transform_3(%arg0: i32) -> (i32, i32) {
    %c0_i32 = arith.constant 0 : i32
    %c0_i32_0 = arith.constant 0 : i32
    %c0_i32_1 = arith.constant 0 : i32
    return %c0_i32, %c0_i32_0 : i32, i32
  }
  func.func @transform_4(%arg0: i32) -> (i32, i32) {
    %c0_i32 = arith.constant 0 : i32
    %c0_i32_0 = arith.constant 0 : i32
    %c0_i32_1 = arith.constant 0 : i32
    return %c0_i32, %c0_i32_0 : i32, i32
  }
  func.func @transform_5(%arg0: i32) -> (i32, i32) {
    %c0_i32 = arith.constant 0 : i32
    %c0_i32_0 = arith.constant 0 : i32
    %c0_i32_1 = arith.constant 0 : i32
    return %c0_i32, %c0_i32_0 : i32, i32
  }
  func.func @transform_6(%arg0: i32) -> (i32, i32) {
    %c0_i32 = arith.constant 0 : i32
    %c0_i32_0 = arith.constant 0 : i32
    %c0_i32_1 = arith.constant 0 : i32
    return %c0_i32, %c0_i32_0 : i32, i32
  }
  func.func @transform_7(%arg0: i32) -> (i32, i32) {
    %c0_i32 = arith.constant 0 : i32
    %c0_i32_0 = arith.constant 0 : i32
    %c0_i32_1 = arith.constant 0 : i32
    return %c0_i32, %c0_i32_0 : i32, i32
  }
  func.func @transform_8(%arg0: i32) -> (i32, i32) {
    %c0_i32 = arith.constant 0 : i32
    %c0_i32_0 = arith.constant 0 : i32
    %c0_i32_1 = arith.constant 0 : i32
    return %c0_i32, %c0_i32_0 : i32, i32
  }
  func.func @transform_9(%arg0: i32) -> (i32, i32) {
    %c0_i32 = arith.constant 0 : i32
    %c0_i32_0 = arith.constant 0 : i32
    %c0_i32_1 = arith.constant 0 : i32
    return %c0_i32, %c0_i32_0 : i32, i32
  }
  func.func @transform_10(%arg0: i32) -> (i32, i32) {
    %c0_i32 = arith.constant 0 : i32
    %c0_i32_0 = arith.constant 0 : i32
    %c0_i32_1 = arith.constant 0 : i32
    return %c0_i32, %c0_i32_0 : i32, i32
  }
  func.func @transform_11(%arg0: i32) -> (i32, i32, i32, i32) {
    %c0_i32 = arith.constant 0 : i32
    %c0_i32_0 = arith.constant 0 : i32
    %c0_i32_1 = arith.constant 0 : i32
    %c0_i32_2 = arith.constant 0 : i32
    return %arg0, %c0_i32, %c0_i32_0, %c0_i32_1 : i32, i32, i32, i32
  }
}

</mosaic_0001>

<llo_original>
// kernel: tpu_custom_call.1
$region0: #{tpu_custom_call.1}
  #allocation0 [shape = 'u32[]', space=smem, size = 0x4, offset = 0x4, fixed_abs, tag = 'smem constant byte address 0x4 - core index']
  #allocation1 [shape = 'u32[144,128]{1,0:T(1,128)}', space=vmem, size = 0x12000, scoped, tag = 'internal scratch']
  #allocation2 [shape = 'f32[2,10,10,8]{3,2,1,0:T(8,128)}', space=vmem, size = 0x28000, scoped, tag = 'scratch operand']
  #allocation3 [shape = 'f32[2,10,10,8]{3,2,1,0:T(8,128)}', space=vmem, size = 0x28000, scoped, tag = 'scratch operand']
  %s0 = inlined_call_operand.vmem [shape: f32[2,16,16,4], index: 0, kind: input, shape index: {}]
  %s1 = inlined_call_operand.vmem [shape: bf16[72,8], index: 1, kind: input, shape index: {}]
  %s2 = inlined_call_operand.vmem [shape: f32[1,8], index: 2, kind: input, shape index: {}]
  %s3 = inlined_call_operand.vmem [shape: f32[1,8], index: 3, kind: input, shape index: {}]
  %s4 = inlined_call_operand.vmem [shape: bf16[72,8], index: 4, kind: input, shape index: {}]
  %s5 = inlined_call_operand.vmem [shape: f32[1,8], index: 5, kind: input, shape index: {}]
  %s6 = inlined_call_operand.vmem [shape: f32[1,8], index: 6, kind: input, shape index: {}]
  %s7 = inlined_call_operand.vmem [shape: f32[8,4], index: 7, kind: input, shape index: {}]
  %s8 = inlined_call_operand.vmem [shape: f32[1,4], index: 8, kind: input, shape index: {}]
  %s9 = inlined_call_operand.vmem [shape: f32[4,8], index: 9, kind: input, shape index: {}]
  %s10 = inlined_call_operand.vmem [shape: f32[1,8], index: 10, kind: input, shape index: {}]
  %s11 = inlined_call_operand.hbm [shape: f32[2,8,8,8], index: 11, kind: output, shape index: {}]
  %s12 = sld [smem:[#allocation0]]
  $region58: #{tpu_custom_call.1} parent=0
    _
  %s14 = ssub.s32 1, %s12
  %s15 = scalar_select 0, %s14, %s12
  $region1: #{tpu_custom_call.1} parent=0
    #allocation4 [shape = 'u8[65536]{0}', space=vmem, size = 0x10000, scoped, tag = 'output window, operand 0, single buffered']
    #allocation5 [shape = 's32[1]{0}', space=sflag, size = 0x4, scoped, tag = 'scoped memory for tpu_custom_call.1']
    %16 = vsyncpa [#allocation5], 0
    // Predicated region
    $region2: #{tpu_custom_call.1} parent=1 // pred_check
      _
    $region3: #{tpu_custom_call.1} parent=1 // pred_check_branch
      %18 = sbr.rel (0) target = $region5
    $region4: #{tpu_custom_call.1} parent=1 // pred_region
      _
    $region5: #{tpu_custom_call.1} parent=1 // pred_fallthru
      _
    // Predicated region
    $region6: #{tpu_custom_call.1} parent=1 // pred_check
      _
    $region7: #{tpu_custom_call.1} parent=1 // pred_check_branch
      %20 = sbr.rel (0) target = $region9
    $region8: #{tpu_custom_call.1} parent=1 // pred_region
      _
    $region9: #{tpu_custom_call.1} parent=1 // pred_fallthru
      _
    // Predicated region
    $region10: #{tpu_custom_call.1} parent=1 // pred_check
      _
    $region11: #{tpu_custom_call.1} parent=1 // pred_check_branch
      %22 = sbr.rel (0) target = $region13
    $region12: #{tpu_custom_call.1} parent=1 // pred_region
      _
    $region13: #{tpu_custom_call.1} parent=1 // pred_fallthru
      _
    // Predicated region
    $region14: #{tpu_custom_call.1} parent=1 // pred_check
      _
    $region15: #{tpu_custom_call.1} parent=1 // pred_check_branch
      %24 = sbr.rel (0) target = $region17
    $region16: #{tpu_custom_call.1} parent=1 // pred_region
      _
    $region17: #{tpu_custom_call.1} parent=1 // pred_fallthru
      _
    // Predicated region
    $region18: #{tpu_custom_call.1} parent=1 // pred_check
      _
    $region19: #{tpu_custom_call.1} parent=1 // pred_check_branch
      %26 = sbr.rel (0) target = $region21
    $region20: #{tpu_custom_call.1} parent=1 // pred_region
      _
    $region21: #{tpu_custom_call.1} parent=1 // pred_fallthru
      _
    // Predicated region
    $region22: #{tpu_custom_call.1} parent=1 // pred_check
      _
    $region23: #{tpu_custom_call.1} parent=1 // pred_check_branch
      %28 = sbr.rel (0) target = $region25
    $region24: #{tpu_custom_call.1} parent=1 // pred_region
      _
    $region25: #{tpu_custom_call.1} parent=1 // pred_fallthru
      _
    // Predicated region
    $region26: #{tpu_custom_call.1} parent=1 // pred_check
      _
    $region27: #{tpu_custom_call.1} parent=1 // pred_check_branch
      %30 = sbr.rel (0) target = $region29
    $region28: #{tpu_custom_call.1} parent=1 // pred_region
      _
    $region29: #{tpu_custom_call.1} parent=1 // pred_fallthru
      _
    // Predicated region
    $region30: #{tpu_custom_call.1} parent=1 // pred_check
      _
    $region31: #{tpu_custom_call.1} parent=1 // pred_check_branch
      %32 = sbr.rel (0) target = $region33
    $region32: #{tpu_custom_call.1} parent=1 // pred_region
      _
    $region33: #{tpu_custom_call.1} parent=1 // pred_fallthru
      _
    // Predicated region
    $region34: #{tpu_custom_call.1} parent=1 // pred_check
      _
    $region35: #{tpu_custom_call.1} parent=1 // pred_check_branch
      %34 = sbr.rel (0) target = $region37
    $region36: #{tpu_custom_call.1} parent=1 // pred_region
      _
    $region37: #{tpu_custom_call.1} parent=1 // pred_fallthru
      _
    // Predicated region
    $region38: #{tpu_custom_call.1} parent=1 // pred_check
      _
    $region39: #{tpu_custom_call.1} parent=1 // pred_check_branch
      %36 = sbr.rel (0) target = $region41
    $region40: #{tpu_custom_call.1} parent=1 // pred_region
      _
    $region41: #{tpu_custom_call.1} parent=1 // pred_fallthru
      _
    // Predicated region
    $region42: #{tpu_custom_call.1} parent=1 // pred_check
      _
    $region43: #{tpu_custom_call.1} parent=1 // pred_check_branch
      %38 = sbr.rel (0) target = $region45
    $region44: #{tpu_custom_call.1} parent=1 // pred_region
      _
    $region45: #{tpu_custom_call.1} parent=1 // pred_fallthru
      _
    %p40 = scmp.eq.s32.totalorder 0, 0
    // Predicated region
    $region46: #{tpu_custom_call.1} parent=1 // pred_check
      %p41 = pneg %p40
    $region47: #{tpu_custom_call.1} parent=1 // pred_check_branch
      %43 = sbr.rel (%p41) target = $region49
    $region48: #{tpu_custom_call.1} parent=1 // pred_region
      %vm44 = vcmask 64512
      %45 = vst.msk [vmem:[#allocation2] sm:$0xff] %vm44, 0.0
      %vm46 = vcmask 58368
      %47 = vst.msk [vmem:[#allocation2 + $0x8] sm:$0x3] %vm46, 0.0
      %48 = vst.msk [vmem:[#allocation2 + $0x10] sm:$0xff] %vm44, 0.0
      %49 = vst.msk [vmem:[#allocation2 + $0x18] sm:$0x3] %vm46, 0.0
      %50 = vst.msk [vmem:[#allocation2 + $0x20] sm:$0xff] %vm44, 0.0
      %51 = vst.msk [vmem:[#allocation2 + $0x28] sm:$0x3] %vm46, 0.0
      %52 = vst.msk [vmem:[#allocation2 + $0x30] sm:$0xff] %vm44, 0.0
      %53 = vst.msk [vmem:[#allocation2 + $0x38] sm:$0x3] %vm46, 0.0
      %54 = vst.msk [vmem:[#allocation2 + $0x40] sm:$0xff] %vm44, 0.0
      %55 = vst.msk [vmem:[#allocation2 + $0x48] sm:$0x3] %vm46, 0.0
      %56 = vst.msk [vmem:[#allocation2 + $0x50] sm:$0xff] %vm44, 0.0
      %57 = vst.msk [vmem:[#allocation2 + $0x58] sm:$0x3] %vm46, 0.0
      %58 = vst.msk [vmem:[#allocation2 + $0x60] sm:$0xff] %vm44, 0.0
      %59 = vst.msk [vmem:[#allocation2 + $0x68] sm:$0x3] %vm46, 0.0
      %60 = vst.msk [vmem:[#allocation2 + $0x70] sm:$0xff] %vm44, 0.0
      %61 = vst.msk [vmem:[#allocation2 + $0x78] sm:$0x3] %vm46, 0.0
      %62 = vst.msk [vmem:[#allocation2 + $0x80] sm:$0xff] %vm44, 0.0
      %63 = vst.msk [vmem:[#allocation2 + $0x88] sm:$0x3] %vm46, 0.0
      %64 = vst.msk [vmem:[#allocation2 + $0x90] sm:$0xff] %vm44, 0.0
      %65 = vst.msk [vmem:[#allocation2 + $0x98] sm:$0x3] %vm46, 0.0
      %66 = vst.msk [vmem:[#allocation2 + $0xa0] sm:$0xff] %vm44, 0.0
      %67 = vst.msk [vmem:[#allocation2 + $0xa8] sm:$0x3] %vm46, 0.0
      %68 = vst.msk [vmem:[#allocation2 + $0xb0] sm:$0xff] %vm44, 0.0
      %69 = vst.msk [vmem:[#allocation2 + $0xb8] sm:$0x3] %vm46, 0.0
      %70 = vst.msk [vmem:[#allocation2 + $0xc0] sm:$0xff] %vm44, 0.0
      %71 = vst.msk [vmem:[#allocation2 + $0xc8] sm:$0x3] %vm46, 0.0
      %72 = vst.msk [vmem:[#allocation2 + $0xd0] sm:$0xff] %vm44, 0.0
      %73 = vst.msk [vmem:[#allocation2 + $0xd8] sm:$0x3] %vm46, 0.0
      %74 = vst.msk [vmem:[#allocation2 + $0xe0] sm:$0xff] %vm44, 0.0
      %75 = vst.msk [vmem:[#allocation2 + $0xe8] sm:$0x3] %vm46, 0.0
      %76 = vst.msk [vmem:[#allocation2 + $0xf0] sm:$0xff] %vm44, 0.0
      %77 = vst.msk [vmem:[#allocation2 + $0xf8] sm:$0x3] %vm46, 0.0
      %78 = vst.msk [vmem:[#allocation2 + $0x100] sm:$0xff] %vm44, 0.0
      %79 = vst.msk [vmem:[#allocation2 + $0x108] sm:$0x3] %vm46, 0.0
      %80 = vst.msk [vmem:[#allocation2 + $0x110] sm:$0xff] %vm44, 0.0
      %81 = vst.msk [vmem:[#allocation2 + $0x118] sm:$0x3] %vm46, 0.0
      %82 = vst.msk [vmem:[#allocation2 + $0x120] sm:$0xff] %vm44, 0.0
      %83 = vst.msk [vmem:[#allocation2 + $0x128] sm:$0x3] %vm46, 0.0
      %84 = vst.msk [vmem:[#allocation2 + $0x130] sm:$0xff] %vm44, 0.0
      %85 = vst.msk [vmem:[#allocation2 + $0x138] sm:$0x3] %vm46, 0.0
      %86 = vst.msk [vmem:[#allocation3] sm:$0xff] %vm44, 0.0
      %87 = vst.msk [vmem:[#allocation3 + $0x8] sm:$0x3] %vm46, 0.0
      %88 = vst.msk [vmem:[#allocation3 + $0x10] sm:$0xff] %vm44, 0.0
      %89 = vst.msk [vmem:[#allocation3 + $0x18] sm:$0x3] %vm46, 0.0
      %90 = vst.msk [vmem:[#allocation3 + $0x20] sm:$0xff] %vm44, 0.0
      %91 = vst.msk [vmem:[#allocation3 + $0x28] sm:$0x3] %vm46, 0.0
      %92 = vst.msk [vmem:[#allocation3 + $0x30] sm:$0xff] %vm44, 0.0
      %93 = vst.msk [vmem:[#allocation3 + $0x38] sm:$0x3] %vm46, 0.0
      %94 = vst.msk [vmem:[#allocation3 + $0x40] sm:$0xff] %vm44, 0.0
      %95 = vst.msk [vmem:[#allocation3 + $0x48] sm:$0x3] %vm46, 0.0
      %96 = vst.msk [vmem:[#allocation3 + $0x50] sm:$0xff] %vm44, 0.0
      %97 = vst.msk [vmem:[#allocation3 + $0x58] sm:$0x3] %vm46, 0.0
      %98 = vst.msk [vmem:[#allocation3 + $0x60] sm:$0xff] %vm44, 0.0
      %99 = vst.msk [vmem:[#allocation3 + $0x68] sm:$0x3] %vm46, 0.0
      %100 = vst.msk [vmem:[#allocation3 + $0x70] sm:$0xff] %vm44, 0.0
      %101 = vst.msk [vmem:[#allocation3 + $0x78] sm:$0x3] %vm46, 0.0
      %102 = vst.msk [vmem:[#allocation3 + $0x80] sm:$0xff] %vm44, 0.0
      %103 = vst.msk [vmem:[#allocation3 + $0x88] sm:$0x3] %vm46, 0.0
      %104 = vst.msk [vmem:[#allocation3 + $0x90] sm:$0xff] %vm44, 0.0
      %105 = vst.msk [vmem:[#allocation3 + $0x98] sm:$0x3] %vm46, 0.0
      %106 = vst.msk [vmem:[#allocation3 + $0xa0] sm:$0xff] %vm44, 0.0
      %107 = vst.msk [vmem:[#allocation3 + $0xa8] sm:$0x3] %vm46, 0.0
      %108 = vst.msk [vmem:[#allocation3 + $0xb0] sm:$0xff] %vm44, 0.0
      %109 = vst.msk [vmem:[#allocation3 + $0xb8] sm:$0x3] %vm46, 0.0
      %110 = vst.msk [vmem:[#allocation3 + $0xc0] sm:$0xff] %vm44, 0.0
      %111 = vst.msk [vmem:[#allocation3 + $0xc8] sm:$0x3] %vm46, 0.0
      %112 = vst.msk [vmem:[#allocation3 + $0xd0] sm:$0xff] %vm44, 0.0
      %113 = vst.msk [vmem:[#allocation3 + $0xd8] sm:$0x3] %vm46, 0.0
      %114 = vst.msk [vmem:[#allocation3 + $0xe0] sm:$0xff] %vm44, 0.0
      %115 = vst.msk [vmem:[#allocation3 + $0xe8] sm:$0x3] %vm46, 0.0
      %116 = vst.msk [vmem:[#allocation3 + $0xf0] sm:$0xff] %vm44, 0.0
      %117 = vst.msk [vmem:[#allocation3 + $0xf8] sm:$0x3] %vm46, 0.0
      %118 = vst.msk [vmem:[#allocation3 + $0x100] sm:$0xff] %vm44, 0.0
      %119 = vst.msk [vmem:[#allocation3 + $0x108] sm:$0x3] %vm46, 0.0
      %120 = vst.msk [vmem:[#allocation3 + $0x110] sm:$0xff] %vm44, 0.0
      %121 = vst.msk [vmem:[#allocation3 + $0x118] sm:$0x3] %vm46, 0.0
      %122 = vst.msk [vmem:[#allocation3 + $0x120] sm:$0xff] %vm44, 0.0
      %123 = vst.msk [vmem:[#allocation3 + $0x128] sm:$0x3] %vm46, 0.0
      %124 = vst.msk [vmem:[#allocation3 + $0x130] sm:$0xff] %vm44, 0.0
      %125 = vst.msk [vmem:[#allocation3 + $0x138] sm:$0x3] %vm46, 0.0
    $region49: #{tpu_custom_call.1} parent=1 // pred_fallthru
      _
    %v126 = vld [vmem:[%s0] ss:$2 sm:$0xff]
    %s127 = scalar_lea.vmem %s0, 16
    %v128 = vld [vmem:[%s127] ss:$2 sm:$0xff]
    %s129 = scalar_lea.vmem %s0, 32
    %v130 = vld [vmem:[%s129] ss:$2 sm:$0xff]
    %s131 = scalar_lea.vmem %s0, 48
    %v132 = vld [vmem:[%s131] ss:$2 sm:$0xff]
    %s133 = scalar_lea.vmem %s0, 64
    %v134 = vld [vmem:[%s133] ss:$2 sm:$0xff]
    %s135 = scalar_lea.vmem %s0, 80
    %v136 = vld [vmem:[%s135] ss:$2 sm:$0xff]
    %s137 = scalar_lea.vmem %s0, 96
    %v138 = vld [vmem:[%s137] ss:$2 sm:$0xff]
    %s139 = scalar_lea.vmem %s0, 112
    %v140 = vld [vmem:[%s139] ss:$2 sm:$0xff]
    %s141 = scalar_lea.vmem %s0, 128
    %v142 = vld [vmem:[%s141] ss:$2 sm:$0xff]
    %s143 = scalar_lea.vmem %s0, 144
    %v144 = vld [vmem:[%s143] ss:$2 sm:$0xff]
    %s145 = scalar_lea.vmem %s0, 160
    %v146 = vld [vmem:[%s145] ss:$2 sm:$0xff]
    %s147 = scalar_lea.vmem %s0, 176
    %v148 = vld [vmem:[%s147] ss:$2 sm:$0xff]
    %s149 = scalar_lea.vmem %s0, 192
    %v150 = vld [vmem:[%s149] ss:$2 sm:$0xff]
    %s151 = scalar_lea.vmem %s0, 208
    %v152 = vld [vmem:[%s151] ss:$2 sm:$0xff]
    %s153 = scalar_lea.vmem %s0, 224
    %v154 = vld [vmem:[%s153] ss:$2 sm:$0xff]
    %s155 = scalar_lea.vmem %s0, 240
    %v156 = vld [vmem:[%s155] ss:$2 sm:$0xff]
    %s157 = scalar_lea.vmem %s0, 256
    %v158 = vld [vmem:[%s157] ss:$2 sm:$0xff]
    %s159 = scalar_lea.vmem %s0, 272
    %v160 = vld [vmem:[%s159] ss:$2 sm:$0xff]
    %s161 = scalar_lea.vmem %s0, 288
    %v162 = vld [vmem:[%s161] ss:$2 sm:$0xff]
    %s163 = scalar_lea.vmem %s0, 304
    %v164 = vld [vmem:[%s163] ss:$2 sm:$0xff]
    %s165 = scalar_lea.vmem %s0, 320
    %v166 = vld [vmem:[%s165] ss:$2 sm:$0xff]
    %s167 = scalar_lea.vmem %s0, 336
    %v168 = vld [vmem:[%s167] ss:$2 sm:$0xff]
    %s169 = scalar_lea.vmem %s0, 352
    %v170 = vld [vmem:[%s169] ss:$2 sm:$0xff]
    %s171 = scalar_lea.vmem %s0, 368
    %v172 = vld [vmem:[%s171] ss:$2 sm:$0xff]
    %s173 = scalar_lea.vmem %s0, 384
    %v174 = vld [vmem:[%s173] ss:$2 sm:$0xff]
    %s175 = scalar_lea.vmem %s0, 400
    %v176 = vld [vmem:[%s175] ss:$2 sm:$0xff]
    %s177 = scalar_lea.vmem %s0, 416
    %v178 = vld [vmem:[%s177] ss:$2 sm:$0xff]
    %s179 = scalar_lea.vmem %s0, 432
    %v180 = vld [vmem:[%s179] ss:$2 sm:$0xff]
    %s181 = scalar_lea.vmem %s0, 448
    %v182 = vld [vmem:[%s181] ss:$2 sm:$0xff]
    %s183 = scalar_lea.vmem %s0, 464
    %v184 = vld [vmem:[%s183] ss:$2 sm:$0xff]
    %s185 = scalar_lea.vmem %s0, 480
    %v186 = vld [vmem:[%s185] ss:$2 sm:$0xff]
    %s187 = scalar_lea.vmem %s0, 496
    %v188 = vld [vmem:[%s187] ss:$2 sm:$0xff]
    %s189 = scalar_lea.vmem %s0, 1
    %v190 = vld [vmem:[%s189] ss:$2 sm:$0xff]
    %s191 = scalar_lea.vmem %s0, 17
    %v192 = vld [vmem:[%s191] ss:$2 sm:$0xff]
    %s193 = scalar_lea.vmem %s0, 33
    %v194 = vld [vmem:[%s193] ss:$2 sm:$0xff]
    %s195 = scalar_lea.vmem %s0, 49
    %v196 = vld [vmem:[%s195] ss:$2 sm:$0xff]
    %s197 = scalar_lea.vmem %s0, 65
    %v198 = vld [vmem:[%s197] ss:$2 sm:$0xff]
    %s199 = scalar_lea.vmem %s0, 81
    %v200 = vld [vmem:[%s199] ss:$2 sm:$0xff]
    %s201 = scalar_lea.vmem %s0, 97
    %v202 = vld [vmem:[%s201] ss:$2 sm:$0xff]
    %s203 = scalar_lea.vmem %s0, 113
    %v204 = vld [vmem:[%s203] ss:$2 sm:$0xff]
    %s205 = scalar_lea.vmem %s0, 129
    %v206 = vld [vmem:[%s205] ss:$2 sm:$0xff]
    %s207 = scalar_lea.vmem %s0, 145
    %v208 = vld [vmem:[%s207] ss:$2 sm:$0xff]
    %s209 = scalar_lea.vmem %s0, 161
    %v210 = vld [vmem:[%s209] ss:$2 sm:$0xff]
    %s211 = scalar_lea.vmem %s0, 177
    %v212 = vld [vmem:[%s211] ss:$2 sm:$0xff]
    %s213 = scalar_lea.vmem %s0, 193
    %v214 = vld [vmem:[%s213] ss:$2 sm:$0xff]
    %s215 = scalar_lea.vmem %s0, 209
    %v216 = vld [vmem:[%s215] ss:$2 sm:$0xff]
    %s217 = scalar_lea.vmem %s0, 225
    %v218 = vld [vmem:[%s217] ss:$2 sm:$0xff]
    %s219 = scalar_lea.vmem %s0, 241
    %v220 = vld [vmem:[%s219] ss:$2 sm:$0xff]
    %s221 = scalar_lea.vmem %s0, 257
    %v222 = vld [vmem:[%s221] ss:$2 sm:$0xff]
    %s223 = scalar_lea.vmem %s0, 273
    %v224 = vld [vmem:[%s223] ss:$2 sm:$0xff]
    %s225 = scalar_lea.vmem %s0, 289
    %v226 = vld [vmem:[%s225] ss:$2 sm:$0xff]
    %s227 = scalar_lea.vmem %s0, 305
    %v228 = vld [vmem:[%s227] ss:$2 sm:$0xff]
    %s229 = scalar_lea.vmem %s0, 321
    %v230 = vld [vmem:[%s229] ss:$2 sm:$0xff]
    %s231 = scalar_lea.vmem %s0, 337
    %v232 = vld [vmem:[%s231] ss:$2 sm:$0xff]
    %s233 = scalar_lea.vmem %s0, 353
    %v234 = vld [vmem:[%s233] ss:$2 sm:$0xff]
    %s235 = scalar_lea.vmem %s0, 369
    %v236 = vld [vmem:[%s235] ss:$2 sm:$0xff]
    %s237 = scalar_lea.vmem %s0, 385
    %v238 = vld [vmem:[%s237] ss:$2 sm:$0xff]
    %s239 = scalar_lea.vmem %s0, 401
    %v240 = vld [vmem:[%s239] ss:$2 sm:$0xff]
    %s241 = scalar_lea.vmem %s0, 417
    %v242 = vld [vmem:[%s241] ss:$2 sm:$0xff]
    %s243 = scalar_lea.vmem %s0, 433
    %v244 = vld [vmem:[%s243] ss:$2 sm:$0xff]
    %s245 = scalar_lea.vmem %s0, 449
    %v246 = vld [vmem:[%s245] ss:$2 sm:$0xff]
    %s247 = scalar_lea.vmem %s0, 465
    %v248 = vld [vmem:[%s247] ss:$2 sm:$0xff]
    %s249 = scalar_lea.vmem %s0, 481
    %v250 = vld [vmem:[%s249] ss:$2 sm:$0xff]
    %s251 = scalar_lea.vmem %s0, 497
    %v252 = vld [vmem:[%s251] ss:$2 sm:$0xff]
    %v253 = vmax.f32 %v126, %v190
    %v254 = vmax.f32 %v128, %v192
    %v255 = vmax.f32 %v130, %v194
    %v256 = vmax.f32 %v132, %v196
    %v257 = vmax.f32 %v134, %v198
    %v258 = vmax.f32 %v136, %v200
    %v259 = vmax.f32 %v138, %v202
    %v260 = vmax.f32 %v140, %v204
    %v261 = vmax.f32 %v142, %v206
    %v262 = vmax.f32 %v144, %v208
    %v263 = vmax.f32 %v146, %v210
    %v264 = vmax.f32 %v148, %v212
    %v265 = vmax.f32 %v150, %v214
    %v266 = vmax.f32 %v152, %v216
    %v267 = vmax.f32 %v154, %v218
    %v268 = vmax.f32 %v156, %v220
    %v269 = vmax.f32 %v158, %v222
    %v270 = vmax.f32 %v160, %v224
    %v271 = vmax.f32 %v162, %v226
    %v272 = vmax.f32 %v164, %v228
    %v273 = vmax.f32 %v166, %v230
    %v274 = vmax.f32 %v168, %v232
    %v275 = vmax.f32 %v170, %v234
    %v276 = vmax.f32 %v172, %v236
    %v277 = vmax.f32 %v174, %v238
    %v278 = vmax.f32 %v176, %v240
    %v279 = vmax.f32 %v178, %v242
    %v280 = vmax.f32 %v180, %v244
    %v281 = vmax.f32 %v182, %v246
    %v282 = vmax.f32 %v184, %v248
    %v283 = vmax.f32 %v186, %v250
    %v284 = vmax.f32 %v188, %v252
    %v285 = vadd.f32 %v126, %v190
    %v286 = vadd.f32 %v128, %v192
    %v287 = vadd.f32 %v130, %v194
    %v288 = vadd.f32 %v132, %v196
    %v289 = vadd.f32 %v134, %v198
    %v290 = vadd.f32 %v136, %v200
    %v291 = vadd.f32 %v138, %v202
    %v292 = vadd.f32 %v140, %v204
    %v293 = vadd.f32 %v142, %v206
    %v294 = vadd.f32 %v144, %v208
    %v295 = vadd.f32 %v146, %v210
    %v296 = vadd.f32 %v148, %v212
    %v297 = vadd.f32 %v150, %v214
    %v298 = vadd.f32 %v152, %v216
    %v299 = vadd.f32 %v154, %v218
    %v300 = vadd.f32 %v156, %v220
    %v301 = vadd.f32 %v158, %v222
    %v302 = vadd.f32 %v160, %v224
    %v303 = vadd.f32 %v162, %v226
    %v304 = vadd.f32 %v164, %v228
    %v305 = vadd.f32 %v166, %v230
    %v306 = vadd.f32 %v168, %v232
    %v307 = vadd.f32 %v170, %v234
    %v308 = vadd.f32 %v172, %v236
    %v309 = vadd.f32 %v174, %v238
    %v310 = vadd.f32 %v176, %v240
    %v311 = vadd.f32 %v178, %v242
    %v312 = vadd.f32 %v180, %v244
    %v313 = vadd.f32 %v182, %v246
    %v314 = vadd.f32 %v184, %v248
    %v315 = vadd.f32 %v186, %v250
    %v316 = vadd.f32 %v188, %v252
    %v317 = vmax.f32 %v253, %v254
    %v318 = vmax.f32 %v255, %v256
    %v319 = vmax.f32 %v257, %v258
    %v320 = vmax.f32 %v259, %v260
    %v321 = vmax.f32 %v261, %v262
    %v322 = vmax.f32 %v263, %v264
    %v323 = vmax.f32 %v265, %v266
    %v324 = vmax.f32 %v267, %v268
    %v325 = vmax.f32 %v269, %v270
    %v326 = vmax.f32 %v271, %v272
    %v327 = vmax.f32 %v273, %v274
    %v328 = vmax.f32 %v275, %v276
    %v329 = vmax.f32 %v277, %v278
    %v330 = vmax.f32 %v279, %v280
    %v331 = vmax.f32 %v281, %v282
    %v332 = vmax.f32 %v283, %v284
    %v333 = vadd.f32 %v285, %v286
    %v334 = vadd.f32 %v287, %v288
    %v335 = vadd.f32 %v289, %v290
    %v336 = vadd.f32 %v291, %v292
    %v337 = vadd.f32 %v293, %v294
    %v338 = vadd.f32 %v295, %v296
    %v339 = vadd.f32 %v297, %v298
    %v340 = vadd.f32 %v299, %v300
    %v341 = vadd.f32 %v301, %v302
    %v342 = vadd.f32 %v303, %v304
    %v343 = vadd.f32 %v305, %v306
    %v344 = vadd.f32 %v307, %v308
    %v345 = vadd.f32 %v309, %v310
    %v346 = vadd.f32 %v311, %v312
    %v347 = vadd.f32 %v313, %v314
    %v348 = vadd.f32 %v315, %v316
    %v349 = vmul.f32 %v333, 0.25
    %v350 = vmul.f32 %v334, 0.25
    %v351 = vmul.f32 %v335, 0.25
    %v352 = vmul.f32 %v336, 0.25
    %v353 = vmul.f32 %v337, 0.25
    %v354 = vmul.f32 %v338, 0.25
    %v355 = vmul.f32 %v339, 0.25
    %v356 = vmul.f32 %v340, 0.25
    %v357 = vmul.f32 %v341, 0.25
    %v358 = vmul.f32 %v342, 0.25
    %v359 = vmul.f32 %v343, 0.25
    %v360 = vmul.f32 %v344, 0.25
    %v361 = vmul.f32 %v345, 0.25
    %v362 = vmul.f32 %v346, 0.25
    %v363 = vmul.f32 %v347, 0.25
    %v364 = vmul.f32 %v348, 0.25
    %381 = vrot.lane.b32.xlu0 %v349, 4
    %v382 = vpop.permute.xlu0 %381
    %383 = vrot.lane.b32.xlu0 %v350, 4
    %v384 = vpop.permute.xlu0 %383
    %385 = vrot.lane.b32.xlu0 %v351, 4
    %v386 = vpop.permute.xlu0 %385
    %387 = vrot.lane.b32.xlu0 %v352, 4
    %v388 = vpop.permute.xlu0 %387
    %389 = vrot.lane.b32.xlu0 %v353, 4
    %v390 = vpop.permute.xlu0 %389
    %391 = vrot.lane.b32.xlu0 %v354, 4
    %v392 = vpop.permute.xlu0 %391
    %393 = vrot.lane.b32.xlu0 %v355, 4
    %v394 = vpop.permute.xlu0 %393
    %395 = vrot.lane.b32.xlu0 %v356, 4
    %v396 = vpop.permute.xlu0 %395
    %397 = vrot.lane.b32.xlu0 %v357, 4
    %v398 = vpop.permute.xlu0 %397
    %399 = vrot.lane.b32.xlu0 %v358, 4
    %v400 = vpop.permute.xlu0 %399
    %401 = vrot.lane.b32.xlu0 %v359, 4
    %v402 = vpop.permute.xlu0 %401
    %403 = vrot.lane.b32.xlu0 %v360, 4
    %v404 = vpop.permute.xlu0 %403
    %405 = vrot.lane.b32.xlu0 %v361, 4
    %v406 = vpop.permute.xlu0 %405
    %407 = vrot.lane.b32.xlu0 %v362, 4
    %v408 = vpop.permute.xlu0 %407
    %409 = vrot.lane.b32.xlu0 %v363, 4
    %v410 = vpop.permute.xlu0 %409
    %411 = vrot.lane.b32.xlu0 %v364, 4
    %v412 = vpop.permute.xlu0 %411
    %vm429 = vcmask 31744
    %v430 = vsel %vm429, %v317, %v382
    %v431 = vsel %vm429, %v318, %v384
    %v432 = vsel %vm429, %v319, %v386
    %v433 = vsel %vm429, %v320, %v388
    %v434 = vsel %vm429, %v321, %v390
    %v435 = vsel %vm429, %v322, %v392
    %v436 = vsel %vm429, %v323, %v394
    %v437 = vsel %vm429, %v324, %v396
    %v438 = vsel %vm429, %v325, %v398
    %v439 = vsel %vm429, %v326, %v400
    %v440 = vsel %vm429, %v327, %v402
    %v441 = vsel %vm429, %v328, %v404
    %v442 = vsel %vm429, %v329, %v406
    %v443 = vsel %vm429, %v330, %v408
    %v444 = vsel %vm429, %v331, %v410
    %v445 = vsel %vm429, %v332, %v412
    %s446 = scalar_lea.vmem [#allocation2], 16
    %vm447 = vcmask 64512
    %448 = vst.msk [vmem:[%s446 + $0x1] sm:$0xff] %vm447, %v430
    %449 = vst.msk [vmem:[%s446 + $0x11] sm:$0xff] %vm447, %v431
    %450 = vst.msk [vmem:[%s446 + $0x21] sm:$0xff] %vm447, %v432
    %451 = vst.msk [vmem:[%s446 + $0x31] sm:$0xff] %vm447, %v433
    %452 = vst.msk [vmem:[%s446 + $0x41] sm:$0xff] %vm447, %v434
    %453 = vst.msk [vmem:[%s446 + $0x51] sm:$0xff] %vm447, %v435
    %454 = vst.msk [vmem:[%s446 + $0x61] sm:$0xff] %vm447, %v436
    %455 = vst.msk [vmem:[%s446 + $0x71] sm:$0xff] %vm447, %v437
    %456 = vst.msk [vmem:[%s446 + $0xa1] sm:$0xff] %vm447, %v438
    %457 = vst.msk [vmem:[%s446 + $0xb1] sm:$0xff] %vm447, %v439
    %458 = vst.msk [vmem:[%s446 + $0xc1] sm:$0xff] %vm447, %v440
    %459 = vst.msk [vmem:[%s446 + $0xd1] sm:$0xff] %vm447, %v441
    %460 = vst.msk [vmem:[%s446 + $0xe1] sm:$0xff] %vm447, %v442
    %461 = vst.msk [vmem:[%s446 + $0xf1] sm:$0xff] %vm447, %v443
    %462 = vst.msk [vmem:[%s446 + $0x101] sm:$0xff] %vm447, %v444
    %463 = vst.msk [vmem:[%s446 + $0x111] sm:$0xff] %vm447, %v445
    %v464 = vld [vmem:[#allocation2] sm:$0xff]
    %v465 = vld [vmem:[#allocation2 + $0x10] sm:$0xff]
    %v466 = vld [vmem:[#allocation2 + $0x20] sm:$0xff]
    %v467 = vld [vmem:[#allocation2 + $0x30] sm:$0xff]
    %v468 = vld [vmem:[#allocation2 + $0x40] sm:$0xff]
    %v469 = vld [vmem:[#allocation2 + $0x50] sm:$0xff]
    %v470 = vld [vmem:[#allocation2 + $0x60] sm:$0xff]
    %v471 = vld [vmem:[#allocation2 + $0x70] sm:$0xff]
    %v472 = vld [vmem:[#allocation2 + $0xa0] sm:$0xff]
    %v473 = vld [vmem:[#allocation2 + $0xb0] sm:$0xff]
    %v474 = vld [vmem:[#allocation2 + $0xc0] sm:$0xff]
    %v475 = vld [vmem:[#allocation2 + $0xd0] sm:$0xff]
    %v476 = vld [vmem:[#allocation2 + $0xe0] sm:$0xff]
    %v477 = vld [vmem:[#allocation2 + $0xf0] sm:$0xff]
    %v478 = vld [vmem:[#allocation2 + $0x100] sm:$0xff]
    %v479 = vld [vmem:[#allocation2 + $0x110] sm:$0xff]
    %v480 = vld [vmem:[#allocation2 + $0x1] sm:$0xff]
    %v481 = vld [vmem:[#allocation2 + $0x11] sm:$0xff]
    %v482 = vld [vmem:[#allocation2 + $0x21] sm:$0xff]
    %v483 = vld [vmem:[#allocation2 + $0x31] sm:$0xff]
    %v484 = vld [vmem:[#allocation2 + $0x41] sm:$0xff]
    %v485 = vld [vmem:[#allocation2 + $0x51] sm:$0xff]
    %v486 = vld [vmem:[#allocation2 + $0x61] sm:$0xff]
    %v487 = vld [vmem:[#allocation2 + $0x71] sm:$0xff]
    %v488 = vld [vmem:[#allocation2 + $0xa1] sm:$0xff]
    %v489 = vld [vmem:[#allocation2 + $0xb1] sm:$0xff]
    %v490 = vld [vmem:[#allocation2 + $0xc1] sm:$0xff]
    %v491 = vld [vmem:[#allocation2 + $0xd1] sm:$0xff]
    %v492 = vld [vmem:[#allocation2 + $0xe1] sm:$0xff]
    %v493 = vld [vmem:[#allocation2 + $0xf1] sm:$0xff]
    %v494 = vld [vmem:[#allocation2 + $0x101] sm:$0xff]
    %v495 = vld [vmem:[#allocation2 + $0x111] sm:$0xff]
    %v496 = vld [vmem:[#allocation2 + $0x2] sm:$0xff]
    %v497 = vld [vmem:[#allocation2 + $0x12] sm:$0xff]
    %v498 = vld [vmem:[#allocation2 + $0x22] sm:$0xff]
    %v499 = vld [vmem:[#allocation2 + $0x32] sm:$0xff]
    %v500 = vld [vmem:[#allocation2 + $0x42] sm:$0xff]
    %v501 = vld [vmem:[#allocation2 + $0x52] sm:$0xff]
    %v502 = vld [vmem:[#allocation2 + $0x62] sm:$0xff]
    %v503 = vld [vmem:[#allocation2 + $0x72] sm:$0xff]
    %v504 = vld [vmem:[#allocation2 + $0xa2] sm:$0xff]
    %v505 = vld [vmem:[#allocation2 + $0xb2] sm:$0xff]
    %v506 = vld [vmem:[#allocation2 + $0xc2] sm:$0xff]
    %v507 = vld [vmem:[#allocation2 + $0xd2] sm:$0xff]
    %v508 = vld [vmem:[#allocation2 + $0xe2] sm:$0xff]
    %v509 = vld [vmem:[#allocation2 + $0xf2] sm:$0xff]
    %v510 = vld [vmem:[#allocation2 + $0x102] sm:$0xff]
    %v511 = vld [vmem:[#allocation2 + $0x112] sm:$0xff]
    %v512 = vld [vmem:[%s446] sm:$0xff]
    %v513 = vld [vmem:[%s446 + $0x10] sm:$0xff]
    %v514 = vld [vmem:[%s446 + $0x20] sm:$0xff]
    %v515 = vld [vmem:[%s446 + $0x30] sm:$0xff]
    %v516 = vld [vmem:[%s446 + $0x40] sm:$0xff]
    %v517 = vld [vmem:[%s446 + $0x50] sm:$0xff]
    %v518 = vld [vmem:[%s446 + $0x60] sm:$0xff]
    %v519 = vld [vmem:[%s446 + $0x70] sm:$0xff]
    %v520 = vld [vmem:[%s446 + $0xa0] sm:$0xff]
    %v521 = vld [vmem:[%s446 + $0xb0] sm:$0xff]
    %v522 = vld [vmem:[%s446 + $0xc0] sm:$0xff]
    %v523 = vld [vmem:[%s446 + $0xd0] sm:$0xff]
    %v524 = vld [vmem:[%s446 + $0xe0] sm:$0xff]
    %v525 = vld [vmem:[%s446 + $0xf0] sm:$0xff]
    %v526 = vld [vmem:[%s446 + $0x100] sm:$0xff]
    %v527 = vld [vmem:[%s446 + $0x110] sm:$0xff]
    %v528 = vld [vmem:[%s446 + $0x1] sm:$0xff]
    %v529 = vld [vmem:[%s446 + $0x11] sm:$0xff]
    %v530 = vld [vmem:[%s446 + $0x21] sm:$0xff]
    %v531 = vld [vmem:[%s446 + $0x31] sm:$0xff]
    %v532 = vld [vmem:[%s446 + $0x41] sm:$0xff]
    %v533 = vld [vmem:[%s446 + $0x51] sm:$0xff]
    %v534 = vld [vmem:[%s446 + $0x61] sm:$0xff]
    %v535 = vld [vmem:[%s446 + $0x71] sm:$0xff]
    %v536 = vld [vmem:[%s446 + $0xa1] sm:$0xff]
    %v537 = vld [vmem:[%s446 + $0xb1] sm:$0xff]
    %v538 = vld [vmem:[%s446 + $0xc1] sm:$0xff]
    %v539 = vld [vmem:[%s446 + $0xd1] sm:$0xff]
    %v540 = vld [vmem:[%s446 + $0xe1] sm:$0xff]
    %v541 = vld [vmem:[%s446 + $0xf1] sm:$0xff]
    %v542 = vld [vmem:[%s446 + $0x101] sm:$0xff]
    %v543 = vld [vmem:[%s446 + $0x111] sm:$0xff]
    %v544 = vld [vmem:[%s446 + $0x2] sm:$0xff]
    %v545 = vld [vmem:[%s446 + $0x12] sm:$0xff]
    %v546 = vld [vmem:[%s446 + $0x22] sm:$0xff]
    %v547 = vld [vmem:[%s446 + $0x32] sm:$0xff]
    %v548 = vld [vmem:[%s446 + $0x42] sm:$0xff]
    %v549 = vld [vmem:[%s446 + $0x52] sm:$0xff]
    %v550 = vld [vmem:[%s446 + $0x62] sm:$0xff]
    %v551 = vld [vmem:[%s446 + $0x72] sm:$0xff]
    %v552 = vld [vmem:[%s446 + $0xa2] sm:$0xff]
    %v553 = vld [vmem:[%s446 + $0xb2] sm:$0xff]
    %v554 = vld [vmem:[%s446 + $0xc2] sm:$0xff]
    %v555 = vld [vmem:[%s446 + $0xd2] sm:$0xff]
    %v556 = vld [vmem:[%s446 + $0xe2] sm:$0xff]
    %v557 = vld [vmem:[%s446 + $0xf2] sm:$0xff]
    %v558 = vld [vmem:[%s446 + $0x102] sm:$0xff]
    %v559 = vld [vmem:[%s446 + $0x112] sm:$0xff]
    %s560 = scalar_lea.vmem [#allocation2], 32
    %v561 = vld [vmem:[%s560] sm:$0xff]
    %v562 = vld [vmem:[%s560 + $0x10] sm:$0xff]
    %v563 = vld [vmem:[%s560 + $0x20] sm:$0xff]
    %v564 = vld [vmem:[%s560 + $0x30] sm:$0xff]
    %v565 = vld [vmem:[%s560 + $0x40] sm:$0xff]
    %v566 = vld [vmem:[%s560 + $0x50] sm:$0xff]
    %v567 = vld [vmem:[%s560 + $0x60] sm:$0xff]
    %v568 = vld [vmem:[%s560 + $0x70] sm:$0xff]
    %v569 = vld [vmem:[%s560 + $0xa0] sm:$0xff]
    %v570 = vld [vmem:[%s560 + $0xb0] sm:$0xff]
    %v571 = vld [vmem:[%s560 + $0xc0] sm:$0xff]
    %v572 = vld [vmem:[%s560 + $0xd0] sm:$0xff]
    %v573 = vld [vmem:[%s560 + $0xe0] sm:$0xff]
    %v574 = vld [vmem:[%s560 + $0xf0] sm:$0xff]
    %v575 = vld [vmem:[%s560 + $0x100] sm:$0xff]
    %v576 = vld [vmem:[%s560 + $0x110] sm:$0xff]
    %v577 = vld [vmem:[%s560 + $0x1] sm:$0xff]
    %v578 = vld [vmem:[%s560 + $0x11] sm:$0xff]
    %v579 = vld [vmem:[%s560 + $0x21] sm:$0xff]
    %v580 = vld [vmem:[%s560 + $0x31] sm:$0xff]
    %v581 = vld [vmem:[%s560 + $0x41] sm:$0xff]
    %v582 = vld [vmem:[%s560 + $0x51] sm:$0xff]
    %v583 = vld [vmem:[%s560 + $0x61] sm:$0xff]
    %v584 = vld [vmem:[%s560 + $0x71] sm:$0xff]
    %v585 = vld [vmem:[%s560 + $0xa1] sm:$0xff]
    %v586 = vld [vmem:[%s560 + $0xb1] sm:$0xff]
    %v587 = vld [vmem:[%s560 + $0xc1] sm:$0xff]
    %v588 = vld [vmem:[%s560 + $0xd1] sm:$0xff]
    %v589 = vld [vmem:[%s560 + $0xe1] sm:$0xff]
    %v590 = vld [vmem:[%s560 + $0xf1] sm:$0xff]
    %v591 = vld [vmem:[%s560 + $0x101] sm:$0xff]
    %v592 = vld [vmem:[%s560 + $0x111] sm:$0xff]
    %v593 = vld [vmem:[%s560 + $0x2] sm:$0xff]
    %v594 = vld [vmem:[%s560 + $0x12] sm:$0xff]
    %v595 = vld [vmem:[%s560 + $0x22] sm:$0xff]
    %v596 = vld [vmem:[%s560 + $0x32] sm:$0xff]
    %v597 = vld [vmem:[%s560 + $0x42] sm:$0xff]
    %v598 = vld [vmem:[%s560 + $0x52] sm:$0xff]
    %v599 = vld [vmem:[%s560 + $0x62] sm:$0xff]
    %v600 = vld [vmem:[%s560 + $0x72] sm:$0xff]
    %v601 = vld [vmem:[%s560 + $0xa2] sm:$0xff]
    %v602 = vld [vmem:[%s560 + $0xb2] sm:$0xff]
    %v603 = vld [vmem:[%s560 + $0xc2] sm:$0xff]
    %v604 = vld [vmem:[%s560 + $0xd2] sm:$0xff]
    %v605 = vld [vmem:[%s560 + $0xe2] sm:$0xff]
    %v606 = vld [vmem:[%s560 + $0xf2] sm:$0xff]
    %v607 = vld [vmem:[%s560 + $0x102] sm:$0xff]
    %v608 = vld [vmem:[%s560 + $0x112] sm:$0xff]
    %625 = vrot.lane.b32.xlu0 %v480, 8
    %v626 = vpop.permute.xlu0 %625
    %627 = vrot.lane.b32.xlu0 %v481, 8
    %v628 = vpop.permute.xlu0 %627
    %629 = vrot.lane.b32.xlu0 %v482, 8
    %v630 = vpop.permute.xlu0 %629
    %631 = vrot.lane.b32.xlu0 %v483, 8
    %v632 = vpop.permute.xlu0 %631
    %633 = vrot.lane.b32.xlu0 %v484, 8
    %v634 = vpop.permute.xlu0 %633
    %635 = vrot.lane.b32.xlu0 %v485, 8
    %v636 = vpop.permute.xlu0 %635
    %637 = vrot.lane.b32.xlu0 %v486, 8
    %v638 = vpop.permute.xlu0 %637
    %639 = vrot.lane.b32.xlu0 %v487, 8
    %v640 = vpop.permute.xlu0 %639
    %641 = vrot.lane.b32.xlu0 %v488, 8
    %v642 = vpop.permute.xlu0 %641
    %643 = vrot.lane.b32.xlu0 %v489, 8
    %v644 = vpop.permute.xlu0 %643
    %645 = vrot.lane.b32.xlu0 %v490, 8
    %v646 = vpop.permute.xlu0 %645
    %647 = vrot.lane.b32.xlu0 %v491, 8
    %v648 = vpop.permute.xlu0 %647
    %649 = vrot.lane.b32.xlu0 %v492, 8
    %v650 = vpop.permute.xlu0 %649
    %651 = vrot.lane.b32.xlu0 %v493, 8
    %v652 = vpop.permute.xlu0 %651
    %653 = vrot.lane.b32.xlu0 %v494, 8
    %v654 = vpop.permute.xlu0 %653
    %655 = vrot.lane.b32.xlu0 %v495, 8
    %v656 = vpop.permute.xlu0 %655
    %689 = vrot.lane.b32.xlu0 %v496, 16
    %v690 = vpop.permute.xlu0 %689
    %691 = vrot.lane.b32.xlu0 %v497, 16
    %v692 = vpop.permute.xlu0 %691
    %693 = vrot.lane.b32.xlu0 %v498, 16
    %v694 = vpop.permute.xlu0 %693
    %695 = vrot.lane.b32.xlu0 %v499, 16
    %v696 = vpop.permute.xlu0 %695
    %697 = vrot.lane.b32.xlu0 %v500, 16
    %v698 = vpop.permute.xlu0 %697
    %699 = vrot.lane.b32.xlu0 %v501, 16
    %v700 = vpop.permute.xlu0 %699
    %701 = vrot.lane.b32.xlu0 %v502, 16
    %v702 = vpop.permute.xlu0 %701
    %703 = vrot.lane.b32.xlu0 %v503, 16
    %v704 = vpop.permute.xlu0 %703
    %705 = vrot.lane.b32.xlu0 %v504, 16
    %v706 = vpop.permute.xlu0 %705
    %707 = vrot.lane.b32.xlu0 %v505, 16
    %v708 = vpop.permute.xlu0 %707
    %709 = vrot.lane.b32.xlu0 %v506, 16
    %v710 = vpop.permute.xlu0 %709
    %711 = vrot.lane.b32.xlu0 %v507, 16
    %v712 = vpop.permute.xlu0 %711
    %713 = vrot.lane.b32.xlu0 %v508, 16
    %v714 = vpop.permute.xlu0 %713
    %715 = vrot.lane.b32.xlu0 %v509, 16
    %v716 = vpop.permute.xlu0 %715
    %717 = vrot.lane.b32.xlu0 %v510, 16
    %v718 = vpop.permute.xlu0 %717
    %719 = vrot.lane.b32.xlu0 %v511, 16
    %v720 = vpop.permute.xlu0 %719
    %753 = vrot.lane.b32.xlu0 %v512, 24
    %v754 = vpop.permute.xlu0 %753
    %755 = vrot.lane.b32.xlu0 %v513, 24
    %v756 = vpop.permute.xlu0 %755
    %757 = vrot.lane.b32.xlu0 %v514, 24
    %v758 = vpop.permute.xlu0 %757
    %759 = vrot.lane.b32.xlu0 %v515, 24
    %v760 = vpop.permute.xlu0 %759
    %761 = vrot.lane.b32.xlu0 %v516, 24
    %v762 = vpop.permute.xlu0 %761
    %763 = vrot.lane.b32.xlu0 %v517, 24
    %v764 = vpop.permute.xlu0 %763
    %765 = vrot.lane.b32.xlu0 %v518, 24
    %v766 = vpop.permute.xlu0 %765
    %767 = vrot.lane.b32.xlu0 %v519, 24
    %v768 = vpop.permute.xlu0 %767
    %769 = vrot.lane.b32.xlu0 %v520, 24
    %v770 = vpop.permute.xlu0 %769
    %771 = vrot.lane.b32.xlu0 %v521, 24
    %v772 = vpop.permute.xlu0 %771
    %773 = vrot.lane.b32.xlu0 %v522, 24
    %v774 = vpop.permute.xlu0 %773
    %775 = vrot.lane.b32.xlu0 %v523, 24
    %v776 = vpop.permute.xlu0 %775
    %777 = vrot.lane.b32.xlu0 %v524, 24
    %v778 = vpop.permute.xlu0 %777
    %779 = vrot.lane.b32.xlu0 %v525, 24
    %v780 = vpop.permute.xlu0 %779
    %781 = vrot.lane.b32.xlu0 %v526, 24
    %v782 = vpop.permute.xlu0 %781
    %783 = vrot.lane.b32.xlu0 %v527, 24
    %v784 = vpop.permute.xlu0 %783
    %817 = vrot.lane.b32.xlu0 %v528, 32
    %v818 = vpop.permute.xlu0 %817
    %819 = vrot.lane.b32.xlu0 %v529, 32
    %v820 = vpop.permute.xlu0 %819
    %821 = vrot.lane.b32.xlu0 %v530, 32
    %v822 = vpop.permute.xlu0 %821
    %823 = vrot.lane.b32.xlu0 %v531, 32
    %v824 = vpop.permute.xlu0 %823
    %825 = vrot.lane.b32.xlu0 %v532, 32
    %v826 = vpop.permute.xlu0 %825
    %827 = vrot.lane.b32.xlu0 %v533, 32
    %v828 = vpop.permute.xlu0 %827
    %829 = vrot.lane.b32.xlu0 %v534, 32
    %v830 = vpop.permute.xlu0 %829
    %831 = vrot.lane.b32.xlu0 %v535, 32
    %v832 = vpop.permute.xlu0 %831
    %833 = vrot.lane.b32.xlu0 %v536, 32
    %v834 = vpop.permute.xlu0 %833
    %835 = vrot.lane.b32.xlu0 %v537, 32
    %v836 = vpop.permute.xlu0 %835
    %837 = vrot.lane.b32.xlu0 %v538, 32
    %v838 = vpop.permute.xlu0 %837
    %839 = vrot.lane.b32.xlu0 %v539, 32
    %v840 = vpop.permute.xlu0 %839
    %841 = vrot.lane.b32.xlu0 %v540, 32
    %v842 = vpop.permute.xlu0 %841
    %843 = vrot.lane.b32.xlu0 %v541, 32
    %v844 = vpop.permute.xlu0 %843
    %845 = vrot.lane.b32.xlu0 %v542, 32
    %v846 = vpop.permute.xlu0 %845
    %847 = vrot.lane.b32.xlu0 %v543, 32
    %v848 = vpop.permute.xlu0 %847
    %881 = vrot.lane.b32.xlu0 %v544, 40
    %v882 = vpop.permute.xlu0 %881
    %883 = vrot.lane.b32.xlu0 %v545, 40
    %v884 = vpop.permute.xlu0 %883
    %885 = vrot.lane.b32.xlu0 %v546, 40
    %v886 = vpop.permute.xlu0 %885
    %887 = vrot.lane.b32.xlu0 %v547, 40
    %v888 = vpop.permute.xlu0 %887
    %889 = vrot.lane.b32.xlu0 %v548, 40
    %v890 = vpop.permute.xlu0 %889
    %891 = vrot.lane.b32.xlu0 %v549, 40
    %v892 = vpop.permute.xlu0 %891
    %893 = vrot.lane.b32.xlu0 %v550, 40
    %v894 = vpop.permute.xlu0 %893
    %895 = vrot.lane.b32.xlu0 %v551, 40
    %v896 = vpop.permute.xlu0 %895
    %897 = vrot.lane.b32.xlu0 %v552, 40
    %v898 = vpop.permute.xlu0 %897
    %899 = vrot.lane.b32.xlu0 %v553, 40
    %v900 = vpop.permute.xlu0 %899
    %901 = vrot.lane.b32.xlu0 %v554, 40
    %v902 = vpop.permute.xlu0 %901
    %903 = vrot.lane.b32.xlu0 %v555, 40
    %v904 = vpop.permute.xlu0 %903
    %905 = vrot.lane.b32.xlu0 %v556, 40
    %v906 = vpop.permute.xlu0 %905
    %907 = vrot.lane.b32.xlu0 %v557, 40
    %v908 = vpop.permute.xlu0 %907
    %909 = vrot.lane.b32.xlu0 %v558, 40
    %v910 = vpop.permute.xlu0 %909
    %911 = vrot.lane.b32.xlu0 %v559, 40
    %v912 = vpop.permute.xlu0 %911
    %945 = vrot.lane.b32.xlu0 %v561, 48
    %v946 = vpop.permute.xlu0 %945
    %947 = vrot.lane.b32.xlu0 %v562, 48
    %v948 = vpop.permute.xlu0 %947
    %949 = vrot.lane.b32.xlu0 %v563, 48
    %v950 = vpop.permute.xlu0 %949
    %951 = vrot.lane.b32.xlu0 %v564, 48
    %v952 = vpop.permute.xlu0 %951
    %953 = vrot.lane.b32.xlu0 %v565, 48
    %v954 = vpop.permute.xlu0 %953
    %955 = vrot.lane.b32.xlu0 %v566, 48
    %v956 = vpop.permute.xlu0 %955
    %957 = vrot.lane.b32.xlu0 %v567, 48
    %v958 = vpop.permute.xlu0 %957
    %959 = vrot.lane.b32.xlu0 %v568, 48
    %v960 = vpop.permute.xlu0 %959
    %961 = vrot.lane.b32.xlu0 %v569, 48
    %v962 = vpop.permute.xlu0 %961
    %963 = vrot.lane.b32.xlu0 %v570, 48
    %v964 = vpop.permute.xlu0 %963
    %965 = vrot.lane.b32.xlu0 %v571, 48
    %v966 = vpop.permute.xlu0 %965
    %967 = vrot.lane.b32.xlu0 %v572, 48
    %v968 = vpop.permute.xlu0 %967
    %969 = vrot.lane.b32.xlu0 %v573, 48
    %v970 = vpop.permute.xlu0 %969
    %971 = vrot.lane.b32.xlu0 %v574, 48
    %v972 = vpop.permute.xlu0 %971
    %973 = vrot.lane.b32.xlu0 %v575, 48
    %v974 = vpop.permute.xlu0 %973
    %975 = vrot.lane.b32.xlu0 %v576, 48
    %v976 = vpop.permute.xlu0 %975
    %1009 = vrot.lane.b32.xlu0 %v577, 56
    %v1010 = vpop.permute.xlu0 %1009
    %1011 = vrot.lane.b32.xlu0 %v578, 56
    %v1012 = vpop.permute.xlu0 %1011
    %1013 = vrot.lane.b32.xlu0 %v579, 56
    %v1014 = vpop.permute.xlu0 %1013
    %1015 = vrot.lane.b32.xlu0 %v580, 56
    %v1016 = vpop.permute.xlu0 %1015
    %1017 = vrot.lane.b32.xlu0 %v581, 56
    %v1018 = vpop.permute.xlu0 %1017
    %1019 = vrot.lane.b32.xlu0 %v582, 56
    %v1020 = vpop.permute.xlu0 %1019
    %1021 = vrot.lane.b32.xlu0 %v583, 56
    %v1022 = vpop.permute.xlu0 %1021
    %1023 = vrot.lane.b32.xlu0 %v584, 56
    %v1024 = vpop.permute.xlu0 %1023
    %1025 = vrot.lane.b32.xlu0 %v585, 56
    %v1026 = vpop.permute.xlu0 %1025
    %1027 = vrot.lane.b32.xlu0 %v586, 56
    %v1028 = vpop.permute.xlu0 %1027
    %1029 = vrot.lane.b32.xlu0 %v587, 56
    %v1030 = vpop.permute.xlu0 %1029
    %1031 = vrot.lane.b32.xlu0 %v588, 56
    %v1032 = vpop.permute.xlu0 %1031
    %1033 = vrot.lane.b32.xlu0 %v589, 56
    %v1034 = vpop.permute.xlu0 %1033
    %1035 = vrot.lane.b32.xlu0 %v590, 56
    %v1036 = vpop.permute.xlu0 %1035
    %1037 = vrot.lane.b32.xlu0 %v591, 56
    %v1038 = vpop.permute.xlu0 %1037
    %1039 = vrot.lane.b32.xlu0 %v592, 56
    %v1040 = vpop.permute.xlu0 %1039
    %1073 = vrot.lane.b32.xlu0 %v593, 64
    %v1074 = vpop.permute.xlu0 %1073
    %1075 = vrot.lane.b32.xlu0 %v594, 64
    %v1076 = vpop.permute.xlu0 %1075
    %1077 = vrot.lane.b32.xlu0 %v595, 64
    %v1078 = vpop.permute.xlu0 %1077
    %1079 = vrot.lane.b32.xlu0 %v596, 64
    %v1080 = vpop.permute.xlu0 %1079
    %1081 = vrot.lane.b32.xlu0 %v597, 64
    %v1082 = vpop.permute.xlu0 %1081
    %1083 = vrot.lane.b32.xlu0 %v598, 64
    %v1084 = vpop.permute.xlu0 %1083
    %1085 = vrot.lane.b32.xlu0 %v599, 64
    %v1086 = vpop.permute.xlu0 %1085
    %1087 = vrot.lane.b32.xlu0 %v600, 64
    %v1088 = vpop.permute.xlu0 %1087
    %1089 = vrot.lane.b32.xlu0 %v601, 64
    %v1090 = vpop.permute.xlu0 %1089
    %1091 = vrot.lane.b32.xlu0 %v602, 64
    %v1092 = vpop.permute.xlu0 %1091
    %1093 = vrot.lane.b32.xlu0 %v603, 64
    %v1094 = vpop.permute.xlu0 %1093
    %1095 = vrot.lane.b32.xlu0 %v604, 64
    %v1096 = vpop.permute.xlu0 %1095
    %1097 = vrot.lane.b32.xlu0 %v605, 64
    %v1098 = vpop.permute.xlu0 %1097
    %1099 = vrot.lane.b32.xlu0 %v606, 64
    %v1100 = vpop.permute.xlu0 %1099
    %1101 = vrot.lane.b32.xlu0 %v607, 64
    %v1102 = vpop.permute.xlu0 %1101
    %1103 = vrot.lane.b32.xlu0 %v608, 64
    %v1104 = vpop.permute.xlu0 %1103
    %v1121 = vsel %vm447, %v464, %v626
    %v1122 = vsel %vm447, %v465, %v628
    %v1123 = vsel %vm447, %v466, %v630
    %v1124 = vsel %vm447, %v467, %v632
    %v1125 = vsel %vm447, %v468, %v634
    %v1126 = vsel %vm447, %v469, %v636
    %v1127 = vsel %vm447, %v470, %v638
    %v1128 = vsel %vm447, %v471, %v640
    %v1129 = vsel %vm447, %v472, %v642
    %v1130 = vsel %vm447, %v473, %v644
    %v1131 = vsel %vm447, %v474, %v646
    %v1132 = vsel %vm447, %v475, %v648
    %v1133 = vsel %vm447, %v476, %v650
    %v1134 = vsel %vm447, %v477, %v652
    %v1135 = vsel %vm447, %v478, %v654
    %v1136 = vsel %vm447, %v479, %v656
    %vm1137 = vcmask 130048
    %v1138 = vsel %vm1137, %v1121, %v690
    %v1139 = vsel %vm1137, %v1122, %v692
    %v1140 = vsel %vm1137, %v1123, %v694
    %v1141 = vsel %vm1137, %v1124, %v696
    %v1142 = vsel %vm1137, %v1125, %v698
    %v1143 = vsel %vm1137, %v1126, %v700
    %v1144 = vsel %vm1137, %v1127, %v702
    %v1145 = vsel %vm1137, %v1128, %v704
    %v1146 = vsel %vm1137, %v1129, %v706
    %v1147 = vsel %vm1137, %v1130, %v708
    %v1148 = vsel %vm1137, %v1131, %v710
    %v1149 = vsel %vm1137, %v1132, %v712
    %v1150 = vsel %vm1137, %v1133, %v714
    %v1151 = vsel %vm1137, %v1134, %v716
    %v1152 = vsel %vm1137, %v1135, %v718
    %v1153 = vsel %vm1137, %v1136, %v720
    %vm1154 = vcmask 195584
    %v1155 = vsel %vm1154, %v1138, %v754
    %v1156 = vsel %vm1154, %v1139, %v756
    %v1157 = vsel %vm1154, %v1140, %v758
    %v1158 = vsel %vm1154, %v1141, %v760
    %v1159 = vsel %vm1154, %v1142, %v762
    %v1160 = vsel %vm1154, %v1143, %v764
    %v1161 = vsel %vm1154, %v1144, %v766
    %v1162 = vsel %vm1154, %v1145, %v768
    %v1163 = vsel %vm1154, %v1146, %v770
    %v1164 = vsel %vm1154, %v1147, %v772
    %v1165 = vsel %vm1154, %v1148, %v774
    %v1166 = vsel %vm1154, %v1149, %v776
    %v1167 = vsel %vm1154, %v1150, %v778
    %v1168 = vsel %vm1154, %v1151, %v780
    %v1169 = vsel %vm1154, %v1152, %v782
    %v1170 = vsel %vm1154, %v1153, %v784
    %vm1171 = vcmask 261120
    %v1172 = vsel %vm1171, %v1155, %v818
    %v1173 = vsel %vm1171, %v1156, %v820
    %v1174 = vsel %vm1171, %v1157, %v822
    %v1175 = vsel %vm1171, %v1158, %v824
    %v1176 = vsel %vm1171, %v1159, %v826
    %v1177 = vsel %vm1171, %v1160, %v828
    %v1178 = vsel %vm1171, %v1161, %v830
    %v1179 = vsel %vm1171, %v1162, %v832
    %v1180 = vsel %vm1171, %v1163, %v834
    %v1181 = vsel %vm1171, %v1164, %v836
    %v1182 = vsel %vm1171, %v1165, %v838
    %v1183 = vsel %vm1171, %v1166, %v840
    %v1184 = vsel %vm1171, %v1167, %v842
    %v1185 = vsel %vm1171, %v1168, %v844
    %v1186 = vsel %vm1171, %v1169, %v846
    %v1187 = vsel %vm1171, %v1170, %v848
    %vm1188 = vcmask 326656
    %v1189 = vsel %vm1188, %v1172, %v882
    %v1190 = vsel %vm1188, %v1173, %v884
    %v1191 = vsel %vm1188, %v1174, %v886
    %v1192 = vsel %vm1188, %v1175, %v888
    %v1193 = vsel %vm1188, %v1176, %v890
    %v1194 = vsel %vm1188, %v1177, %v892
    %v1195 = vsel %vm1188, %v1178, %v894
    %v1196 = vsel %vm1188, %v1179, %v896
    %v1197 = vsel %vm1188, %v1180, %v898
    %v1198 = vsel %vm1188, %v1181, %v900
    %v1199 = vsel %vm1188, %v1182, %v902
    %v1200 = vsel %vm1188, %v1183, %v904
    %v1201 = vsel %vm1188, %v1184, %v906
    %v1202 = vsel %vm1188, %v1185, %v908
    %v1203 = vsel %vm1188, %v1186, %v910
    %v1204 = vsel %vm1188, %v1187, %v912
    %vm1205 = vcmask 392192
    %v1206 = vsel %vm1205, %v1189, %v946
    %v1207 = vsel %vm1205, %v1190, %v948
    %v1208 = vsel %vm1205, %v1191, %v950
    %v1209 = vsel %vm1205, %v1192, %v952
    %v1210 = vsel %vm1205, %v1193, %v954
    %v1211 = vsel %vm1205, %v1194, %v956
    %v1212 = vsel %vm1205, %v1195, %v958
    %v1213 = vsel %vm1205, %v1196, %v960
    %v1214 = vsel %vm1205, %v1197, %v962
    %v1215 = vsel %vm1205, %v1198, %v964
    %v1216 = vsel %vm1205, %v1199, %v966
    %v1217 = vsel %vm1205, %v1200, %v968
    %v1218 = vsel %vm1205, %v1201, %v970
    %v1219 = vsel %vm1205, %v1202, %v972
    %v1220 = vsel %vm1205, %v1203, %v974
    %v1221 = vsel %vm1205, %v1204, %v976
    %vm1222 = vcmask 457728
    %v1223 = vsel %vm1222, %v1206, %v1010
    %v1224 = vsel %vm1222, %v1207, %v1012
    %v1225 = vsel %vm1222, %v1208, %v1014
    %v1226 = vsel %vm1222, %v1209, %v1016
    %v1227 = vsel %vm1222, %v1210, %v1018
    %v1228 = vsel %vm1222, %v1211, %v1020
    %v1229 = vsel %vm1222, %v1212, %v1022
    %v1230 = vsel %vm1222, %v1213, %v1024
    %v1231 = vsel %vm1222, %v1214, %v1026
    %v1232 = vsel %vm1222, %v1215, %v1028
    %v1233 = vsel %vm1222, %v1216, %v1030
    %v1234 = vsel %vm1222, %v1217, %v1032
    %v1235 = vsel %vm1222, %v1218, %v1034
    %v1236 = vsel %vm1222, %v1219, %v1036
    %v1237 = vsel %vm1222, %v1220, %v1038
    %v1238 = vsel %vm1222, %v1221, %v1040
    %vm1239 = vcmask 523264
    %v1240 = vsel %vm1239, %v1223, %v1074
    %v1241 = vsel %vm1239, %v1224, %v1076
    %v1242 = vsel %vm1239, %v1225, %v1078
    %v1243 = vsel %vm1239, %v1226, %v1080
    %v1244 = vsel %vm1239, %v1227, %v1082
    %v1245 = vsel %vm1239, %v1228, %v1084
    %v1246 = vsel %vm1239, %v1229, %v1086
    %v1247 = vsel %vm1239, %v1230, %v1088
    %v1248 = vsel %vm1239, %v1231, %v1090
    %v1249 = vsel %vm1239, %v1232, %v1092
    %v1250 = vsel %vm1239, %v1233, %v1094
    %v1251 = vsel %vm1239, %v1234, %v1096
    %v1252 = vsel %vm1239, %v1235, %v1098
    %v1253 = vsel %vm1239, %v1236, %v1100
    %v1254 = vsel %vm1239, %v1237, %v1102
    %v1255 = vsel %vm1239, %v1238, %v1104
    %v1256 = vpack.c.bf16 %v1241, %v1240
    %v1257 = vpack.c.bf16 %v1243, %v1242
    %v1258 = vpack.c.bf16 %v1245, %v1244
    %v1259 = vpack.c.bf16 %v1247, %v1246
    %v1260 = vpack.c.bf16 %v1249, %v1248
    %v1261 = vpack.c.bf16 %v1251, %v1250
    %v1262 = vpack.c.bf16 %v1253, %v1252
    %v1263 = vpack.c.bf16 %v1255, %v1254
    %v1264 = vld [vmem:[%s1] sm:$0xf]
    %v1265 = vld [vmem:[%s1 + $0x4] sm:$0xf]
    %v1266 = vld [vmem:[%s1 + $0x8] sm:$0xf]
    %v1267 = vld [vmem:[%s1 + $0xc] sm:$0xf]
    %v1268 = vld [vmem:[%s1 + $0x10] sm:$0xf]
    %v1269 = vld [vmem:[%s1 + $0x14] sm:$0xf]
    %v1270 = vld [vmem:[%s1 + $0x18] sm:$0xf]
    %v1271 = vld [vmem:[%s1 + $0x1c] sm:$0xf]
    %v1272 = vld [vmem:[%s1 + $0x20] sm:$0xf]
    %v1282 = vunpack.c.l.b16 %v1264
    %v1283 = vunpack.c.l.b16 %v1265
    %v1284 = vunpack.c.l.b16 %v1266
    %v1285 = vunpack.c.l.b16 %v1267
    %v1286 = vunpack.c.l.b16 %v1268
    %v1287 = vunpack.c.l.b16 %v1269
    %v1288 = vunpack.c.l.b16 %v1270
    %v1289 = vunpack.c.l.b16 %v1271
    %v1290 = vunpack.c.l.b16 %v1272
    %v1291 = vpack.c.b16 %v1283, %v1282
    %v1292 = vpack.c.b16 %v1285, %v1284
    %v1293 = vpack.c.b16 %v1287, %v1286
    %v1294 = vpack.c.b16 %v1289, %v1288
    %v1295 = vpack.c.b16 %v1290, %v1290
    %vm1300 = vcmask 588800
    %v1302 = vsel %vm1300, %v1256, 0
    %v1305 = vsel %vm1300, %v1257, 0
    %v1308 = vsel %vm1300, %v1258, 0
    %v1311 = vsel %vm1300, %v1259, 0
    %v1314 = vsel %vm1300, %v1260, 0
    %v1317 = vsel %vm1300, %v1261, 0
    %v1320 = vsel %vm1300, %v1262, 0
    %v1323 = vsel %vm1300, %v1263, 0
    %vm1325 = vcmask 1043456
    %v1327 = vsel %vm1325, %v1295, 0
    %1329 = vmatprep.subr.bf16.mxu0 0
    %1330 = vmatpush1.bf16.msra.mxu0 %v1291
    %1331 = vmatprep.subr.bf16.mxu0 0
    %1332 = vmatpush1.bf16.msra.mxu0 %v1292
    %1333 = vmatprep.subr.bf16.mxu0 0
    %1334 = vmatpush1.bf16.msra.mxu0 %v1293
    %1335 = vmatprep.subr.bf16.mxu0 0
    %1336 = vmatpush1.bf16.msra.mxu0 %v1294
    %1337 = vmatprep.subr.bf16.mxu0 0
    %1338 = vmatpush1.bf16.msra.mxu0 %v1327
    %1339 = vmatprep.subr.bf16.mxu0 0
    %1340 = vmatpush1.bf16.msra.mxu0 0
    %1341 = vmatprep.subr.bf16.mxu0 0
    %1342 = vmatpush1.bf16.msra.mxu0 0
    %1343 = vmatprep.subr.bf16.mxu0 0
    %1344 = vmatpush1.bf16.msra.mxu0 0
    %1345 = vmatprep.subr.bf16.mxu0 0
    %1346 = vmatpush1.bf16.msra.mxu0 0
    %1347 = vmatprep.subr.bf16.mxu0 0
    %1348 = vmatpush1.bf16.msra.mxu0 0
    %1349 = vmatprep.subr.bf16.mxu0 0
    %1350 = vmatpush1.bf16.msra.mxu0 0
    %1351 = vmatprep.subr.bf16.mxu0 0
    %1352 = vmatpush1.bf16.msra.mxu0 0
    %1353 = vmatprep.subr.bf16.mxu0 0
    %1354 = vmatpush1.bf16.msra.mxu0 0
    %1355 = vmatprep.subr.bf16.mxu0 0
    %1356 = vmatpush1.bf16.msra.mxu0 0
    %1357 = vmatprep.subr.bf16.mxu0 0
    %1358 = vmatpush1.bf16.msra.mxu0 0
    %1359 = vmatprep.subr.bf16.mxu0 0
    %1360 = vmatpush1.bf16.msra.mxu0 0
    %1361 = vmatprep.mubr.bf16.mxu0 0
    %1362 = vmatmul.mubr.bf16.gmra.mrb[0].mxu0 %v1302
    %v1363 = vpop.f32.mrb[0].mxu0
    %v1364 = vadd.f32 0.0, %v1363
    %v1365 = vpop.f32.mrb[0].mxu0
    %v1366 = vpop.f32.mrb[0].mxu0
    %v1367 = vadd.f32 0.0, %v1366
    %v1368 = vpop.f32.mrb[0].mxu0
    %1369 = vmatprep.mubr.bf16.mxu0 0
    %1370 = vmatmul.mubr.bf16.gmra.mrb[0].mxu0 %v1305
    %v1371 = vpop.f32.mrb[0].mxu0
    %v1372 = vadd.f32 0.0, %v1371
    %v1373 = vpop.f32.mrb[0].mxu0
    %v1374 = vpop.f32.mrb[0].mxu0
    %v1375 = vadd.f32 0.0, %v1374
    %v1376 = vpop.f32.mrb[0].mxu0
    %1377 = vmatprep.mubr.bf16.mxu0 0
    %1378 = vmatmul.mubr.bf16.gmra.mrb[0].mxu0 %v1308
    %v1379 = vpop.f32.mrb[0].mxu0
    %v1380 = vadd.f32 0.0, %v1379
    %v1381 = vpop.f32.mrb[0].mxu0
    %v1382 = vpop.f32.mrb[0].mxu0
    %v1383 = vadd.f32 0.0, %v1382
    %v1384 = vpop.f32.mrb[0].mxu0
    %1385 = vmatprep.mubr.bf16.mxu0 0
    %1386 = vmatmul.mubr.bf16.gmra.mrb[0].mxu0 %v1311
    %v1387 = vpop.f32.mrb[0].mxu0
    %v1388 = vadd.f32 0.0, %v1387
    %v1389 = vpop.f32.mrb[0].mxu0
    %v1390 = vpop.f32.mrb[0].mxu0
    %v1391 = vadd.f32 0.0, %v1390
    %v1392 = vpop.f32.mrb[0].mxu0
    %1393 = vmatprep.mubr.bf16.mxu0 0
    %1394 = vmatmul.mubr.bf16.gmra.mrb[0].mxu0 %v1314
    %v1395 = vpop.f32.mrb[0].mxu0
    %v1396 = vadd.f32 0.0, %v1395
    %v1397 = vpop.f32.mrb[0].mxu0
    %v1398 = vpop.f32.mrb[0].mxu0
    %v1399 = vadd.f32 0.0, %v1398
    %v1400 = vpop.f32.mrb[0].mxu0
    %1401 = vmatprep.mubr.bf16.mxu0 0
    %1402 = vmatmul.mubr.bf16.gmra.mrb[0].mxu0 %v1317
    %v1403 = vpop.f32.mrb[0].mxu0
    %v1404 = vadd.f32 0.0, %v1403
    %v1405 = vpop.f32.mrb[0].mxu0
    %v1406 = vpop.f32.mrb[0].mxu0
    %v1407 = vadd.f32 0.0, %v1406
    %v1408 = vpop.f32.mrb[0].mxu0
    %1409 = vmatprep.mubr.bf16.mxu0 0
    %1410 = vmatmul.mubr.bf16.gmra.mrb[0].mxu0 %v1320
    %v1411 = vpop.f32.mrb[0].mxu0
    %v1412 = vadd.f32 0.0, %v1411
    %v1413 = vpop.f32.mrb[0].mxu0
    %v1414 = vpop.f32.mrb[0].mxu0
    %v1415 = vadd.f32 0.0, %v1414
    %v1416 = vpop.f32.mrb[0].mxu0
    %1417 = vmatprep.mubr.bf16.mxu0 0
    %1418 = vmatmul.mubr.bf16.gmra.mrb[0].mxu0 %v1323
    %v1419 = vpop.f32.mrb[0].mxu0
    %v1420 = vadd.f32 0.0, %v1419
    %v1421 = vpop.f32.mrb[0].mxu0
    %v1422 = vpop.f32.mrb[0].mxu0
    %v1423 = vadd.f32 0.0, %v1422
    %v1424 = vpop.f32.mrb[0].mxu0
    %1425 = vdwg.mxu0
    %v1426 = vld [vmem:[%s2] sm:$0x1]
    %v1428 = vlaneseq
    %v1429 = vshrl.u32 %v1428, 7
    %v1430 = vsub.s32 0, %v1429
    %v1431 = vrot.slane %v1426, %v1430
    %v1433 = vmul.f32 %v1364, %v1431
    %v1434 = vmul.f32 %v1367, %v1431
    %v1435 = vmul.f32 %v1372, %v1431
    %v1436 = vmul.f32 %v1375, %v1431
    %v1437 = vmul.f32 %v1380, %v1431
    %v1438 = vmul.f32 %v1383, %v1431
    %v1439 = vmul.f32 %v1388, %v1431
    %v1440 = vmul.f32 %v1391, %v1431
    %v1441 = vmul.f32 %v1396, %v1431
    %v1442 = vmul.f32 %v1399, %v1431
    %v1443 = vmul.f32 %v1404, %v1431
    %v1444 = vmul.f32 %v1407, %v1431
    %v1445 = vmul.f32 %v1412, %v1431
    %v1446 = vmul.f32 %v1415, %v1431
    %v1447 = vmul.f32 %v1420, %v1431
    %v1448 = vmul.f32 %v1423, %v1431
    %v1449 = vld [vmem:[%s3] sm:$0x1]
    %v1451 = vlaneseq
    %v1452 = vshrl.u32 %v1451, 7
    %v1453 = vsub.s32 0, %v1452
    %v1454 = vrot.slane %v1449, %v1453
    %v1456 = vadd.f32 %v1433, %v1454
    %v1457 = vadd.f32 %v1434, %v1454
    %v1458 = vadd.f32 %v1435, %v1454
    %v1459 = vadd.f32 %v1436, %v1454
    %v1460 = vadd.f32 %v1437, %v1454
    %v1461 = vadd.f32 %v1438, %v1454
    %v1462 = vadd.f32 %v1439, %v1454
    %v1463 = vadd.f32 %v1440, %v1454
    %v1464 = vadd.f32 %v1441, %v1454
    %v1465 = vadd.f32 %v1442, %v1454
    %v1466 = vadd.f32 %v1443, %v1454
    %v1467 = vadd.f32 %v1444, %v1454
    %v1468 = vadd.f32 %v1445, %v1454
    %v1469 = vadd.f32 %v1446, %v1454
    %v1470 = vadd.f32 %v1447, %v1454
    %v1471 = vadd.f32 %v1448, %v1454
    %vm1472 = vcmp.gt.f32.partialorder %v1456, 0.0
    %vm1473 = vcmp.gt.f32.partialorder %v1457, 0.0
    %vm1474 = vcmp.gt.f32.partialorder %v1458, 0.0
    %vm1475 = vcmp.gt.f32.partialorder %v1459, 0.0
    %vm1476 = vcmp.gt.f32.partialorder %v1460, 0.0
    %vm1477 = vcmp.gt.f32.partialorder %v1461, 0.0
    %vm1478 = vcmp.gt.f32.partialorder %v1462, 0.0
    %vm1479 = vcmp.gt.f32.partialorder %v1463, 0.0
    %vm1480 = vcmp.gt.f32.partialorder %v1464, 0.0
    %vm1481 = vcmp.gt.f32.partialorder %v1465, 0.0
    %vm1482 = vcmp.gt.f32.partialorder %v1466, 0.0
    %vm1483 = vcmp.gt.f32.partialorder %v1467, 0.0
    %vm1484 = vcmp.gt.f32.partialorder %v1468, 0.0
    %vm1485 = vcmp.gt.f32.partialorder %v1469, 0.0
    %vm1486 = vcmp.gt.f32.partialorder %v1470, 0.0
    %vm1487 = vcmp.gt.f32.partialorder %v1471, 0.0
    %v1488 = vmul.f32 %v1456, 0.01
    %v1489 = vmul.f32 %v1457, 0.01
    %v1490 = vmul.f32 %v1458, 0.01
    %v1491 = vmul.f32 %v1459, 0.01
    %v1492 = vmul.f32 %v1460, 0.01
    %v1493 = vmul.f32 %v1461, 0.01
    %v1494 = vmul.f32 %v1462, 0.01
    %v1495 = vmul.f32 %v1463, 0.01
    %v1496 = vmul.f32 %v1464, 0.01
    %v1497 = vmul.f32 %v1465, 0.01
    %v1498 = vmul.f32 %v1466, 0.01
    %v1499 = vmul.f32 %v1467, 0.01
    %v1500 = vmul.f32 %v1468, 0.01
    %v1501 = vmul.f32 %v1469, 0.01
    %v1502 = vmul.f32 %v1470, 0.01
    %v1503 = vmul.f32 %v1471, 0.01
    %v1504 = vsel %vm1472, %v1456, %v1488
    %v1505 = vsel %vm1473, %v1457, %v1489
    %v1506 = vsel %vm1474, %v1458, %v1490
    %v1507 = vsel %vm1475, %v1459, %v1491
    %v1508 = vsel %vm1476, %v1460, %v1492
    %v1509 = vsel %vm1477, %v1461, %v1493
    %v1510 = vsel %vm1478, %v1462, %v1494
    %v1511 = vsel %vm1479, %v1463, %v1495
    %v1512 = vsel %vm1480, %v1464, %v1496
    %v1513 = vsel %vm1481, %v1465, %v1497
    %v1514 = vsel %vm1482, %v1466, %v1498
    %v1515 = vsel %vm1483, %v1467, %v1499
    %v1516 = vsel %vm1484, %v1468, %v1500
    %v1517 = vsel %vm1485, %v1469, %v1501
    %v1518 = vsel %vm1486, %v1470, %v1502
    %v1519 = vsel %vm1487, %v1471, %v1503
    %s1520 = scalar_lea.vmem [#allocation3], 16
    %1521 = vst.msk [vmem:[%s1520 + $0x1] sm:$0xff] %vm447, %v1504
    %1522 = vst.msk [vmem:[%s1520 + $0x11] sm:$0xff] %vm447, %v1505
    %1523 = vst.msk [vmem:[%s1520 + $0x21] sm:$0xff] %vm447, %v1506
    %1524 = vst.msk [vmem:[%s1520 + $0x31] sm:$0xff] %vm447, %v1507
    %1525 = vst.msk [vmem:[%s1520 + $0x41] sm:$0xff] %vm447, %v1508
    %1526 = vst.msk [vmem:[%s1520 + $0x51] sm:$0xff] %vm447, %v1509
    %1527 = vst.msk [vmem:[%s1520 + $0x61] sm:$0xff] %vm447, %v1510
    %1528 = vst.msk [vmem:[%s1520 + $0x71] sm:$0xff] %vm447, %v1511
    %1529 = vst.msk [vmem:[%s1520 + $0xa1] sm:$0xff] %vm447, %v1512
    %1530 = vst.msk [vmem:[%s1520 + $0xb1] sm:$0xff] %vm447, %v1513
    %1531 = vst.msk [vmem:[%s1520 + $0xc1] sm:$0xff] %vm447, %v1514
    %1532 = vst.msk [vmem:[%s1520 + $0xd1] sm:$0xff] %vm447, %v1515
    %1533 = vst.msk [vmem:[%s1520 + $0xe1] sm:$0xff] %vm447, %v1516
    %1534 = vst.msk [vmem:[%s1520 + $0xf1] sm:$0xff] %vm447, %v1517
    %1535 = vst.msk [vmem:[%s1520 + $0x101] sm:$0xff] %vm447, %v1518
    %1536 = vst.msk [vmem:[%s1520 + $0x111] sm:$0xff] %vm447, %v1519
    %v1537 = vld [vmem:[#allocation3] sm:$0xff]
    %v1538 = vld [vmem:[#allocation3 + $0x10] sm:$0xff]
    %v1539 = vld [vmem:[#allocation3 + $0x20] sm:$0xff]
    %v1540 = vld [vmem:[#allocation3 + $0x30] sm:$0xff]
    %v1541 = vld [vmem:[#allocation3 + $0x40] sm:$0xff]
    %v1542 = vld [vmem:[#allocation3 + $0x50] sm:$0xff]
    %v1543 = vld [vmem:[#allocation3 + $0x60] sm:$0xff]
    %v1544 = vld [vmem:[#allocation3 + $0x70] sm:$0xff]
    %v1545 = vld [vmem:[#allocation3 + $0xa0] sm:$0xff]
    %v1546 = vld [vmem:[#allocation3 + $0xb0] sm:$0xff]
    %v1547 = vld [vmem:[#allocation3 + $0xc0] sm:$0xff]
    %v1548 = vld [vmem:[#allocation3 + $0xd0] sm:$0xff]
    %v1549 = vld [vmem:[#allocation3 + $0xe0] sm:$0xff]
    %v1550 = vld [vmem:[#allocation3 + $0xf0] sm:$0xff]
    %v1551 = vld [vmem:[#allocation3 + $0x100] sm:$0xff]
    %v1552 = vld [vmem:[#allocation3 + $0x110] sm:$0xff]
    %v1553 = vld [vmem:[#allocation3 + $0x1] sm:$0xff]
    %v1554 = vld [vmem:[#allocation3 + $0x11] sm:$0xff]
    %v1555 = vld [vmem:[#allocation3 + $0x21] sm:$0xff]
    %v1556 = vld [vmem:[#allocation3 + $0x31] sm:$0xff]
    %v1557 = vld [vmem:[#allocation3 + $0x41] sm:$0xff]
    %v1558 = vld [vmem:[#allocation3 + $0x51] sm:$0xff]
    %v1559 = vld [vmem:[#allocation3 + $0x61] sm:$0xff]
    %v1560 = vld [vmem:[#allocation3 + $0x71] sm:$0xff]
    %v1561 = vld [vmem:[#allocation3 + $0xa1] sm:$0xff]
    %v1562 = vld [vmem:[#allocation3 + $0xb1] sm:$0xff]
    %v1563 = vld [vmem:[#allocation3 + $0xc1] sm:$0xff]
    %v1564 = vld [vmem:[#allocation3 + $0xd1] sm:$0xff]
    %v1565 = vld [vmem:[#allocation3 + $0xe1] sm:$0xff]
    %v1566 = vld [vmem:[#allocation3 + $0xf1] sm:$0xff]
    %v1567 = vld [vmem:[#allocation3 + $0x101] sm:$0xff]
    %v1568 = vld [vmem:[#allocation3 + $0x111] sm:$0xff]
    %v1569 = vld [vmem:[#allocation3 + $0x2] sm:$0xff]
    %v1570 = vld [vmem:[#allocation3 + $0x12] sm:$0xff]
    %v1571 = vld [vmem:[#allocation3 + $0x22] sm:$0xff]
    %v1572 = vld [vmem:[#allocation3 + $0x32] sm:$0xff]
    %v1573 = vld [vmem:[#allocation3 + $0x42] sm:$0xff]
    %v1574 = vld [vmem:[#allocation3 + $0x52] sm:$0xff]
    %v1575 = vld [vmem:[#allocation3 + $0x62] sm:$0xff]
    %v1576 = vld [vmem:[#allocation3 + $0x72] sm:$0xff]
    %v1577 = vld [vmem:[#allocation3 + $0xa2] sm:$0xff]
    %v1578 = vld [vmem:[#allocation3 + $0xb2] sm:$0xff]
    %v1579 = vld [vmem:[#allocation3 + $0xc2] sm:$0xff]
    %v1580 = vld [vmem:[#allocation3 + $0xd2] sm:$0xff]
    %v1581 = vld [vmem:[#allocation3 + $0xe2] sm:$0xff]
    %v1582 = vld [vmem:[#allocation3 + $0xf2] sm:$0xff]
    %v1583 = vld [vmem:[#allocation3 + $0x102] sm:$0xff]
    %v1584 = vld [vmem:[#allocation3 + $0x112] sm:$0xff]
    %v1585 = vld [vmem:[%s1520] sm:$0xff]
    %v1586 = vld [vmem:[%s1520 + $0x10] sm:$0xff]
    %v1587 = vld [vmem:[%s1520 + $0x20] sm:$0xff]
    %v1588 = vld [vmem:[%s1520 + $0x30] sm:$0xff]
    %v1589 = vld [vmem:[%s1520 + $0x40] sm:$0xff]
    %v1590 = vld [vmem:[%s1520 + $0x50] sm:$0xff]
    %v1591 = vld [vmem:[%s1520 + $0x60] sm:$0xff]
    %v1592 = vld [vmem:[%s1520 + $0x70] sm:$0xff]
    %v1593 = vld [vmem:[%s1520 + $0xa0] sm:$0xff]
    %v1594 = vld [vmem:[%s1520 + $0xb0] sm:$0xff]
    %v1595 = vld [vmem:[%s1520 + $0xc0] sm:$0xff]
    %v1596 = vld [vmem:[%s1520 + $0xd0] sm:$0xff]
    %v1597 = vld [vmem:[%s1520 + $0xe0] sm:$0xff]
    %v1598 = vld [vmem:[%s1520 + $0xf0] sm:$0xff]
    %v1599 = vld [vmem:[%s1520 + $0x100] sm:$0xff]
    %v1600 = vld [vmem:[%s1520 + $0x110] sm:$0xff]
    %v1601 = vld [vmem:[%s1520 + $0x1] sm:$0xff]
    %v1602 = vld [vmem:[%s1520 + $0x11] sm:$0xff]
    %v1603 = vld [vmem:[%s1520 + $0x21] sm:$0xff]
    %v1604 = vld [vmem:[%s1520 + $0x31] sm:$0xff]
    %v1605 = vld [vmem:[%s1520 + $0x41] sm:$0xff]
    %v1606 = vld [vmem:[%s1520 + $0x51] sm:$0xff]
    %v1607 = vld [vmem:[%s1520 + $0x61] sm:$0xff]
    %v1608 = vld [vmem:[%s1520 + $0x71] sm:$0xff]
    %v1609 = vld [vmem:[%s1520 + $0xa1] sm:$0xff]
    %v1610 = vld [vmem:[%s1520 + $0xb1] sm:$0xff]
    %v1611 = vld [vmem:[%s1520 + $0xc1] sm:$0xff]
    %v1612 = vld [vmem:[%s1520 + $0xd1] sm:$0xff]
    %v1613 = vld [vmem:[%s1520 + $0xe1] sm:$0xff]
    %v1614 = vld [vmem:[%s1520 + $0xf1] sm:$0xff]
    %v1615 = vld [vmem:[%s1520 + $0x101] sm:$0xff]
    %v1616 = vld [vmem:[%s1520 + $0x111] sm:$0xff]
    %v1617 = vld [vmem:[%s1520 + $0x2] sm:$0xff]
    %v1618 = vld [vmem:[%s1520 + $0x12] sm:$0xff]
    %v1619 = vld [vmem:[%s1520 + $0x22] sm:$0xff]
    %v1620 = vld [vmem:[%s1520 + $0x32] sm:$0xff]
    %v1621 = vld [vmem:[%s1520 + $0x42] sm:$0xff]
    %v1622 = vld [vmem:[%s1520 + $0x52] sm:$0xff]
    %v1623 = vld [vmem:[%s1520 + $0x62] sm:$0xff]
    %v1624 = vld [vmem:[%s1520 + $0x72] sm:$0xff]
    %v1625 = vld [vmem:[%s1520 + $0xa2] sm:$0xff]
    %v1626 = vld [vmem:[%s1520 + $0xb2] sm:$0xff]
    %v1627 = vld [vmem:[%s1520 + $0xc2] sm:$0xff]
    %v1628 = vld [vmem:[%s1520 + $0xd2] sm:$0xff]
    %v1629 = vld [vmem:[%s1520 + $0xe2] sm:$0xff]
    %v1630 = vld [vmem:[%s1520 + $0xf2] sm:$0xff]
    %v1631 = vld [vmem:[%s1520 + $0x102] sm:$0xff]
    %v1632 = vld [vmem:[%s1520 + $0x112] sm:$0xff]
    %s1633 = scalar_lea.vmem [#allocation3], 32
    %v1634 = vld [vmem:[%s1633] sm:$0xff]
    %v1635 = vld [vmem:[%s1633 + $0x10] sm:$0xff]
    %v1636 = vld [vmem:[%s1633 + $0x20] sm:$0xff]
    %v1637 = vld [vmem:[%s1633 + $0x30] sm:$0xff]
    %v1638 = vld [vmem:[%s1633 + $0x40] sm:$0xff]
    %v1639 = vld [vmem:[%s1633 + $0x50] sm:$0xff]
    %v1640 = vld [vmem:[%s1633 + $0x60] sm:$0xff]
    %v1641 = vld [vmem:[%s1633 + $0x70] sm:$0xff]
    %v1642 = vld [vmem:[%s1633 + $0xa0] sm:$0xff]
    %v1643 = vld [vmem:[%s1633 + $0xb0] sm:$0xff]
    %v1644 = vld [vmem:[%s1633 + $0xc0] sm:$0xff]
    %v1645 = vld [vmem:[%s1633 + $0xd0] sm:$0xff]
    %v1646 = vld [vmem:[%s1633 + $0xe0] sm:$0xff]
    %v1647 = vld [vmem:[%s1633 + $0xf0] sm:$0xff]
    %v1648 = vld [vmem:[%s1633 + $0x100] sm:$0xff]
    %v1649 = vld [vmem:[%s1633 + $0x110] sm:$0xff]
    %v1650 = vld [vmem:[%s1633 + $0x1] sm:$0xff]
    %v1651 = vld [vmem:[%s1633 + $0x11] sm:$0xff]
    %v1652 = vld [vmem:[%s1633 + $0x21] sm:$0xff]
    %v1653 = vld [vmem:[%s1633 + $0x31] sm:$0xff]
    %v1654 = vld [vmem:[%s1633 + $0x41] sm:$0xff]
    %v1655 = vld [vmem:[%s1633 + $0x51] sm:$0xff]
    %v1656 = vld [vmem:[%s1633 + $0x61] sm:$0xff]
    %v1657 = vld [vmem:[%s1633 + $0x71] sm:$0xff]
    %v1658 = vld [vmem:[%s1633 + $0xa1] sm:$0xff]
    %v1659 = vld [vmem:[%s1633 + $0xb1] sm:$0xff]
    %v1660 = vld [vmem:[%s1633 + $0xc1] sm:$0xff]
    %v1661 = vld [vmem:[%s1633 + $0xd1] sm:$0xff]
    %v1662 = vld [vmem:[%s1633 + $0xe1] sm:$0xff]
    %v1663 = vld [vmem:[%s1633 + $0xf1] sm:$0xff]
    %v1664 = vld [vmem:[%s1633 + $0x101] sm:$0xff]
    %v1665 = vld [vmem:[%s1633 + $0x111] sm:$0xff]
    %v1666 = vld [vmem:[%s1633 + $0x2] sm:$0xff]
    %v1667 = vld [vmem:[%s1633 + $0x12] sm:$0xff]
    %v1668 = vld [vmem:[%s1633 + $0x22] sm:$0xff]
    %v1669 = vld [vmem:[%s1633 + $0x32] sm:$0xff]
    %v1670 = vld [vmem:[%s1633 + $0x42] sm:$0xff]
    %v1671 = vld [vmem:[%s1633 + $0x52] sm:$0xff]
    %v1672 = vld [vmem:[%s1633 + $0x62] sm:$0xff]
    %v1673 = vld [vmem:[%s1633 + $0x72] sm:$0xff]
    %v1674 = vld [vmem:[%s1633 + $0xa2] sm:$0xff]
    %v1675 = vld [vmem:[%s1633 + $0xb2] sm:$0xff]
    %v1676 = vld [vmem:[%s1633 + $0xc2] sm:$0xff]
    %v1677 = vld [vmem:[%s1633 + $0xd2] sm:$0xff]
    %v1678 = vld [vmem:[%s1633 + $0xe2] sm:$0xff]
    %v1679 = vld [vmem:[%s1633 + $0xf2] sm:$0xff]
    %v1680 = vld [vmem:[%s1633 + $0x102] sm:$0xff]
    %v1681 = vld [vmem:[%s1633 + $0x112] sm:$0xff]
    %1698 = vrot.lane.b32.xlu0 %v1553, 8
    %v1699 = vpop.permute.xlu0 %1698
    %1700 = vrot.lane.b32.xlu0 %v1554, 8
    %v1701 = vpop.permute.xlu0 %1700
    %1702 = vrot.lane.b32.xlu0 %v1555, 8
    %v1703 = vpop.permute.xlu0 %1702
    %1704 = vrot.lane.b32.xlu0 %v1556, 8
    %v1705 = vpop.permute.xlu0 %1704
    %1706 = vrot.lane.b32.xlu0 %v1557, 8
    %v1707 = vpop.permute.xlu0 %1706
    %1708 = vrot.lane.b32.xlu0 %v1558, 8
    %v1709 = vpop.permute.xlu0 %1708
    %1710 = vrot.lane.b32.xlu0 %v1559, 8
    %v1711 = vpop.permute.xlu0 %1710
    %1712 = vrot.lane.b32.xlu0 %v1560, 8
    %v1713 = vpop.permute.xlu0 %1712
    %1714 = vrot.lane.b32.xlu0 %v1561, 8
    %v1715 = vpop.permute.xlu0 %1714
    %1716 = vrot.lane.b32.xlu0 %v1562, 8
    %v1717 = vpop.permute.xlu0 %1716
    %1718 = vrot.lane.b32.xlu0 %v1563, 8
    %v1719 = vpop.permute.xlu0 %1718
    %1720 = vrot.lane.b32.xlu0 %v1564, 8
    %v1721 = vpop.permute.xlu0 %1720
    %1722 = vrot.lane.b32.xlu0 %v1565, 8
    %v1723 = vpop.permute.xlu0 %1722
    %1724 = vrot.lane.b32.xlu0 %v1566, 8
    %v1725 = vpop.permute.xlu0 %1724
    %1726 = vrot.lane.b32.xlu0 %v1567, 8
    %v1727 = vpop.permute.xlu0 %1726
    %1728 = vrot.lane.b32.xlu0 %v1568, 8
    %v1729 = vpop.permute.xlu0 %1728
    %1762 = vrot.lane.b32.xlu0 %v1569, 16
    %v1763 = vpop.permute.xlu0 %1762
    %1764 = vrot.lane.b32.xlu0 %v1570, 16
    %v1765 = vpop.permute.xlu0 %1764
    %1766 = vrot.lane.b32.xlu0 %v1571, 16
    %v1767 = vpop.permute.xlu0 %1766
    %1768 = vrot.lane.b32.xlu0 %v1572, 16
    %v1769 = vpop.permute.xlu0 %1768
    %1770 = vrot.lane.b32.xlu0 %v1573, 16
    %v1771 = vpop.permute.xlu0 %1770
    %1772 = vrot.lane.b32.xlu0 %v1574, 16
    %v1773 = vpop.permute.xlu0 %1772
    %1774 = vrot.lane.b32.xlu0 %v1575, 16
    %v1775 = vpop.permute.xlu0 %1774
    %1776 = vrot.lane.b32.xlu0 %v1576, 16
    %v1777 = vpop.permute.xlu0 %1776
    %1778 = vrot.lane.b32.xlu0 %v1577, 16
    %v1779 = vpop.permute.xlu0 %1778
    %1780 = vrot.lane.b32.xlu0 %v1578, 16
    %v1781 = vpop.permute.xlu0 %1780
    %1782 = vrot.lane.b32.xlu0 %v1579, 16
    %v1783 = vpop.permute.xlu0 %1782
    %1784 = vrot.lane.b32.xlu0 %v1580, 16
    %v1785 = vpop.permute.xlu0 %1784
    %1786 = vrot.lane.b32.xlu0 %v1581, 16
    %v1787 = vpop.permute.xlu0 %1786
    %1788 = vrot.lane.b32.xlu0 %v1582, 16
    %v1789 = vpop.permute.xlu0 %1788
    %1790 = vrot.lane.b32.xlu0 %v1583, 16
    %v1791 = vpop.permute.xlu0 %1790
    %1792 = vrot.lane.b32.xlu0 %v1584, 16
    %v1793 = vpop.permute.xlu0 %1792
    %1826 = vrot.lane.b32.xlu0 %v1585, 24
    %v1827 = vpop.permute.xlu0 %1826
    %1828 = vrot.lane.b32.xlu0 %v1586, 24
    %v1829 = vpop.permute.xlu0 %1828
    %1830 = vrot.lane.b32.xlu0 %v1587, 24
    %v1831 = vpop.permute.xlu0 %1830
    %1832 = vrot.lane.b32.xlu0 %v1588, 24
    %v1833 = vpop.permute.xlu0 %1832
    %1834 = vrot.lane.b32.xlu0 %v1589, 24
    %v1835 = vpop.permute.xlu0 %1834
    %1836 = vrot.lane.b32.xlu0 %v1590, 24
    %v1837 = vpop.permute.xlu0 %1836
    %1838 = vrot.lane.b32.xlu0 %v1591, 24
    %v1839 = vpop.permute.xlu0 %1838
    %1840 = vrot.lane.b32.xlu0 %v1592, 24
    %v1841 = vpop.permute.xlu0 %1840
    %1842 = vrot.lane.b32.xlu0 %v1593, 24
    %v1843 = vpop.permute.xlu0 %1842
    %1844 = vrot.lane.b32.xlu0 %v1594, 24
    %v1845 = vpop.permute.xlu0 %1844
    %1846 = vrot.lane.b32.xlu0 %v1595, 24
    %v1847 = vpop.permute.xlu0 %1846
    %1848 = vrot.lane.b32.xlu0 %v1596, 24
    %v1849 = vpop.permute.xlu0 %1848
    %1850 = vrot.lane.b32.xlu0 %v1597, 24
    %v1851 = vpop.permute.xlu0 %1850
    %1852 = vrot.lane.b32.xlu0 %v1598, 24
    %v1853 = vpop.permute.xlu0 %1852
    %1854 = vrot.lane.b32.xlu0 %v1599, 24
    %v1855 = vpop.permute.xlu0 %1854
    %1856 = vrot.lane.b32.xlu0 %v1600, 24
    %v1857 = vpop.permute.xlu0 %1856
    %1890 = vrot.lane.b32.xlu0 %v1601, 32
    %v1891 = vpop.permute.xlu0 %1890
    %1892 = vrot.lane.b32.xlu0 %v1602, 32
    %v1893 = vpop.permute.xlu0 %1892
    %1894 = vrot.lane.b32.xlu0 %v1603, 32
    %v1895 = vpop.permute.xlu0 %1894
    %1896 = vrot.lane.b32.xlu0 %v1604, 32
    %v1897 = vpop.permute.xlu0 %1896
    %1898 = vrot.lane.b32.xlu0 %v1605, 32
    %v1899 = vpop.permute.xlu0 %1898
    %1900 = vrot.lane.b32.xlu0 %v1606, 32
    %v1901 = vpop.permute.xlu0 %1900
    %1902 = vrot.lane.b32.xlu0 %v1607, 32
    %v1903 = vpop.permute.xlu0 %1902
    %1904 = vrot.lane.b32.xlu0 %v1608, 32
    %v1905 = vpop.permute.xlu0 %1904
    %1906 = vrot.lane.b32.xlu0 %v1609, 32
    %v1907 = vpop.permute.xlu0 %1906
    %1908 = vrot.lane.b32.xlu0 %v1610, 32
    %v1909 = vpop.permute.xlu0 %1908
    %1910 = vrot.lane.b32.xlu0 %v1611, 32
    %v1911 = vpop.permute.xlu0 %1910
    %1912 = vrot.lane.b32.xlu0 %v1612, 32
    %v1913 = vpop.permute.xlu0 %1912
    %1914 = vrot.lane.b32.xlu0 %v1613, 32
    %v1915 = vpop.permute.xlu0 %1914
    %1916 = vrot.lane.b32.xlu0 %v1614, 32
    %v1917 = vpop.permute.xlu0 %1916
    %1918 = vrot.lane.b32.xlu0 %v1615, 32
    %v1919 = vpop.permute.xlu0 %1918
    %1920 = vrot.lane.b32.xlu0 %v1616, 32
    %v1921 = vpop.permute.xlu0 %1920
    %1954 = vrot.lane.b32.xlu0 %v1617, 40
    %v1955 = vpop.permute.xlu0 %1954
    %1956 = vrot.lane.b32.xlu0 %v1618, 40
    %v1957 = vpop.permute.xlu0 %1956
    %1958 = vrot.lane.b32.xlu0 %v1619, 40
    %v1959 = vpop.permute.xlu0 %1958
    %1960 = vrot.lane.b32.xlu0 %v1620, 40
    %v1961 = vpop.permute.xlu0 %1960
    %1962 = vrot.lane.b32.xlu0 %v1621, 40
    %v1963 = vpop.permute.xlu0 %1962
    %1964 = vrot.lane.b32.xlu0 %v1622, 40
    %v1965 = vpop.permute.xlu0 %1964
    %1966 = vrot.lane.b32.xlu0 %v1623, 40
    %v1967 = vpop.permute.xlu0 %1966
    %1968 = vrot.lane.b32.xlu0 %v1624, 40
    %v1969 = vpop.permute.xlu0 %1968
    %1970 = vrot.lane.b32.xlu0 %v1625, 40
    %v1971 = vpop.permute.xlu0 %1970
    %1972 = vrot.lane.b32.xlu0 %v1626, 40
    %v1973 = vpop.permute.xlu0 %1972
    %1974 = vrot.lane.b32.xlu0 %v1627, 40
    %v1975 = vpop.permute.xlu0 %1974
    %1976 = vrot.lane.b32.xlu0 %v1628, 40
    %v1977 = vpop.permute.xlu0 %1976
    %1978 = vrot.lane.b32.xlu0 %v1629, 40
    %v1979 = vpop.permute.xlu0 %1978
    %1980 = vrot.lane.b32.xlu0 %v1630, 40
    %v1981 = vpop.permute.xlu0 %1980
    %1982 = vrot.lane.b32.xlu0 %v1631, 40
    %v1983 = vpop.permute.xlu0 %1982
    %1984 = vrot.lane.b32.xlu0 %v1632, 40
    %v1985 = vpop.permute.xlu0 %1984
    %2018 = vrot.lane.b32.xlu0 %v1634, 48
    %v2019 = vpop.permute.xlu0 %2018
    %2020 = vrot.lane.b32.xlu0 %v1635, 48
    %v2021 = vpop.permute.xlu0 %2020
    %2022 = vrot.lane.b32.xlu0 %v1636, 48
    %v2023 = vpop.permute.xlu0 %2022
    %2024 = vrot.lane.b32.xlu0 %v1637, 48
    %v2025 = vpop.permute.xlu0 %2024
    %2026 = vrot.lane.b32.xlu0 %v1638, 48
    %v2027 = vpop.permute.xlu0 %2026
    %2028 = vrot.lane.b32.xlu0 %v1639, 48
    %v2029 = vpop.permute.xlu0 %2028
    %2030 = vrot.lane.b32.xlu0 %v1640, 48
    %v2031 = vpop.permute.xlu0 %2030
    %2032 = vrot.lane.b32.xlu0 %v1641, 48
    %v2033 = vpop.permute.xlu0 %2032
    %2034 = vrot.lane.b32.xlu0 %v1642, 48
    %v2035 = vpop.permute.xlu0 %2034
    %2036 = vrot.lane.b32.xlu0 %v1643, 48
    %v2037 = vpop.permute.xlu0 %2036
    %2038 = vrot.lane.b32.xlu0 %v1644, 48
    %v2039 = vpop.permute.xlu0 %2038
    %2040 = vrot.lane.b32.xlu0 %v1645, 48
    %v2041 = vpop.permute.xlu0 %2040
    %2042 = vrot.lane.b32.xlu0 %v1646, 48
    %v2043 = vpop.permute.xlu0 %2042
    %2044 = vrot.lane.b32.xlu0 %v1647, 48
    %v2045 = vpop.permute.xlu0 %2044
    %2046 = vrot.lane.b32.xlu0 %v1648, 48
    %v2047 = vpop.permute.xlu0 %2046
    %2048 = vrot.lane.b32.xlu0 %v1649, 48
    %v2049 = vpop.permute.xlu0 %2048
    %2082 = vrot.lane.b32.xlu0 %v1650, 56
    %v2083 = vpop.permute.xlu0 %2082
    %2084 = vrot.lane.b32.xlu0 %v1651, 56
    %v2085 = vpop.permute.xlu0 %2084
    %2086 = vrot.lane.b32.xlu0 %v1652, 56
    %v2087 = vpop.permute.xlu0 %2086
    %2088 = vrot.lane.b32.xlu0 %v1653, 56
    %v2089 = vpop.permute.xlu0 %2088
    %2090 = vrot.lane.b32.xlu0 %v1654, 56
    %v2091 = vpop.permute.xlu0 %2090
    %2092 = vrot.lane.b32.xlu0 %v1655, 56
    %v2093 = vpop.permute.xlu0 %2092
    %2094 = vrot.lane.b32.xlu0 %v1656, 56
    %v2095 = vpop.permute.xlu0 %2094
    %2096 = vrot.lane.b32.xlu0 %v1657, 56
    %v2097 = vpop.permute.xlu0 %2096
    %2098 = vrot.lane.b32.xlu0 %v1658, 56
    %v2099 = vpop.permute.xlu0 %2098
    %2100 = vrot.lane.b32.xlu0 %v1659, 56
    %v2101 = vpop.permute.xlu0 %2100
    %2102 = vrot.lane.b32.xlu0 %v1660, 56
    %v2103 = vpop.permute.xlu0 %2102
    %2104 = vrot.lane.b32.xlu0 %v1661, 56
    %v2105 = vpop.permute.xlu0 %2104
    %2106 = vrot.lane.b32.xlu0 %v1662, 56
    %v2107 = vpop.permute.xlu0 %2106
    %2108 = vrot.lane.b32.xlu0 %v1663, 56
    %v2109 = vpop.permute.xlu0 %2108
    %2110 = vrot.lane.b32.xlu0 %v1664, 56
    %v2111 = vpop.permute.xlu0 %2110
    %2112 = vrot.lane.b32.xlu0 %v1665, 56
    %v2113 = vpop.permute.xlu0 %2112
    %2146 = vrot.lane.b32.xlu0 %v1666, 64
    %v2147 = vpop.permute.xlu0 %2146
    %2148 = vrot.lane.b32.xlu0 %v1667, 64
    %v2149 = vpop.permute.xlu0 %2148
    %2150 = vrot.lane.b32.xlu0 %v1668, 64
    %v2151 = vpop.permute.xlu0 %2150
    %2152 = vrot.lane.b32.xlu0 %v1669, 64
    %v2153 = vpop.permute.xlu0 %2152
    %2154 = vrot.lane.b32.xlu0 %v1670, 64
    %v2155 = vpop.permute.xlu0 %2154
    %2156 = vrot.lane.b32.xlu0 %v1671, 64
    %v2157 = vpop.permute.xlu0 %2156
    %2158 = vrot.lane.b32.xlu0 %v1672, 64
    %v2159 = vpop.permute.xlu0 %2158
    %2160 = vrot.lane.b32.xlu0 %v1673, 64
    %v2161 = vpop.permute.xlu0 %2160
    %2162 = vrot.lane.b32.xlu0 %v1674, 64
    %v2163 = vpop.permute.xlu0 %2162
    %2164 = vrot.lane.b32.xlu0 %v1675, 64
    %v2165 = vpop.permute.xlu0 %2164
    %2166 = vrot.lane.b32.xlu0 %v1676, 64
    %v2167 = vpop.permute.xlu0 %2166
    %2168 = vrot.lane.b32.xlu0 %v1677, 64
    %v2169 = vpop.permute.xlu0 %2168
    %2170 = vrot.lane.b32.xlu0 %v1678, 64
    %v2171 = vpop.permute.xlu0 %2170
    %2172 = vrot.lane.b32.xlu0 %v1679, 64
    %v2173 = vpop.permute.xlu0 %2172
    %2174 = vrot.lane.b32.xlu0 %v1680, 64
    %v2175 = vpop.permute.xlu0 %2174
    %2176 = vrot.lane.b32.xlu0 %v1681, 64
    %v2177 = vpop.permute.xlu0 %2176
    %v2194 = vsel %vm447, %v1537, %v1699
    %v2195 = vsel %vm447, %v1538, %v1701
    %v2196 = vsel %vm447, %v1539, %v1703
    %v2197 = vsel %vm447, %v1540, %v1705
    %v2198 = vsel %vm447, %v1541, %v1707
    %v2199 = vsel %vm447, %v1542, %v1709
    %v2200 = vsel %vm447, %v1543, %v1711
    %v2201 = vsel %vm447, %v1544, %v1713
    %v2202 = vsel %vm447, %v1545, %v1715
    %v2203 = vsel %vm447, %v1546, %v1717
    %v2204 = vsel %vm447, %v1547, %v1719
    %v2205 = vsel %vm447, %v1548, %v1721
    %v2206 = vsel %vm447, %v1549, %v1723
    %v2207 = vsel %vm447, %v1550, %v1725
    %v2208 = vsel %vm447, %v1551, %v1727
    %v2209 = vsel %vm447, %v1552, %v1729
    %v2210 = vsel %vm1137, %v2194, %v1763
    %v2211 = vsel %vm1137, %v2195, %v1765
    %v2212 = vsel %vm1137, %v2196, %v1767
    %v2213 = vsel %vm1137, %v2197, %v1769
    %v2214 = vsel %vm1137, %v2198, %v1771
    %v2215 = vsel %vm1137, %v2199, %v1773
    %v2216 = vsel %vm1137, %v2200, %v1775
    %v2217 = vsel %vm1137, %v2201, %v1777
    %v2218 = vsel %vm1137, %v2202, %v1779
    %v2219 = vsel %vm1137, %v2203, %v1781
    %v2220 = vsel %vm1137, %v2204, %v1783
    %v2221 = vsel %vm1137, %v2205, %v1785
    %v2222 = vsel %vm1137, %v2206, %v1787
    %v2223 = vsel %vm1137, %v2207, %v1789
    %v2224 = vsel %vm1137, %v2208, %v1791
    %v2225 = vsel %vm1137, %v2209, %v1793
    %v2226 = vsel %vm1154, %v2210, %v1827
    %v2227 = vsel %vm1154, %v2211, %v1829
    %v2228 = vsel %vm1154, %v2212, %v1831
    %v2229 = vsel %vm1154, %v2213, %v1833
    %v2230 = vsel %vm1154, %v2214, %v1835
    %v2231 = vsel %vm1154, %v2215, %v1837
    %v2232 = vsel %vm1154, %v2216, %v1839
    %v2233 = vsel %vm1154, %v2217, %v1841
    %v2234 = vsel %vm1154, %v2218, %v1843
    %v2235 = vsel %vm1154, %v2219, %v1845
    %v2236 = vsel %vm1154, %v2220, %v1847
    %v2237 = vsel %vm1154, %v2221, %v1849
    %v2238 = vsel %vm1154, %v2222, %v1851
    %v2239 = vsel %vm1154, %v2223, %v1853
    %v2240 = vsel %vm1154, %v2224, %v1855
    %v2241 = vsel %vm1154, %v2225, %v1857
    %v2242 = vsel %vm1171, %v2226, %v1891
    %v2243 = vsel %vm1171, %v2227, %v1893
    %v2244 = vsel %vm1171, %v2228, %v1895
    %v2245 = vsel %vm1171, %v2229, %v1897
    %v2246 = vsel %vm1171, %v2230, %v1899
    %v2247 = vsel %vm1171, %v2231, %v1901
    %v2248 = vsel %vm1171, %v2232, %v1903
    %v2249 = vsel %vm1171, %v2233, %v1905
    %v2250 = vsel %vm1171, %v2234, %v1907
    %v2251 = vsel %vm1171, %v2235, %v1909
    %v2252 = vsel %vm1171, %v2236, %v1911
    %v2253 = vsel %vm1171, %v2237, %v1913
    %v2254 = vsel %vm1171, %v2238, %v1915
    %v2255 = vsel %vm1171, %v2239, %v1917
    %v2256 = vsel %vm1171, %v2240, %v1919
    %v2257 = vsel %vm1171, %v2241, %v1921
    %v2258 = vsel %vm1188, %v2242, %v1955
    %v2259 = vsel %vm1188, %v2243, %v1957
    %v2260 = vsel %vm1188, %v2244, %v1959
    %v2261 = vsel %vm1188, %v2245, %v1961
    %v2262 = vsel %vm1188, %v2246, %v1963
    %v2263 = vsel %vm1188, %v2247, %v1965
    %v2264 = vsel %vm1188, %v2248, %v1967
    %v2265 = vsel %vm1188, %v2249, %v1969
    %v2266 = vsel %vm1188, %v2250, %v1971
    %v2267 = vsel %vm1188, %v2251, %v1973
    %v2268 = vsel %vm1188, %v2252, %v1975
    %v2269 = vsel %vm1188, %v2253, %v1977
    %v2270 = vsel %vm1188, %v2254, %v1979
    %v2271 = vsel %vm1188, %v2255, %v1981
    %v2272 = vsel %vm1188, %v2256, %v1983
    %v2273 = vsel %vm1188, %v2257, %v1985
    %v2274 = vsel %vm1205, %v2258, %v2019
    %v2275 = vsel %vm1205, %v2259, %v2021
    %v2276 = vsel %vm1205, %v2260, %v2023
    %v2277 = vsel %vm1205, %v2261, %v2025
    %v2278 = vsel %vm1205, %v2262, %v2027
    %v2279 = vsel %vm1205, %v2263, %v2029
    %v2280 = vsel %vm1205, %v2264, %v2031
    %v2281 = vsel %vm1205, %v2265, %v2033
    %v2282 = vsel %vm1205, %v2266, %v2035
    %v2283 = vsel %vm1205, %v2267, %v2037
    %v2284 = vsel %vm1205, %v2268, %v2039
    %v2285 = vsel %vm1205, %v2269, %v2041
    %v2286 = vsel %vm1205, %v2270, %v2043
    %v2287 = vsel %vm1205, %v2271, %v2045
    %v2288 = vsel %vm1205, %v2272, %v2047
    %v2289 = vsel %vm1205, %v2273, %v2049
    %v2290 = vsel %vm1222, %v2274, %v2083
    %v2291 = vsel %vm1222, %v2275, %v2085
    %v2292 = vsel %vm1222, %v2276, %v2087
    %v2293 = vsel %vm1222, %v2277, %v2089
    %v2294 = vsel %vm1222, %v2278, %v2091
    %v2295 = vsel %vm1222, %v2279, %v2093
    %v2296 = vsel %vm1222, %v2280, %v2095
    %v2297 = vsel %vm1222, %v2281, %v2097
    %v2298 = vsel %vm1222, %v2282, %v2099
    %v2299 = vsel %vm1222, %v2283, %v2101
    %v2300 = vsel %vm1222, %v2284, %v2103
    %v2301 = vsel %vm1222, %v2285, %v2105
    %v2302 = vsel %vm1222, %v2286, %v2107
    %v2303 = vsel %vm1222, %v2287, %v2109
    %v2304 = vsel %vm1222, %v2288, %v2111
    %v2305 = vsel %vm1222, %v2289, %v2113
    %v2306 = vsel %vm1239, %v2290, %v2147
    %v2307 = vsel %vm1239, %v2291, %v2149
    %v2308 = vsel %vm1239, %v2292, %v2151
    %v2309 = vsel %vm1239, %v2293, %v2153
    %v2310 = vsel %vm1239, %v2294, %v2155
    %v2311 = vsel %vm1239, %v2295, %v2157
    %v2312 = vsel %vm1239, %v2296, %v2159
    %v2313 = vsel %vm1239, %v2297, %v2161
    %v2314 = vsel %vm1239, %v2298, %v2163
    %v2315 = vsel %vm1239, %v2299, %v2165
    %v2316 = vsel %vm1239, %v2300, %v2167
    %v2317 = vsel %vm1239, %v2301, %v2169
    %v2318 = vsel %vm1239, %v2302, %v2171
    %v2319 = vsel %vm1239, %v2303, %v2173
    %v2320 = vsel %vm1239, %v2304, %v2175
    %v2321 = vsel %vm1239, %v2305, %v2177
    %v2322 = vpack.c.bf16 %v2307, %v2306
    %v2323 = vpack.c.bf16 %v2309, %v2308
    %v2324 = vpack.c.bf16 %v2311, %v2310
    %v2325 = vpack.c.bf16 %v2313, %v2312
    %v2326 = vpack.c.bf16 %v2315, %v2314
    %v2327 = vpack.c.bf16 %v2317, %v2316
    %v2328 = vpack.c.bf16 %v2319, %v2318
    %v2329 = vpack.c.bf16 %v2321, %v2320
    %v2330 = vld [vmem:[%s4] sm:$0xf]
    %v2331 = vld [vmem:[%s4 + $0x4] sm:$0xf]
    %v2332 = vld [vmem:[%s4 + $0x8] sm:$0xf]
    %v2333 = vld [vmem:[%s4 + $0xc] sm:$0xf]
    %v2334 = vld [vmem:[%s4 + $0x10] sm:$0xf]
    %v2335 = vld [vmem:[%s4 + $0x14] sm:$0xf]
    %v2336 = vld [vmem:[%s4 + $0x18] sm:$0xf]
    %v2337 = vld [vmem:[%s4 + $0x1c] sm:$0xf]
    %v2338 = vld [vmem:[%s4 + $0x20] sm:$0xf]
    %v2348 = vunpack.c.l.b16 %v2330
    %v2349 = vunpack.c.l.b16 %v2331
    %v2350 = vunpack.c.l.b16 %v2332
    %v2351 = vunpack.c.l.b16 %v2333
    %v2352 = vunpack.c.l.b16 %v2334
    %v2353 = vunpack.c.l.b16 %v2335
    %v2354 = vunpack.c.l.b16 %v2336
    %v2355 = vunpack.c.l.b16 %v2337
    %v2356 = vunpack.c.l.b16 %v2338
    %v2357 = vpack.c.b16 %v2349, %v2348
    %v2358 = vpack.c.b16 %v2351, %v2350
    %v2359 = vpack.c.b16 %v2353, %v2352
    %v2360 = vpack.c.b16 %v2355, %v2354
    %v2361 = vpack.c.b16 %v2356, %v2356
    %v2367 = vsel %vm1300, %v2322, 0
    %v2370 = vsel %vm1300, %v2323, 0
    %v2373 = vsel %vm1300, %v2324, 0
    %v2376 = vsel %vm1300, %v2325, 0
    %v2379 = vsel %vm1300, %v2326, 0
    %v2382 = vsel %vm1300, %v2327, 0
    %v2385 = vsel %vm1300, %v2328, 0
    %v2388 = vsel %vm1300, %v2329, 0
    %v2391 = vsel %vm1325, %v2361, 0
    %2393 = vmatprep.subr.bf16.mxu0 0
    %2394 = vmatpush1.bf16.msra.mxu0 %v2357
    %2395 = vmatprep.subr.bf16.mxu0 0
    %2396 = vmatpush1.bf16.msra.mxu0 %v2358
    %2397 = vmatprep.subr.bf16.mxu0 0
    %2398 = vmatpush1.bf16.msra.mxu0 %v2359
    %2399 = vmatprep.subr.bf16.mxu0 0
    %2400 = vmatpush1.bf16.msra.mxu0 %v2360
    %2401 = vmatprep.subr.bf16.mxu0 0
    %2402 = vmatpush1.bf16.msra.mxu0 %v2391
    %2403 = vmatprep.subr.bf16.mxu0 0
    %2404 = vmatpush1.bf16.msra.mxu0 0
    %2405 = vmatprep.subr.bf16.mxu0 0
    %2406 = vmatpush1.bf16.msra.mxu0 0
    %2407 = vmatprep.subr.bf16.mxu0 0
    %2408 = vmatpush1.bf16.msra.mxu0 0
    %2409 = vmatprep.subr.bf16.mxu0 0
    %2410 = vmatpush1.bf16.msra.mxu0 0
    %2411 = vmatprep.subr.bf16.mxu0 0
    %2412 = vmatpush1.bf16.msra.mxu0 0
    %2413 = vmatprep.subr.bf16.mxu0 0
    %2414 = vmatpush1.bf16.msra.mxu0 0
    %2415 = vmatprep.subr.bf16.mxu0 0
    %2416 = vmatpush1.bf16.msra.mxu0 0
    %2417 = vmatprep.subr.bf16.mxu0 0
    %2418 = vmatpush1.bf16.msra.mxu0 0
    %2419 = vmatprep.subr.bf16.mxu0 0
    %2420 = vmatpush1.bf16.msra.mxu0 0
    %2421 = vmatprep.subr.bf16.mxu0 0
    %2422 = vmatpush1.bf16.msra.mxu0 0
    %2423 = vmatprep.subr.bf16.mxu0 0
    %2424 = vmatpush1.bf16.msra.mxu0 0
    %2425 = vmatprep.mubr.bf16.mxu0 0
    %2426 = vmatmul.mubr.bf16.gmra.mrb[0].mxu0 %v2367
    %v2427 = vpop.f32.mrb[0].mxu0
    %v2428 = vadd.f32 0.0, %v2427
    %v2429 = vpop.f32.mrb[0].mxu0
    %v2430 = vpop.f32.mrb[0].mxu0
    %v2431 = vadd.f32 0.0, %v2430
    %v2432 = vpop.f32.mrb[0].mxu0
    %2433 = vmatprep.mubr.bf16.mxu0 0
    %2434 = vmatmul.mubr.bf16.gmra.mrb[0].mxu0 %v2370
    %v2435 = vpop.f32.mrb[0].mxu0
    %v2436 = vadd.f32 0.0, %v2435
    %v2437 = vpop.f32.mrb[0].mxu0
    %v2438 = vpop.f32.mrb[0].mxu0
    %v2439 = vadd.f32 0.0, %v2438
    %v2440 = vpop.f32.mrb[0].mxu0
    %2441 = vmatprep.mubr.bf16.mxu0 0
    %2442 = vmatmul.mubr.bf16.gmra.mrb[0].mxu0 %v2373
    %v2443 = vpop.f32.mrb[0].mxu0
    %v2444 = vadd.f32 0.0, %v2443
    %v2445 = vpop.f32.mrb[0].mxu0
    %v2446 = vpop.f32.mrb[0].mxu0
    %v2447 = vadd.f32 0.0, %v2446
    %v2448 = vpop.f32.mrb[0].mxu0
    %2449 = vmatprep.mubr.bf16.mxu0 0
    %2450 = vmatmul.mubr.bf16.gmra.mrb[0].mxu0 %v2376
    %v2451 = vpop.f32.mrb[0].mxu0
    %v2452 = vadd.f32 0.0, %v2451
    %v2453 = vpop.f32.mrb[0].mxu0
    %v2454 = vpop.f32.mrb[0].mxu0
    %v2455 = vadd.f32 0.0, %v2454
    %v2456 = vpop.f32.mrb[0].mxu0
    %2457 = vmatprep.mubr.bf16.mxu0 0
    %2458 = vmatmul.mubr.bf16.gmra.mrb[0].mxu0 %v2379
    %v2459 = vpop.f32.mrb[0].mxu0
    %v2460 = vadd.f32 0.0, %v2459
    %v2461 = vpop.f32.mrb[0].mxu0
    %v2462 = vpop.f32.mrb[0].mxu0
    %v2463 = vadd.f32 0.0, %v2462
    %v2464 = vpop.f32.mrb[0].mxu0
    %2465 = vmatprep.mubr.bf16.mxu0 0
    %2466 = vmatmul.mubr.bf16.gmra.mrb[0].mxu0 %v2382
    %v2467 = vpop.f32.mrb[0].mxu0
    %v2468 = vadd.f32 0.0, %v2467
    %v2469 = vpop.f32.mrb[0].mxu0
    %v2470 = vpop.f32.mrb[0].mxu0
    %v2471 = vadd.f32 0.0, %v2470
    %v2472 = vpop.f32.mrb[0].mxu0
    %2473 = vmatprep.mubr.bf16.mxu0 0
    %2474 = vmatmul.mubr.bf16.gmra.mrb[0].mxu0 %v2385
    %v2475 = vpop.f32.mrb[0].mxu0
    %v2476 = vadd.f32 0.0, %v2475
    %v2477 = vpop.f32.mrb[0].mxu0
    %v2478 = vpop.f32.mrb[0].mxu0
    %v2479 = vadd.f32 0.0, %v2478
    %v2480 = vpop.f32.mrb[0].mxu0
    %2481 = vmatprep.mubr.bf16.mxu0 0
    %2482 = vmatmul.mubr.bf16.gmra.mrb[0].mxu0 %v2388
    %v2483 = vpop.f32.mrb[0].mxu0
    %v2484 = vadd.f32 0.0, %v2483
    %v2485 = vpop.f32.mrb[0].mxu0
    %v2486 = vpop.f32.mrb[0].mxu0
    %v2487 = vadd.f32 0.0, %v2486
    %v2488 = vpop.f32.mrb[0].mxu0
    %2489 = vdwg.mxu0
    %v2490 = vld [vmem:[%s5] sm:$0x1]
    %v2492 = vlaneseq
    %v2493 = vshrl.u32 %v2492, 7
    %v2494 = vsub.s32 0, %v2493
    %v2495 = vrot.slane %v2490, %v2494
    %v2497 = vmul.f32 %v2428, %v2495
    %v2498 = vmul.f32 %v2431, %v2495
    %v2499 = vmul.f32 %v2436, %v2495
    %v2500 = vmul.f32 %v2439, %v2495
    %v2501 = vmul.f32 %v2444, %v2495
    %v2502 = vmul.f32 %v2447, %v2495
    %v2503 = vmul.f32 %v2452, %v2495
    %v2504 = vmul.f32 %v2455, %v2495
    %v2505 = vmul.f32 %v2460, %v2495
    %v2506 = vmul.f32 %v2463, %v2495
    %v2507 = vmul.f32 %v2468, %v2495
    %v2508 = vmul.f32 %v2471, %v2495
    %v2509 = vmul.f32 %v2476, %v2495
    %v2510 = vmul.f32 %v2479, %v2495
    %v2511 = vmul.f32 %v2484, %v2495
    %v2512 = vmul.f32 %v2487, %v2495
    %v2513 = vld [vmem:[%s6] sm:$0x1]
    %v2515 = vlaneseq
    %v2516 = vshrl.u32 %v2515, 7
    %v2517 = vsub.s32 0, %v2516
    %v2518 = vrot.slane %v2513, %v2517
    %v2520 = vadd.f32 %v2497, %v2518
    %v2521 = vadd.f32 %v2498, %v2518
    %v2522 = vadd.f32 %v2499, %v2518
    %v2523 = vadd.f32 %v2500, %v2518
    %v2524 = vadd.f32 %v2501, %v2518
    %v2525 = vadd.f32 %v2502, %v2518
    %v2526 = vadd.f32 %v2503, %v2518
    %v2527 = vadd.f32 %v2504, %v2518
    %v2528 = vadd.f32 %v2505, %v2518
    %v2529 = vadd.f32 %v2506, %v2518
    %v2530 = vadd.f32 %v2507, %v2518
    %v2531 = vadd.f32 %v2508, %v2518
    %v2532 = vadd.f32 %v2509, %v2518
    %v2533 = vadd.f32 %v2510, %v2518
    %v2534 = vadd.f32 %v2511, %v2518
    %v2535 = vadd.f32 %v2512, %v2518
    %vm2536 = vcmp.gt.f32.partialorder %v2520, 0.0
    %vm2537 = vcmp.gt.f32.partialorder %v2521, 0.0
    %vm2538 = vcmp.gt.f32.partialorder %v2522, 0.0
    %vm2539 = vcmp.gt.f32.partialorder %v2523, 0.0
    %vm2540 = vcmp.gt.f32.partialorder %v2524, 0.0
    %vm2541 = vcmp.gt.f32.partialorder %v2525, 0.0
    %vm2542 = vcmp.gt.f32.partialorder %v2526, 0.0
    %vm2543 = vcmp.gt.f32.partialorder %v2527, 0.0
    %vm2544 = vcmp.gt.f32.partialorder %v2528, 0.0
    %vm2545 = vcmp.gt.f32.partialorder %v2529, 0.0
    %vm2546 = vcmp.gt.f32.partialorder %v2530, 0.0
    %vm2547 = vcmp.gt.f32.partialorder %v2531, 0.0
    %vm2548 = vcmp.gt.f32.partialorder %v2532, 0.0
    %vm2549 = vcmp.gt.f32.partialorder %v2533, 0.0
    %vm2550 = vcmp.gt.f32.partialorder %v2534, 0.0
    %vm2551 = vcmp.gt.f32.partialorder %v2535, 0.0
    %v2552 = vmul.f32 %v2520, 0.01
    %v2553 = vmul.f32 %v2521, 0.01
    %v2554 = vmul.f32 %v2522, 0.01
    %v2555 = vmul.f32 %v2523, 0.01
    %v2556 = vmul.f32 %v2524, 0.01
    %v2557 = vmul.f32 %v2525, 0.01
    %v2558 = vmul.f32 %v2526, 0.01
    %v2559 = vmul.f32 %v2527, 0.01
    %v2560 = vmul.f32 %v2528, 0.01
    %v2561 = vmul.f32 %v2529, 0.01
    %v2562 = vmul.f32 %v2530, 0.01
    %v2563 = vmul.f32 %v2531, 0.01
    %v2564 = vmul.f32 %v2532, 0.01
    %v2565 = vmul.f32 %v2533, 0.01
    %v2566 = vmul.f32 %v2534, 0.01
    %v2567 = vmul.f32 %v2535, 0.01
    %v2568 = vsel %vm2536, %v2520, %v2552
    %v2569 = vsel %vm2537, %v2521, %v2553
    %v2570 = vsel %vm2538, %v2522, %v2554
    %v2571 = vsel %vm2539, %v2523, %v2555
    %v2572 = vsel %vm2540, %v2524, %v2556
    %v2573 = vsel %vm2541, %v2525, %v2557
    %v2574 = vsel %vm2542, %v2526, %v2558
    %v2575 = vsel %vm2543, %v2527, %v2559
    %v2576 = vsel %vm2544, %v2528, %v2560
    %v2577 = vsel %vm2545, %v2529, %v2561
    %v2578 = vsel %vm2546, %v2530, %v2562
    %v2579 = vsel %vm2547, %v2531, %v2563
    %v2580 = vsel %vm2548, %v2532, %v2564
    %v2581 = vsel %vm2549, %v2533, %v2565
    %v2582 = vsel %vm2550, %v2534, %v2566
    %v2583 = vsel %vm2551, %v2535, %v2567
    %v2584 = vsel %vm447, %v2568, 0.0
    %v2585 = vsel %vm447, %v2569, 0.0
    %v2586 = vadd.f32 %v2584, %v2585
    %v2587 = vsel %vm447, %v2570, 0.0
    %v2588 = vadd.f32 %v2586, %v2587
    %v2589 = vsel %vm447, %v2571, 0.0
    %v2590 = vadd.f32 %v2588, %v2589
    %v2591 = vsel %vm447, %v2572, 0.0
    %v2592 = vadd.f32 %v2590, %v2591
    %v2593 = vsel %vm447, %v2573, 0.0
    %v2594 = vadd.f32 %v2592, %v2593
    %v2595 = vsel %vm447, %v2574, 0.0
    %v2596 = vadd.f32 %v2594, %v2595
    %v2597 = vsel %vm447, %v2575, 0.0
    %v2598 = vadd.f32 %v2596, %v2597
    %v2599 = vrot.slane %v2598, 4
    %v2600 = vadd.f32 %v2598, %v2599
    %v2601 = vrot.slane %v2600, 2
    %v2602 = vadd.f32 %v2600, %v2601
    %v2603 = vrot.slane %v2602, 1
    %v2604 = vadd.f32 %v2602, %v2603
    %v2605 = vsel %vm447, %v2576, 0.0
    %v2606 = vsel %vm447, %v2577, 0.0
    %v2607 = vadd.f32 %v2605, %v2606
    %v2608 = vsel %vm447, %v2578, 0.0
    %v2609 = vadd.f32 %v2607, %v2608
    %v2610 = vsel %vm447, %v2579, 0.0
    %v2611 = vadd.f32 %v2609, %v2610
    %v2612 = vsel %vm447, %v2580, 0.0
    %v2613 = vadd.f32 %v2611, %v2612
    %v2614 = vsel %vm447, %v2581, 0.0
    %v2615 = vadd.f32 %v2613, %v2614
    %v2616 = vsel %vm447, %v2582, 0.0
    %v2617 = vadd.f32 %v2615, %v2616
    %v2618 = vsel %vm447, %v2583, 0.0
    %v2619 = vadd.f32 %v2617, %v2618
    %v2620 = vrot.slane %v2619, 4
    %v2621 = vadd.f32 %v2619, %v2620
    %v2622 = vrot.slane %v2621, 2
    %v2623 = vadd.f32 %v2621, %v2622
    %v2624 = vrot.slane %v2623, 1
    %v2625 = vadd.f32 %v2623, %v2624
    %v2626 = vrcp.pop 64.0
    %v2627 = vmul.f32 %v2604, %v2626
    %v2628 = vmul.f32 %v2625, %v2626
    %v2629 = vld [vmem:[%s7] sm:$0xff]
    %v2630 = vld [vmem:[%s8] sm:$0x1]
    %v2632 = vlaneseq
    %v2633 = vshrl.u32 %v2632, 7
    %v2634 = vsub.s32 0, %v2633
    %v2635 = vrot.slane %v2630, %v2634
    %vm2639 = vcmask 1041409
    %v2640 = vsel %vm2639, %v2628, %v2627
    %v2641 = vsel %vm447, %v2640, 0
    %2643 = vmatprep.subr.mxu0 0.0
    %2644 = vmatpush1.msra.mxu0 %v2629
    %2645 = vmatprep.subr.mxu0 0.0
    %2646 = vmatpush1.msra.mxu0 0.0
    %2647 = vmatprep.subr.mxu0 0.0
    %2648 = vmatpush1.msra.mxu0 0.0
    %2649 = vmatprep.subr.mxu0 0.0
    %2650 = vmatpush1.msra.mxu0 0.0
    %2651 = vmatprep.subr.mxu0 0.0
    %2652 = vmatpush1.msra.mxu0 0.0
    %2653 = vmatprep.subr.mxu0 0.0
    %2654 = vmatpush1.msra.mxu0 0.0
    %2655 = vmatprep.subr.mxu0 0.0
    %2656 = vmatpush1.msra.mxu0 0.0
    %2657 = vmatprep.subr.mxu0 0.0
    %2658 = vmatpush1.msra.mxu0 0.0
    %2659 = vmatprep.subr.mxu0 0.0
    %2660 = vmatpush1.msra.mxu0 0.0
    %2661 = vmatprep.subr.mxu0 0.0
    %2662 = vmatpush1.msra.mxu0 0.0
    %2663 = vmatprep.subr.mxu0 0.0
    %2664 = vmatpush1.msra.mxu0 0.0
    %2665 = vmatprep.subr.mxu0 0.0
    %2666 = vmatpush1.msra.mxu0 0.0
    %2667 = vmatprep.subr.mxu0 0.0
    %2668 = vmatpush1.msra.mxu0 0.0
    %2669 = vmatprep.subr.mxu0 0.0
    %2670 = vmatpush1.msra.mxu0 0.0
    %2671 = vmatprep.subr.mxu0 0.0
    %2672 = vmatpush1.msra.mxu0 0.0
    %2673 = vmatprep.subr.mxu0 0.0
    %2674 = vmatpush1.msra.mxu0 0.0
    %2675 = vmatprep.subr.mxu0 0.0
    %2676 = vmatpush1.msra.mxu0 0.0
    %2677 = vmatprep.subr.mxu0 0.0
    %2678 = vmatpush1.msra.mxu0 0.0
    %2679 = vmatprep.subr.mxu0 0.0
    %2680 = vmatpush1.msra.mxu0 0.0
    %2681 = vmatprep.subr.mxu0 0.0
    %2682 = vmatpush1.msra.mxu0 0.0
    %2683 = vmatprep.subr.mxu0 0.0
    %2684 = vmatpush1.msra.mxu0 0.0
    %2685 = vmatprep.subr.mxu0 0.0
    %2686 = vmatpush1.msra.mxu0 0.0
    %2687 = vmatprep.subr.mxu0 0.0
    %2688 = vmatpush1.msra.mxu0 0.0
    %2689 = vmatprep.subr.mxu0 0.0
    %2690 = vmatpush1.msra.mxu0 0.0
    %2691 = vmatprep.subr.mxu0 0.0
    %2692 = vmatpush1.msra.mxu0 0.0
    %2693 = vmatprep.subr.mxu0 0.0
    %2694 = vmatpush1.msra.mxu0 0.0
    %2695 = vmatprep.subr.mxu0 0.0
    %2696 = vmatpush1.msra.mxu0 0.0
    %2697 = vmatprep.subr.mxu0 0.0
    %2698 = vmatpush1.msra.mxu0 0.0
    %2699 = vmatprep.subr.mxu0 0.0
    %2700 = vmatpush1.msra.mxu0 0.0
    %2701 = vmatprep.subr.mxu0 0.0
    %2702 = vmatpush1.msra.mxu0 0.0
    %2703 = vmatprep.subr.mxu0 0.0
    %2704 = vmatpush1.msra.mxu0 0.0
    %2705 = vmatprep.subr.mxu0 0.0
    %2706 = vmatpush1.msra.mxu0 0.0
    %2707 = vmatprep.mubr.f32.mxu0 0.0
    %2708 = vmatmul.mubr.f32.gmra.mrb[0].mxu0 %v2641
    %v2709 = vpop.f32.mrb[0].mxu0
    %v2710 = vadd.f32 %v2635, %v2709
    %v2711 = vpop.f32.mrb[0].mxu0
    %2712 = vdwg.mxu0
    %vm2713 = vcmp.gt.f32.partialorder %v2710, 0.0
    %v2714 = vmul.f32 %v2710, 0.01
    %v2715 = vsel %vm2713, %v2710, %v2714
    %v2716 = vld [vmem:[%s9] sm:$0xf]
    %v2717 = vld [vmem:[%s10] sm:$0x1]
    %v2719 = vlaneseq
    %v2720 = vshrl.u32 %v2719, 7
    %v2721 = vsub.s32 0, %v2720
    %v2722 = vrot.slane %v2717, %v2721
    %v2725 = vsel %vm429, %v2715, 0
    %v2728 = vsel %vm1325, %v2716, 0
    %2730 = vmatprep.subr.mxu0 0.0
    %2731 = vmatpush1.msra.mxu0 %v2728
    %2732 = vmatprep.subr.mxu0 0.0
    %2733 = vmatpush1.msra.mxu0 0.0
    %2734 = vmatprep.subr.mxu0 0.0
    %2735 = vmatpush1.msra.mxu0 0.0
    %2736 = vmatprep.subr.mxu0 0.0
    %2737 = vmatpush1.msra.mxu0 0.0
    %2738 = vmatprep.subr.mxu0 0.0
    %2739 = vmatpush1.msra.mxu0 0.0
    %2740 = vmatprep.subr.mxu0 0.0
    %2741 = vmatpush1.msra.mxu0 0.0
    %2742 = vmatprep.subr.mxu0 0.0
    %2743 = vmatpush1.msra.mxu0 0.0
    %2744 = vmatprep.subr.mxu0 0.0
    %2745 = vmatpush1.msra.mxu0 0.0
    %2746 = vmatprep.subr.mxu0 0.0
    %2747 = vmatpush1.msra.mxu0 0.0
    %2748 = vmatprep.subr.mxu0 0.0
    %2749 = vmatpush1.msra.mxu0 0.0
    %2750 = vmatprep.subr.mxu0 0.0
    %2751 = vmatpush1.msra.mxu0 0.0
    %2752 = vmatprep.subr.mxu0 0.0
    %2753 = vmatpush1.msra.mxu0 0.0
    %2754 = vmatprep.subr.mxu0 0.0
    %2755 = vmatpush1.msra.mxu0 0.0
    %2756 = vmatprep.subr.mxu0 0.0
    %2757 = vmatpush1.msra.mxu0 0.0
    %2758 = vmatprep.subr.mxu0 0.0
    %2759 = vmatpush1.msra.mxu0 0.0
    %2760 = vmatprep.subr.mxu0 0.0
    %2761 = vmatpush1.msra.mxu0 0.0
    %2762 = vmatprep.subr.mxu0 0.0
    %2763 = vmatpush1.msra.mxu0 0.0
    %2764 = vmatprep.subr.mxu0 0.0
    %2765 = vmatpush1.msra.mxu0 0.0
    %2766 = vmatprep.subr.mxu0 0.0
    %2767 = vmatpush1.msra.mxu0 0.0
    %2768 = vmatprep.subr.mxu0 0.0
    %2769 = vmatpush1.msra.mxu0 0.0
    %2770 = vmatprep.subr.mxu0 0.0
    %2771 = vmatpush1.msra.mxu0 0.0
    %2772 = vmatprep.subr.mxu0 0.0
    %2773 = vmatpush1.msra.mxu0 0.0
    %2774 = vmatprep.subr.mxu0 0.0
    %2775 = vmatpush1.msra.mxu0 0.0
    %2776 = vmatprep.subr.mxu0 0.0
    %2777 = vmatpush1.msra.mxu0 0.0
    %2778 = vmatprep.subr.mxu0 0.0
    %2779 = vmatpush1.msra.mxu0 0.0
    %2780 = vmatprep.subr.mxu0 0.0
    %2781 = vmatpush1.msra.mxu0 0.0
    %2782 = vmatprep.subr.mxu0 0.0
    %2783 = vmatpush1.msra.mxu0 0.0
    %2784 = vmatprep.subr.mxu0 0.0
    %2785 = vmatpush1.msra.mxu0 0.0
    %2786 = vmatprep.subr.mxu0 0.0
    %2787 = vmatpush1.msra.mxu0 0.0
    %2788 = vmatprep.subr.mxu0 0.0
    %2789 = vmatpush1.msra.mxu0 0.0
    %2790 = vmatprep.subr.mxu0 0.0
    %2791 = vmatpush1.msra.mxu0 0.0
    %2792 = vmatprep.subr.mxu0 0.0
    %2793 = vmatpush1.msra.mxu0 0.0
    %2794 = vmatprep.mubr.f32.mxu0 0.0
    %2795 = vmatmul.mubr.f32.gmra.mrb[0].mxu0 %v2725
    %v2796 = vpop.f32.mrb[0].mxu0
    %v2797 = vadd.f32 %v2722, %v2796
    %v2798 = vpop.f32.mrb[0].mxu0
    %2799 = vdwg.mxu0
    %v2800 = vmax.f32 %v2797, 0.0
    %v2803 = vunpack.c.l.s4 1966171168
    %v2804 = vunpack.c.0.s8 %v2803
    %v2805 = vlaneseq
    %v2806 = vshrl.u32 %v2805, 7
    %v2807 = vsub.s32 %v2804, %v2806
    %v2808 = vrot.slane %v2800, %v2807
    %v2809 = vcombine.high %v2808, %v2808
    %v2811 = vunpack.c.l.s4 1966171168
    %v2812 = vunpack.c.0.s8 %v2811
    %v2813 = vlaneseq
    %v2814 = vshrl.u32 %v2813, 7
    %v2815 = vsub.s32 %v2812, %v2814
    %v2816 = vrot.slane %v2808, %v2815
    %v2818 = vunpack.c.l.s4 1966171168
    %v2819 = vunpack.c.0.s8 %v2818
    %v2820 = vlaneseq
    %v2821 = vshrl.u32 %v2820, 7
    %v2822 = vsub.s32 %v2819, %v2821
    %v2823 = vrot.slane %v2809, %v2822
    %v2826 = vadd.f32 %v2816, 1.0
    %v2827 = vadd.f32 %v2823, 1.0
    %v2830 = vlaneseq
    %v2831 = vshrl.u32 %v2830, 7
    %v2832 = vsub.s32 0, %v2831
    %v2833 = vrot.slane %v2826, %v2832
    %v2834 = vlaneseq
    %v2835 = vshrl.u32 %v2834, 7
    %v2836 = vsub.s32 0, %v2835
    %v2837 = vrot.slane %v2827, %v2836
    %v2840 = vmul.f32 %v2568, %v2833
    %v2841 = vmul.f32 %v2569, %v2833
    %v2842 = vmul.f32 %v2570, %v2833
    %v2843 = vmul.f32 %v2571, %v2833
    %v2844 = vmul.f32 %v2572, %v2833
    %v2845 = vmul.f32 %v2573, %v2833
    %v2846 = vmul.f32 %v2574, %v2833
    %v2847 = vmul.f32 %v2575, %v2833
    %v2848 = vmul.f32 %v2576, %v2837
    %v2849 = vmul.f32 %v2577, %v2837
    %v2850 = vmul.f32 %v2578, %v2837
    %v2851 = vmul.f32 %v2579, %v2837
    %v2852 = vmul.f32 %v2580, %v2837
    %v2853 = vmul.f32 %v2581, %v2837
    %v2854 = vmul.f32 %v2582, %v2837
    %v2855 = vmul.f32 %v2583, %v2837
    %v2856 = vadd.f32 %v2840, %v430
    %v2857 = vadd.f32 %v2841, %v431
    %v2858 = vadd.f32 %v2842, %v432
    %v2859 = vadd.f32 %v2843, %v433
    %v2860 = vadd.f32 %v2844, %v434
    %v2861 = vadd.f32 %v2845, %v435
    %v2862 = vadd.f32 %v2846, %v436
    %v2863 = vadd.f32 %v2847, %v437
    %v2864 = vadd.f32 %v2848, %v438
    %v2865 = vadd.f32 %v2849, %v439
    %v2866 = vadd.f32 %v2850, %v440
    %v2867 = vadd.f32 %v2851, %v441
    %v2868 = vadd.f32 %v2852, %v442
    %v2869 = vadd.f32 %v2853, %v443
    %v2870 = vadd.f32 %v2854, %v444
    %v2871 = vadd.f32 %v2855, %v445
    %2872 = vst.msk [vmem:[#allocation4] sm:$0xff] %vm447, %v2856
    %2873 = vst.msk [vmem:[#allocation4 + $0x8] sm:$0xff] %vm447, %v2857
    %2874 = vst.msk [vmem:[#allocation4 + $0x10] sm:$0xff] %vm447, %v2858
    %2875 = vst.msk [vmem:[#allocation4 + $0x18] sm:$0xff] %vm447, %v2859
    %2876 = vst.msk [vmem:[#allocation4 + $0x20] sm:$0xff] %vm447, %v2860
    %2877 = vst.msk [vmem:[#allocation4 + $0x28] sm:$0xff] %vm447, %v2861
    %2878 = vst.msk [vmem:[#allocation4 + $0x30] sm:$0xff] %vm447, %v2862
    %2879 = vst.msk [vmem:[#allocation4 + $0x38] sm:$0xff] %vm447, %v2863
    %2880 = vst.msk [vmem:[#allocation4 + $0x40] sm:$0xff] %vm447, %v2864
    %2881 = vst.msk [vmem:[#allocation4 + $0x48] sm:$0xff] %vm447, %v2865
    %2882 = vst.msk [vmem:[#allocation4 + $0x50] sm:$0xff] %vm447, %v2866
    %2883 = vst.msk [vmem:[#allocation4 + $0x58] sm:$0xff] %vm447, %v2867
    %2884 = vst.msk [vmem:[#allocation4 + $0x60] sm:$0xff] %vm447, %v2868
    %2885 = vst.msk [vmem:[#allocation4 + $0x68] sm:$0xff] %vm447, %v2869
    %2886 = vst.msk [vmem:[#allocation4 + $0x70] sm:$0xff] %vm447, %v2870
    %2887 = vst.msk [vmem:[#allocation4 + $0x78] sm:$0xff] %vm447, %v2871
    // Predicated region
    $region50: #{tpu_custom_call.1} parent=1 // pred_check
      _
    $region51: #{tpu_custom_call.1} parent=1 // pred_check_branch
      %2889 = sbr.rel (0) target = $region53
    $region52: #{tpu_custom_call.1} parent=1 // pred_region
      %s2891 = ssub.s32 2048, 2048
      %2892 = vsyncadd [#allocation5], %s2891
      %s2893 = sshll.u32 [#allocation4], 4
      %s2894 = int_to_ptr.vmem [resolvable:$true] %s2893
      %2899 = dma.vmem_to_hbm [thread:$0]  %s2894, 2048, %s11, [#allocation5], 128, 128, 8
    $region53: #{tpu_custom_call.1} parent=1 // pred_fallthru
      _
    // Predicated region
    $region54: #{tpu_custom_call.1} parent=1 // pred_check
      _
    $region55: #{tpu_custom_call.1} parent=1 // pred_check_branch
      %2901 = sbr.rel (0) target = $region57
    $region56: #{tpu_custom_call.1} parent=1 // pred_region
      %2902 = dma.done [#allocation5], 2048
    $region57: #{tpu_custom_call.1} parent=1 // pred_fallthru
      _
    %2903 = vsyncpa [#allocation5], 1

</llo_original>
